<compile_context>
chip_gen: v7x
topology: tpu7x:2x2x1
jax: 0.10.0
libtpu: 0.0.40
codegen_flags: <defaults>
</compile_context>

<pallas_src>
import functools

import jax
import jax.numpy as jnp
import numpy as np
from jax.experimental import pallas as pl
from jax.experimental.pallas import tpu as pltpu


def _round_up(x, m):
    return (x + m - 1) // m * m


# ---------------------------------------------------------------------------
# Fused multi-layer LSTM kernel (single grid step, in-kernel time loop).
# ---------------------------------------------------------------------------
def _fused_lstm_kernel(n_layers, T, B, BP, H, *refs):
    # refs = [words (SMEM scalar prefetch),
    #         gx_table, whh0, (w_l, b_l) * (n_layers-1), h0, c0,   # inputs
    #         hn, cn,                                              # outputs
    #         g0]                                                  # scratch
    words_ref = refs[0]
    gx_tab_ref, whh0_ref = refs[1], refs[2]
    layer_refs = refs[3:3 + 2 * (n_layers - 1)]
    base = 3 + 2 * (n_layers - 1)
    h0_ref, c0_ref = refs[base], refs[base + 1]
    hn_ref, cn_ref = refs[base + 2], refs[base + 3]
    g0_ref = refs[base + 4]

    f32 = jnp.float32
    G = 4 * H

    # ---- In-kernel embedding gather ---------------------------------------
    # gx_table[v] already holds embedding[v] @ W_ih0^T + bias0 (pre-projected
    # once in prepare_params), so the whole layer-0 input projection for step t
    # / batch row b is a single dynamic-row copy.  words is flattened (B, T)
    # row-major; g0 is stored time-major so the time loop reads whole
    # 8-sublane-aligned (BP, G) blocks.
    for t in range(T):
        for b in range(BP):
            row = t * BP + b
            if b < B:
                g0_ref[row:row + 1, :] = gx_tab_ref[pl.ds(words_ref[b * T + t], 1), :]
            else:
                # Padded batch rows (sliced off in the wrapper): keep them finite.
                g0_ref[row:row + 1, :] = jnp.zeros((1, G), f32)

    def cell(gates, c_prev):
        # Packed PyTorch gate order [i | f | g | o], H lanes each, no padding.
        i = jax.nn.sigmoid(gates[:, 0 * H:1 * H])
        f = jax.nn.sigmoid(gates[:, 1 * H:2 * H])
        g = jnp.tanh(gates[:, 2 * H:3 * H])
        o = jax.nn.sigmoid(gates[:, 3 * H:4 * H])
        c_new = f * c_prev + i * g
        h_new = o * jnp.tanh(c_new)
        return h_new, c_new

    hs = [h0_ref[l] for l in range(n_layers)]
    cs = [c0_ref[l] for l in range(n_layers)]

    # Weights and (pre-broadcast) biases loaded once, OUTSIDE the time loop, so
    # they stay vreg-resident across all T steps and no per-step broadcast /
    # redundant load sits on the serial chain.
    whh0 = whh0_ref[...]                                        # (H, 4H)
    w_hi = [layer_refs[2 * m][...] for m in range(n_layers - 1)]      # (2H, 4H)
    b_hi = [layer_refs[2 * m + 1][...] for m in range(n_layers - 1)]  # (BP, 4H)

    # T is small & static -> fully-unrolled recurrence with static, 8-sublane
    # aligned slices of g0 (gives the LLO scheduler cross-step/-layer
    # interleave visibility).
    # TODO(synk): switch to lax.fori_loop(..., unroll=k) with pl.ds indexing if
    # T / n_layers grow beyond ~32 (vreg pressure / compile time).
    for t in range(T):
        # Layer 0: only the hidden recurrence matmul is on the serial chain;
        # the input projection is the pre-gathered g0 block.
        gates0 = g0_ref[t * BP:(t + 1) * BP, :] + jnp.dot(
            hs[0], whh0, preferred_element_type=f32)
        hs[0], cs[0] = cell(gates0, cs[0])
        x_t = hs[0]

        # Layers >= 1: single matmul per step via [x_t ; h_{l-1}] — at the
        # packed width 2H this concat is a single-vreg lane merge.
        for l in range(1, n_layers):
            inp = jnp.concatenate([x_t, hs[l]], axis=-1)        # (BP, 2H)
            gates = jnp.dot(inp, w_hi[l - 1],
                            preferred_element_type=f32) + b_hi[l - 1]
            hs[l], cs[l] = cell(gates, cs[l])
            x_t = hs[l]

    for l in range(n_layers):
        hn_ref[l] = hs[l]
        cn_ref[l] = cs[l]


def fused_lstm_pallas(words, gx_table, whh0, layer_ws, layer_bs, h0, c0,
                      n_layers, T, B, BP, H):
    """words: (B*T,) int32 flattened ids; all other operands pre-packed (see prepare)."""
    G = 4 * H
    VP = gx_table.shape[0]
    kernel = functools.partial(_fused_lstm_kernel, n_layers, T, B, BP, H)

    # All operands are small -> whole-array blocks, single grid step.
    in_specs = [
        pl.BlockSpec((VP, G), lambda i, w: (0, 0)),          # pre-projected gate table
        pl.BlockSpec((H, G), lambda i, w: (0, 0)),           # W_hh^T layer 0
    ]
    args = [gx_table, whh0]
    for wl, bl in zip(layer_ws, layer_bs):
        in_specs.append(pl.BlockSpec((2 * H, G), lambda i, w: (0, 0)))   # [W_ih;W_hh]^T
        in_specs.append(pl.BlockSpec((BP, G), lambda i, w: (0, 0)))      # pre-broadcast bias
        args += [wl, bl]
    in_specs += [
        pl.BlockSpec((n_layers, BP, H), lambda i, w: (0, 0, 0)),         # h0
        pl.BlockSpec((n_layers, BP, H), lambda i, w: (0, 0, 0)),         # c0
    ]
    args += [h0, c0]

    out_shape = (jax.ShapeDtypeStruct((n_layers, BP, H), jnp.float32),
                 jax.ShapeDtypeStruct((n_layers, BP, H), jnp.float32))
    out_specs = [pl.BlockSpec((n_layers, BP, H), lambda i, w: (0, 0, 0)),
                 pl.BlockSpec((n_layers, BP, H), lambda i, w: (0, 0, 0))]

    grid_spec = pltpu.PrefetchScalarGridSpec(
        num_scalar_prefetch=1,                 # word ids -> SMEM
        grid=(1,),                             # recurrence is fully in-kernel
        in_specs=in_specs,
        out_specs=out_specs,
        scratch_shapes=[pltpu.VMEM((T * BP, G), jnp.float32)],   # gathered layer-0 gates
    )
    return pl.pallas_call(
        kernel,
        out_shape=out_shape,
        grid_spec=grid_spec,
        compiler_params=pltpu.CompilerParams(
            dimension_semantics=("arbitrary",)),
    )(words, *args)


# ---------------------------------------------------------------------------
# Parameter construction & one-time packing (hoisted out of the jitted path).
# ---------------------------------------------------------------------------
def init_params(key, vocab_size, embedding_dim, hidden_dim, n_layers):
    """Deterministic synthetic params (PyTorch-style uniform(-1/sqrt(H), 1/sqrt(H)))."""
    keys = jax.random.split(key, 1 + 3 * n_layers)
    emb = 0.1 * jax.random.normal(keys[0], (vocab_size, embedding_dim), jnp.float32)
    emb = emb.at[0].set(0.0)   # index 0 -> zero vector, as in load_embedding_file
    bound = 1.0 / float(np.sqrt(hidden_dim))
    layers = []
    for l in range(n_layers):
        in_dim = embedding_dim if l == 0 else hidden_dim
        kw = keys[1 + 3 * l: 4 + 3 * l]
        wih = jax.random.uniform(kw[0], (4 * hidden_dim, in_dim), jnp.float32, -bound, bound)
        whh = jax.random.uniform(kw[1], (4 * hidden_dim, hidden_dim), jnp.float32, -bound, bound)
        b = jax.random.uniform(kw[2], (4 * hidden_dim,), jnp.float32, -bound, bound)
        layers.append((wih.T, whh.T, b.reshape(1, 4 * hidden_dim)))  # (in,4H),(H,4H),(1,4H)
    return {"embedding": emb, "layers": layers}


def prepare_params(params, batch_size):
    """One-time (outside jit) packing of the weights for the Pallas kernel.

    - Pre-projects the whole embedding table through the layer-0 input weights
      (with the bias folded in), so the per-step layer-0 projection becomes a
      row gather inside the kernel.
    - Fuses each higher layer's W_ih / W_hh into a single (2H, 4H) block and
      pre-broadcasts its bias to (BP, 4H).
    Runs eagerly exactly once; nothing here is re-executed per forward call.
    """
    emb = params["embedding"]                      # (V, E)
    layers = params["layers"]
    H = layers[0][1].shape[0]
    assert H % 8 == 0, "hidden_dim must be a multiple of 8 for clean TPU tiling"
    BP = _round_up(batch_size, 8)
    VP = _round_up(emb.shape[0], 8)

    wih0_t, _whh0_t, b0 = layers[0]
    gx_table = emb @ wih0_t + b0                   # (V, 4H): embedding -> gate pre-acts
    gx_table = jnp.pad(gx_table, ((0, VP - emb.shape[0]), (0, 0)))

    layer_ws, layer_bs = [], []
    for (wih_t, whh_t, b) in layers[1:]:
        layer_ws.append(jnp.concatenate([wih_t, whh_t], axis=0))     # (2H, 4H)
        layer_bs.append(jnp.broadcast_to(b, (BP, 4 * H)) + 0.0)      # materialized once

    return {
        "gx_table": gx_table,          # (VP, 4H)
        "whh0": layers[0][1],          # (H, 4H)
        "layer_ws": layer_ws,          # [(2H, 4H)]
        "layer_bs": layer_bs,          # [(BP, 4H)]
    }


# ---------------------------------------------------------------------------
# Forward pass (Pallas) and pure-JAX reference.
# ---------------------------------------------------------------------------
def rnn_sentiment_forward(prepared, input_words, hidden):
    """input_words: (B, T) int32; hidden: tuple of (n_layers, B, H) arrays."""
    gx_table = prepared["gx_table"]
    whh0 = prepared["whh0"]
    layer_ws = prepared["layer_ws"]
    layer_bs = prepared["layer_bs"]

    B, T = input_words.shape
    H = whh0.shape[0]
    L = 1 + len(layer_ws)
    BP = _round_up(B, 8)
    if layer_bs:
        assert layer_bs[0].shape[0] == BP, "prepare_params batch padding mismatch"

    # Flattened (B*T,) word ids -> SMEM scalar prefetch; the embedding gather
    # and layer-0 projection happen inside the kernel (no XLA gather/transpose/
    # pad glue and no (T*B, E) HBM intermediate).
    words = input_words.reshape(B * T).astype(jnp.int32)

    h0, c0 = hidden
    if BP != B:
        # Padded batch rows evolve independently (row-wise recurrence) and are
        # sliced off below — they can never contaminate real rows.
        h0 = jnp.pad(h0, ((0, 0), (0, BP - B), (0, 0)))
        c0 = jnp.pad(c0, ((0, 0), (0, BP - B), (0, 0)))

    hn, cn = fused_lstm_pallas(words, gx_table, whh0, layer_ws, layer_bs,
                               h0, c0, L, T, B, BP, H)

    h_n = hn[:, :B, :]
    c_n = cn[:, :B, :]
    # sig_out[b] == sigmoid(out[b, T-1, H-1]) == sigmoid(h_n[-1][b, H-1]); the full
    # (B, T, H) LSTM output is never consumed, so the kernel never materializes it.
    sig_out = jax.nn.sigmoid(h_n[-1][:, H - 1])
    # TODO(synk): self.fc is defined but never applied in the reference forward;
    # nn.Dropout is identity at inference — both intentionally omitted.
    return sig_out, (h_n, c_n)


def _lstm_layer_ref(x_tbe, wih_t, whh_t, b, h0, c0):
    H = h0.shape[-1]

    def step(carry, x_t):
        h, c = carry
        gates = x_t @ wih_t + h @ whh_t + b
        i = jax.nn.sigmoid(gates[:, 0 * H:1 * H])
        f = jax.nn.sigmoid(gates[:, 1 * H:2 * H])
        g = jnp.tanh(gates[:, 2 * H:3 * H])
        o = jax.nn.sigmoid(gates[:, 3 * H:4 * H])
        c = f * c + i * g
        h = o * jnp.tanh(c)
        return (h, c), h

    (hn, cn), out = jax.lax.scan(step, (h0, c0), x_tbe)
    return out, hn, cn


def rnn_sentiment_forward_ref(params, input_words, hidden):
    emb = params["embedding"][input_words]
    x = jnp.transpose(emb, (1, 0, 2))
    h0_all, c0_all = hidden
    hns, cns = [], []
    for l, (wih_t, whh_t, b) in enumerate(params["layers"]):
        x, hn, cn = _lstm_layer_ref(x, wih_t, whh_t, b, h0_all[l], c0_all[l])
        hns.append(hn)
        cns.append(cn)
    out = jnp.transpose(x, (1, 0, 2))
    sig_out = jax.nn.sigmoid(out.reshape(out.shape[0], -1))[:, -1]
    return sig_out, (jnp.stack(hns), jnp.stack(cns))


if __name__ == "__main__":
    # Small shapes consistent with the module's forward (batch, seq, embed, hidden).
    VOCAB, EMB, HID, NLAYERS, BATCH, SEQ = 50, 32, 32, 2, 8, 8

    root = jax.random.PRNGKey(0)
    k_params, k_words = jax.random.split(root)

    params = init_params(k_params, VOCAB, EMB, HID, NLAYERS)
    input_words = jax.random.randint(k_words, (BATCH, SEQ), 0, VOCAB, dtype=jnp.int32)
    hidden = (jnp.zeros((NLAYERS, BATCH, HID), jnp.float32),
              jnp.zeros((NLAYERS, BATCH, HID), jnp.float32))

    # One-time weight packing, hoisted out of the jitted per-call path.
    prepared = prepare_params(params, BATCH)

    forward = jax.jit(rnn_sentiment_forward)
    sig_out, (h_n, c_n) = forward(prepared, input_words, hidden)
    jax.block_until_ready((sig_out, h_n, c_n))

    # Correctness check against pure-JAX reference (f32 kept end-to-end).
    sig_ref, (h_ref, c_ref) = rnn_sentiment_forward_ref(params, input_words, hidden)
    np.testing.assert_allclose(np.asarray(sig_out), np.asarray(sig_ref), rtol=1e-4, atol=1e-4)
    np.testing.assert_allclose(np.asarray(h_n), np.asarray(h_ref), rtol=1e-4, atol=1e-4)
    np.testing.assert_allclose(np.asarray(c_n), np.asarray(c_ref), rtol=1e-4, atol=1e-4)

    assert sig_out.shape == (BATCH,)
    assert h_n.shape == (NLAYERS, BATCH, HID) and c_n.shape == (NLAYERS, BATCH, HID)
    print("KERNEL_OK")
</pallas_src>

<mosaic_0001>
module attributes {stable_mosaic.version = 11 : i64} {
  func.func @_fused_lstm_kernel(%arg0: i32, %arg1: memref<64xi32, #tpu.memory_space<smem>>, %arg2: memref<56x128xf32, #tpu.memory_space<vmem>>, %arg3: memref<32x128xf32, #tpu.memory_space<vmem>>, %arg4: memref<64x128xf32, #tpu.memory_space<vmem>>, %arg5: memref<8x128xf32, #tpu.memory_space<vmem>>, %arg6: memref<2x8x32xf32, #tpu.memory_space<vmem>>, %arg7: memref<2x8x32xf32, #tpu.memory_space<vmem>>, %arg8: memref<2x8x32xf32, #tpu.memory_space<vmem>>, %arg9: memref<2x8x32xf32, #tpu.memory_space<vmem>>, %arg10: memref<64x128xf32, #tpu.memory_space<vmem>>) attributes {dimension_semantics = [#tpu.dimension_semantics<arbitrary>], iteration_bounds = array<i64: 1>, scalar_prefetch = 1 : i64, scratch_operands = 1 : i64, tpu.core_type = #tpu.core_type<tc>, window_params = [{pipeline_mode = #tpu.pipeline_mode<synchronous>, transform_indices = @transform_0, window_bounds = array<i64: 56, 128>}, {pipeline_mode = #tpu.pipeline_mode<synchronous>, transform_indices = @transform_1, window_bounds = array<i64: 32, 128>}, {pipeline_mode = #tpu.pipeline_mode<synchronous>, transform_indices = @transform_2, window_bounds = array<i64: 64, 128>}, {pipeline_mode = #tpu.pipeline_mode<synchronous>, transform_indices = @transform_3, window_bounds = array<i64: 8, 128>}, {pipeline_mode = #tpu.pipeline_mode<synchronous>, transform_indices = @transform_4, window_bounds = array<i64: 2, 8, 32>}, {pipeline_mode = #tpu.pipeline_mode<synchronous>, transform_indices = @transform_5, window_bounds = array<i64: 2, 8, 32>}, {pipeline_mode = #tpu.pipeline_mode<synchronous>, transform_indices = @transform_6, window_bounds = array<i64: 2, 8, 32>}, {pipeline_mode = #tpu.pipeline_mode<synchronous>, transform_indices = @transform_7, window_bounds = array<i64: 2, 8, 32>}]} {
    %c0 = arith.constant 0 : index
    %0 = memref.load %arg1[%c0] : memref<64xi32, #tpu.memory_space<smem>>
    %1 = arith.index_cast %0 : i32 to index
    %c0_0 = arith.constant 0 : index
    %2 = vector.load %arg2[%1, %c0_0] : memref<56x128xf32, #tpu.memory_space<vmem>>, vector<1x128xf32>
    %c0_1 = arith.constant 0 : index
    %c0_2 = arith.constant 0 : index
    %3 = vector.load %arg10[%c0_1, %c0_2] : memref<64x128xf32, #tpu.memory_space<vmem>>, vector<1x128xf32>
    tpu.vector_store %arg10[%c0_1, %c0_2], %2 {strides = array<i32>} : memref<64x128xf32, #tpu.memory_space<vmem>>, vector<1x128xf32>,
    %c8 = arith.constant 8 : index
    %4 = memref.load %arg1[%c8] : memref<64xi32, #tpu.memory_space<smem>>
    %5 = arith.index_cast %4 : i32 to index
    %c0_3 = arith.constant 0 : index
    %6 = vector.load %arg2[%5, %c0_3] : memref<56x128xf32, #tpu.memory_space<vmem>>, vector<1x128xf32>
    %c1 = arith.constant 1 : index
    %c0_4 = arith.constant 0 : index
    %7 = vector.load %arg10[%c1, %c0_4] : memref<64x128xf32, #tpu.memory_space<vmem>>, vector<1x128xf32>
    tpu.vector_store %arg10[%c1, %c0_4], %6 {strides = array<i32>} : memref<64x128xf32, #tpu.memory_space<vmem>>, vector<1x128xf32>,
    %c16 = arith.constant 16 : index
    %8 = memref.load %arg1[%c16] : memref<64xi32, #tpu.memory_space<smem>>
    %9 = arith.index_cast %8 : i32 to index
    %c0_5 = arith.constant 0 : index
    %10 = vector.load %arg2[%9, %c0_5] : memref<56x128xf32, #tpu.memory_space<vmem>>, vector<1x128xf32>
    %c2 = arith.constant 2 : index
    %c0_6 = arith.constant 0 : index
    %11 = vector.load %arg10[%c2, %c0_6] : memref<64x128xf32, #tpu.memory_space<vmem>>, vector<1x128xf32>
    tpu.vector_store %arg10[%c2, %c0_6], %10 {strides = array<i32>} : memref<64x128xf32, #tpu.memory_space<vmem>>, vector<1x128xf32>,
    %c24 = arith.constant 24 : index
    %12 = memref.load %arg1[%c24] : memref<64xi32, #tpu.memory_space<smem>>
    %13 = arith.index_cast %12 : i32 to index
    %c0_7 = arith.constant 0 : index
    %14 = vector.load %arg2[%13, %c0_7] : memref<56x128xf32, #tpu.memory_space<vmem>>, vector<1x128xf32>
    %c3 = arith.constant 3 : index
    %c0_8 = arith.constant 0 : index
    %15 = vector.load %arg10[%c3, %c0_8] : memref<64x128xf32, #tpu.memory_space<vmem>>, vector<1x128xf32>
    tpu.vector_store %arg10[%c3, %c0_8], %14 {strides = array<i32>} : memref<64x128xf32, #tpu.memory_space<vmem>>, vector<1x128xf32>,
    %c32 = arith.constant 32 : index
    %16 = memref.load %arg1[%c32] : memref<64xi32, #tpu.memory_space<smem>>
    %17 = arith.index_cast %16 : i32 to index
    %c0_9 = arith.constant 0 : index
    %18 = vector.load %arg2[%17, %c0_9] : memref<56x128xf32, #tpu.memory_space<vmem>>, vector<1x128xf32>
    %c4 = arith.constant 4 : index
    %c0_10 = arith.constant 0 : index
    %19 = vector.load %arg10[%c4, %c0_10] : memref<64x128xf32, #tpu.memory_space<vmem>>, vector<1x128xf32>
    tpu.vector_store %arg10[%c4, %c0_10], %18 {strides = array<i32>} : memref<64x128xf32, #tpu.memory_space<vmem>>, vector<1x128xf32>,
    %c40 = arith.constant 40 : index
    %20 = memref.load %arg1[%c40] : memref<64xi32, #tpu.memory_space<smem>>
    %21 = arith.index_cast %20 : i32 to index
    %c0_11 = arith.constant 0 : index
    %22 = vector.load %arg2[%21, %c0_11] : memref<56x128xf32, #tpu.memory_space<vmem>>, vector<1x128xf32>
    %c5 = arith.constant 5 : index
    %c0_12 = arith.constant 0 : index
    %23 = vector.load %arg10[%c5, %c0_12] : memref<64x128xf32, #tpu.memory_space<vmem>>, vector<1x128xf32>
    tpu.vector_store %arg10[%c5, %c0_12], %22 {strides = array<i32>} : memref<64x128xf32, #tpu.memory_space<vmem>>, vector<1x128xf32>,
    %c48 = arith.constant 48 : index
    %24 = memref.load %arg1[%c48] : memref<64xi32, #tpu.memory_space<smem>>
    %25 = arith.index_cast %24 : i32 to index
    %c0_13 = arith.constant 0 : index
    %26 = vector.load %arg2[%25, %c0_13] : memref<56x128xf32, #tpu.memory_space<vmem>>, vector<1x128xf32>
    %c6 = arith.constant 6 : index
    %c0_14 = arith.constant 0 : index
    %27 = vector.load %arg10[%c6, %c0_14] : memref<64x128xf32, #tpu.memory_space<vmem>>, vector<1x128xf32>
    tpu.vector_store %arg10[%c6, %c0_14], %26 {strides = array<i32>} : memref<64x128xf32, #tpu.memory_space<vmem>>, vector<1x128xf32>,
    %c56 = arith.constant 56 : index
    %28 = memref.load %arg1[%c56] : memref<64xi32, #tpu.memory_space<smem>>
    %29 = arith.index_cast %28 : i32 to index
    %c0_15 = arith.constant 0 : index
    %30 = vector.load %arg2[%29, %c0_15] : memref<56x128xf32, #tpu.memory_space<vmem>>, vector<1x128xf32>
    %c7 = arith.constant 7 : index
    %c0_16 = arith.constant 0 : index
    %31 = vector.load %arg10[%c7, %c0_16] : memref<64x128xf32, #tpu.memory_space<vmem>>, vector<1x128xf32>
    tpu.vector_store %arg10[%c7, %c0_16], %30 {strides = array<i32>} : memref<64x128xf32, #tpu.memory_space<vmem>>, vector<1x128xf32>,
    %c1_17 = arith.constant 1 : index
    %32 = memref.load %arg1[%c1_17] : memref<64xi32, #tpu.memory_space<smem>>
    %33 = arith.index_cast %32 : i32 to index
    %c0_18 = arith.constant 0 : index
    %34 = vector.load %arg2[%33, %c0_18] : memref<56x128xf32, #tpu.memory_space<vmem>>, vector<1x128xf32>
    %c8_19 = arith.constant 8 : index
    %c0_20 = arith.constant 0 : index
    %35 = vector.load %arg10[%c8_19, %c0_20] : memref<64x128xf32, #tpu.memory_space<vmem>>, vector<1x128xf32>
    tpu.vector_store %arg10[%c8_19, %c0_20], %34 {strides = array<i32>} : memref<64x128xf32, #tpu.memory_space<vmem>>, vector<1x128xf32>,
    %c9 = arith.constant 9 : index
    %36 = memref.load %arg1[%c9] : memref<64xi32, #tpu.memory_space<smem>>
    %37 = arith.index_cast %36 : i32 to index
    %c0_21 = arith.constant 0 : index
    %38 = vector.load %arg2[%37, %c0_21] : memref<56x128xf32, #tpu.memory_space<vmem>>, vector<1x128xf32>
    %c9_22 = arith.constant 9 : index
    %c0_23 = arith.constant 0 : index
    %39 = vector.load %arg10[%c9_22, %c0_23] : memref<64x128xf32, #tpu.memory_space<vmem>>, vector<1x128xf32>
    tpu.vector_store %arg10[%c9_22, %c0_23], %38 {strides = array<i32>} : memref<64x128xf32, #tpu.memory_space<vmem>>, vector<1x128xf32>,
    %c17 = arith.constant 17 : index
    %40 = memref.load %arg1[%c17] : memref<64xi32, #tpu.memory_space<smem>>
    %41 = arith.index_cast %40 : i32 to index
    %c0_24 = arith.constant 0 : index
    %42 = vector.load %arg2[%41, %c0_24] : memref<56x128xf32, #tpu.memory_space<vmem>>, vector<1x128xf32>
    %c10 = arith.constant 10 : index
    %c0_25 = arith.constant 0 : index
    %43 = vector.load %arg10[%c10, %c0_25] : memref<64x128xf32, #tpu.memory_space<vmem>>, vector<1x128xf32>
    tpu.vector_store %arg10[%c10, %c0_25], %42 {strides = array<i32>} : memref<64x128xf32, #tpu.memory_space<vmem>>, vector<1x128xf32>,
    %c25 = arith.constant 25 : index
    %44 = memref.load %arg1[%c25] : memref<64xi32, #tpu.memory_space<smem>>
    %45 = arith.index_cast %44 : i32 to index
    %c0_26 = arith.constant 0 : index
    %46 = vector.load %arg2[%45, %c0_26] : memref<56x128xf32, #tpu.memory_space<vmem>>, vector<1x128xf32>
    %c11 = arith.constant 11 : index
    %c0_27 = arith.constant 0 : index
    %47 = vector.load %arg10[%c11, %c0_27] : memref<64x128xf32, #tpu.memory_space<vmem>>, vector<1x128xf32>
    tpu.vector_store %arg10[%c11, %c0_27], %46 {strides = array<i32>} : memref<64x128xf32, #tpu.memory_space<vmem>>, vector<1x128xf32>,
    %c33 = arith.constant 33 : index
    %48 = memref.load %arg1[%c33] : memref<64xi32, #tpu.memory_space<smem>>
    %49 = arith.index_cast %48 : i32 to index
    %c0_28 = arith.constant 0 : index
    %50 = vector.load %arg2[%49, %c0_28] : memref<56x128xf32, #tpu.memory_space<vmem>>, vector<1x128xf32>
    %c12 = arith.constant 12 : index
    %c0_29 = arith.constant 0 : index
    %51 = vector.load %arg10[%c12, %c0_29] : memref<64x128xf32, #tpu.memory_space<vmem>>, vector<1x128xf32>
    tpu.vector_store %arg10[%c12, %c0_29], %50 {strides = array<i32>} : memref<64x128xf32, #tpu.memory_space<vmem>>, vector<1x128xf32>,
    %c41 = arith.constant 41 : index
    %52 = memref.load %arg1[%c41] : memref<64xi32, #tpu.memory_space<smem>>
    %53 = arith.index_cast %52 : i32 to index
    %c0_30 = arith.constant 0 : index
    %54 = vector.load %arg2[%53, %c0_30] : memref<56x128xf32, #tpu.memory_space<vmem>>, vector<1x128xf32>
    %c13 = arith.constant 13 : index
    %c0_31 = arith.constant 0 : index
    %55 = vector.load %arg10[%c13, %c0_31] : memref<64x128xf32, #tpu.memory_space<vmem>>, vector<1x128xf32>
    tpu.vector_store %arg10[%c13, %c0_31], %54 {strides = array<i32>} : memref<64x128xf32, #tpu.memory_space<vmem>>, vector<1x128xf32>,
    %c49 = arith.constant 49 : index
    %56 = memref.load %arg1[%c49] : memref<64xi32, #tpu.memory_space<smem>>
    %57 = arith.index_cast %56 : i32 to index
    %c0_32 = arith.constant 0 : index
    %58 = vector.load %arg2[%57, %c0_32] : memref<56x128xf32, #tpu.memory_space<vmem>>, vector<1x128xf32>
    %c14 = arith.constant 14 : index
    %c0_33 = arith.constant 0 : index
    %59 = vector.load %arg10[%c14, %c0_33] : memref<64x128xf32, #tpu.memory_space<vmem>>, vector<1x128xf32>
    tpu.vector_store %arg10[%c14, %c0_33], %58 {strides = array<i32>} : memref<64x128xf32, #tpu.memory_space<vmem>>, vector<1x128xf32>,
    %c57 = arith.constant 57 : index
    %60 = memref.load %arg1[%c57] : memref<64xi32, #tpu.memory_space<smem>>
    %61 = arith.index_cast %60 : i32 to index
    %c0_34 = arith.constant 0 : index
    %62 = vector.load %arg2[%61, %c0_34] : memref<56x128xf32, #tpu.memory_space<vmem>>, vector<1x128xf32>
    %c15 = arith.constant 15 : index
    %c0_35 = arith.constant 0 : index
    %63 = vector.load %arg10[%c15, %c0_35] : memref<64x128xf32, #tpu.memory_space<vmem>>, vector<1x128xf32>
    tpu.vector_store %arg10[%c15, %c0_35], %62 {strides = array<i32>} : memref<64x128xf32, #tpu.memory_space<vmem>>, vector<1x128xf32>,
    %c2_36 = arith.constant 2 : index
    %64 = memref.load %arg1[%c2_36] : memref<64xi32, #tpu.memory_space<smem>>
    %65 = arith.index_cast %64 : i32 to index
    %c0_37 = arith.constant 0 : index
    %66 = vector.load %arg2[%65, %c0_37] : memref<56x128xf32, #tpu.memory_space<vmem>>, vector<1x128xf32>
    %c16_38 = arith.constant 16 : index
    %c0_39 = arith.constant 0 : index
    %67 = vector.load %arg10[%c16_38, %c0_39] : memref<64x128xf32, #tpu.memory_space<vmem>>, vector<1x128xf32>
    tpu.vector_store %arg10[%c16_38, %c0_39], %66 {strides = array<i32>} : memref<64x128xf32, #tpu.memory_space<vmem>>, vector<1x128xf32>,
    %c10_40 = arith.constant 10 : index
    %68 = memref.load %arg1[%c10_40] : memref<64xi32, #tpu.memory_space<smem>>
    %69 = arith.index_cast %68 : i32 to index
    %c0_41 = arith.constant 0 : index
    %70 = vector.load %arg2[%69, %c0_41] : memref<56x128xf32, #tpu.memory_space<vmem>>, vector<1x128xf32>
    %c17_42 = arith.constant 17 : index
    %c0_43 = arith.constant 0 : index
    %71 = vector.load %arg10[%c17_42, %c0_43] : memref<64x128xf32, #tpu.memory_space<vmem>>, vector<1x128xf32>
    tpu.vector_store %arg10[%c17_42, %c0_43], %70 {strides = array<i32>} : memref<64x128xf32, #tpu.memory_space<vmem>>, vector<1x128xf32>,
    %c18 = arith.constant 18 : index
    %72 = memref.load %arg1[%c18] : memref<64xi32, #tpu.memory_space<smem>>
    %73 = arith.index_cast %72 : i32 to index
    %c0_44 = arith.constant 0 : index
    %74 = vector.load %arg2[%73, %c0_44] : memref<56x128xf32, #tpu.memory_space<vmem>>, vector<1x128xf32>
    %c18_45 = arith.constant 18 : index
    %c0_46 = arith.constant 0 : index
    %75 = vector.load %arg10[%c18_45, %c0_46] : memref<64x128xf32, #tpu.memory_space<vmem>>, vector<1x128xf32>
    tpu.vector_store %arg10[%c18_45, %c0_46], %74 {strides = array<i32>} : memref<64x128xf32, #tpu.memory_space<vmem>>, vector<1x128xf32>,
    %c26 = arith.constant 26 : index
    %76 = memref.load %arg1[%c26] : memref<64xi32, #tpu.memory_space<smem>>
    %77 = arith.index_cast %76 : i32 to index
    %c0_47 = arith.constant 0 : index
    %78 = vector.load %arg2[%77, %c0_47] : memref<56x128xf32, #tpu.memory_space<vmem>>, vector<1x128xf32>
    %c19 = arith.constant 19 : index
    %c0_48 = arith.constant 0 : index
    %79 = vector.load %arg10[%c19, %c0_48] : memref<64x128xf32, #tpu.memory_space<vmem>>, vector<1x128xf32>
    tpu.vector_store %arg10[%c19, %c0_48], %78 {strides = array<i32>} : memref<64x128xf32, #tpu.memory_space<vmem>>, vector<1x128xf32>,
    %c34 = arith.constant 34 : index
    %80 = memref.load %arg1[%c34] : memref<64xi32, #tpu.memory_space<smem>>
    %81 = arith.index_cast %80 : i32 to index
    %c0_49 = arith.constant 0 : index
    %82 = vector.load %arg2[%81, %c0_49] : memref<56x128xf32, #tpu.memory_space<vmem>>, vector<1x128xf32>
    %c20 = arith.constant 20 : index
    %c0_50 = arith.constant 0 : index
    %83 = vector.load %arg10[%c20, %c0_50] : memref<64x128xf32, #tpu.memory_space<vmem>>, vector<1x128xf32>
    tpu.vector_store %arg10[%c20, %c0_50], %82 {strides = array<i32>} : memref<64x128xf32, #tpu.memory_space<vmem>>, vector<1x128xf32>,
    %c42 = arith.constant 42 : index
    %84 = memref.load %arg1[%c42] : memref<64xi32, #tpu.memory_space<smem>>
    %85 = arith.index_cast %84 : i32 to index
    %c0_51 = arith.constant 0 : index
    %86 = vector.load %arg2[%85, %c0_51] : memref<56x128xf32, #tpu.memory_space<vmem>>, vector<1x128xf32>
    %c21 = arith.constant 21 : index
    %c0_52 = arith.constant 0 : index
    %87 = vector.load %arg10[%c21, %c0_52] : memref<64x128xf32, #tpu.memory_space<vmem>>, vector<1x128xf32>
    tpu.vector_store %arg10[%c21, %c0_52], %86 {strides = array<i32>} : memref<64x128xf32, #tpu.memory_space<vmem>>, vector<1x128xf32>,
    %c50 = arith.constant 50 : index
    %88 = memref.load %arg1[%c50] : memref<64xi32, #tpu.memory_space<smem>>
    %89 = arith.index_cast %88 : i32 to index
    %c0_53 = arith.constant 0 : index
    %90 = vector.load %arg2[%89, %c0_53] : memref<56x128xf32, #tpu.memory_space<vmem>>, vector<1x128xf32>
    %c22 = arith.constant 22 : index
    %c0_54 = arith.constant 0 : index
    %91 = vector.load %arg10[%c22, %c0_54] : memref<64x128xf32, #tpu.memory_space<vmem>>, vector<1x128xf32>
    tpu.vector_store %arg10[%c22, %c0_54], %90 {strides = array<i32>} : memref<64x128xf32, #tpu.memory_space<vmem>>, vector<1x128xf32>,
    %c58 = arith.constant 58 : index
    %92 = memref.load %arg1[%c58] : memref<64xi32, #tpu.memory_space<smem>>
    %93 = arith.index_cast %92 : i32 to index
    %c0_55 = arith.constant 0 : index
    %94 = vector.load %arg2[%93, %c0_55] : memref<56x128xf32, #tpu.memory_space<vmem>>, vector<1x128xf32>
    %c23 = arith.constant 23 : index
    %c0_56 = arith.constant 0 : index
    %95 = vector.load %arg10[%c23, %c0_56] : memref<64x128xf32, #tpu.memory_space<vmem>>, vector<1x128xf32>
    tpu.vector_store %arg10[%c23, %c0_56], %94 {strides = array<i32>} : memref<64x128xf32, #tpu.memory_space<vmem>>, vector<1x128xf32>,
    %c3_57 = arith.constant 3 : index
    %96 = memref.load %arg1[%c3_57] : memref<64xi32, #tpu.memory_space<smem>>
    %97 = arith.index_cast %96 : i32 to index
    %c0_58 = arith.constant 0 : index
    %98 = vector.load %arg2[%97, %c0_58] : memref<56x128xf32, #tpu.memory_space<vmem>>, vector<1x128xf32>
    %c24_59 = arith.constant 24 : index
    %c0_60 = arith.constant 0 : index
    %99 = vector.load %arg10[%c24_59, %c0_60] : memref<64x128xf32, #tpu.memory_space<vmem>>, vector<1x128xf32>
    tpu.vector_store %arg10[%c24_59, %c0_60], %98 {strides = array<i32>} : memref<64x128xf32, #tpu.memory_space<vmem>>, vector<1x128xf32>,
    %c11_61 = arith.constant 11 : index
    %100 = memref.load %arg1[%c11_61] : memref<64xi32, #tpu.memory_space<smem>>
    %101 = arith.index_cast %100 : i32 to index
    %c0_62 = arith.constant 0 : index
    %102 = vector.load %arg2[%101, %c0_62] : memref<56x128xf32, #tpu.memory_space<vmem>>, vector<1x128xf32>
    %c25_63 = arith.constant 25 : index
    %c0_64 = arith.constant 0 : index
    %103 = vector.load %arg10[%c25_63, %c0_64] : memref<64x128xf32, #tpu.memory_space<vmem>>, vector<1x128xf32>
    tpu.vector_store %arg10[%c25_63, %c0_64], %102 {strides = array<i32>} : memref<64x128xf32, #tpu.memory_space<vmem>>, vector<1x128xf32>,
    %c19_65 = arith.constant 19 : index
    %104 = memref.load %arg1[%c19_65] : memref<64xi32, #tpu.memory_space<smem>>
    %105 = arith.index_cast %104 : i32 to index
    %c0_66 = arith.constant 0 : index
    %106 = vector.load %arg2[%105, %c0_66] : memref<56x128xf32, #tpu.memory_space<vmem>>, vector<1x128xf32>
    %c26_67 = arith.constant 26 : index
    %c0_68 = arith.constant 0 : index
    %107 = vector.load %arg10[%c26_67, %c0_68] : memref<64x128xf32, #tpu.memory_space<vmem>>, vector<1x128xf32>
    tpu.vector_store %arg10[%c26_67, %c0_68], %106 {strides = array<i32>} : memref<64x128xf32, #tpu.memory_space<vmem>>, vector<1x128xf32>,
    %c27 = arith.constant 27 : index
    %108 = memref.load %arg1[%c27] : memref<64xi32, #tpu.memory_space<smem>>
    %109 = arith.index_cast %108 : i32 to index
    %c0_69 = arith.constant 0 : index
    %110 = vector.load %arg2[%109, %c0_69] : memref<56x128xf32, #tpu.memory_space<vmem>>, vector<1x128xf32>
    %c27_70 = arith.constant 27 : index
    %c0_71 = arith.constant 0 : index
    %111 = vector.load %arg10[%c27_70, %c0_71] : memref<64x128xf32, #tpu.memory_space<vmem>>, vector<1x128xf32>
    tpu.vector_store %arg10[%c27_70, %c0_71], %110 {strides = array<i32>} : memref<64x128xf32, #tpu.memory_space<vmem>>, vector<1x128xf32>,
    %c35 = arith.constant 35 : index
    %112 = memref.load %arg1[%c35] : memref<64xi32, #tpu.memory_space<smem>>
    %113 = arith.index_cast %112 : i32 to index
    %c0_72 = arith.constant 0 : index
    %114 = vector.load %arg2[%113, %c0_72] : memref<56x128xf32, #tpu.memory_space<vmem>>, vector<1x128xf32>
    %c28 = arith.constant 28 : index
    %c0_73 = arith.constant 0 : index
    %115 = vector.load %arg10[%c28, %c0_73] : memref<64x128xf32, #tpu.memory_space<vmem>>, vector<1x128xf32>
    tpu.vector_store %arg10[%c28, %c0_73], %114 {strides = array<i32>} : memref<64x128xf32, #tpu.memory_space<vmem>>, vector<1x128xf32>,
    %c43 = arith.constant 43 : index
    %116 = memref.load %arg1[%c43] : memref<64xi32, #tpu.memory_space<smem>>
    %117 = arith.index_cast %116 : i32 to index
    %c0_74 = arith.constant 0 : index
    %118 = vector.load %arg2[%117, %c0_74] : memref<56x128xf32, #tpu.memory_space<vmem>>, vector<1x128xf32>
    %c29 = arith.constant 29 : index
    %c0_75 = arith.constant 0 : index
    %119 = vector.load %arg10[%c29, %c0_75] : memref<64x128xf32, #tpu.memory_space<vmem>>, vector<1x128xf32>
    tpu.vector_store %arg10[%c29, %c0_75], %118 {strides = array<i32>} : memref<64x128xf32, #tpu.memory_space<vmem>>, vector<1x128xf32>,
    %c51 = arith.constant 51 : index
    %120 = memref.load %arg1[%c51] : memref<64xi32, #tpu.memory_space<smem>>
    %121 = arith.index_cast %120 : i32 to index
    %c0_76 = arith.constant 0 : index
    %122 = vector.load %arg2[%121, %c0_76] : memref<56x128xf32, #tpu.memory_space<vmem>>, vector<1x128xf32>
    %c30 = arith.constant 30 : index
    %c0_77 = arith.constant 0 : index
    %123 = vector.load %arg10[%c30, %c0_77] : memref<64x128xf32, #tpu.memory_space<vmem>>, vector<1x128xf32>
    tpu.vector_store %arg10[%c30, %c0_77], %122 {strides = array<i32>} : memref<64x128xf32, #tpu.memory_space<vmem>>, vector<1x128xf32>,
    %c59 = arith.constant 59 : index
    %124 = memref.load %arg1[%c59] : memref<64xi32, #tpu.memory_space<smem>>
    %125 = arith.index_cast %124 : i32 to index
    %c0_78 = arith.constant 0 : index
    %126 = vector.load %arg2[%125, %c0_78] : memref<56x128xf32, #tpu.memory_space<vmem>>, vector<1x128xf32>
    %c31 = arith.constant 31 : index
    %c0_79 = arith.constant 0 : index
    %127 = vector.load %arg10[%c31, %c0_79] : memref<64x128xf32, #tpu.memory_space<vmem>>, vector<1x128xf32>
    tpu.vector_store %arg10[%c31, %c0_79], %126 {strides = array<i32>} : memref<64x128xf32, #tpu.memory_space<vmem>>, vector<1x128xf32>,
    %c4_80 = arith.constant 4 : index
    %128 = memref.load %arg1[%c4_80] : memref<64xi32, #tpu.memory_space<smem>>
    %129 = arith.index_cast %128 : i32 to index
    %c0_81 = arith.constant 0 : index
    %130 = vector.load %arg2[%129, %c0_81] : memref<56x128xf32, #tpu.memory_space<vmem>>, vector<1x128xf32>
    %c32_82 = arith.constant 32 : index
    %c0_83 = arith.constant 0 : index
    %131 = vector.load %arg10[%c32_82, %c0_83] : memref<64x128xf32, #tpu.memory_space<vmem>>, vector<1x128xf32>
    tpu.vector_store %arg10[%c32_82, %c0_83], %130 {strides = array<i32>} : memref<64x128xf32, #tpu.memory_space<vmem>>, vector<1x128xf32>,
    %c12_84 = arith.constant 12 : index
    %132 = memref.load %arg1[%c12_84] : memref<64xi32, #tpu.memory_space<smem>>
    %133 = arith.index_cast %132 : i32 to index
    %c0_85 = arith.constant 0 : index
    %134 = vector.load %arg2[%133, %c0_85] : memref<56x128xf32, #tpu.memory_space<vmem>>, vector<1x128xf32>
    %c33_86 = arith.constant 33 : index
    %c0_87 = arith.constant 0 : index
    %135 = vector.load %arg10[%c33_86, %c0_87] : memref<64x128xf32, #tpu.memory_space<vmem>>, vector<1x128xf32>
    tpu.vector_store %arg10[%c33_86, %c0_87], %134 {strides = array<i32>} : memref<64x128xf32, #tpu.memory_space<vmem>>, vector<1x128xf32>,
    %c20_88 = arith.constant 20 : index
    %136 = memref.load %arg1[%c20_88] : memref<64xi32, #tpu.memory_space<smem>>
    %137 = arith.index_cast %136 : i32 to index
    %c0_89 = arith.constant 0 : index
    %138 = vector.load %arg2[%137, %c0_89] : memref<56x128xf32, #tpu.memory_space<vmem>>, vector<1x128xf32>
    %c34_90 = arith.constant 34 : index
    %c0_91 = arith.constant 0 : index
    %139 = vector.load %arg10[%c34_90, %c0_91] : memref<64x128xf32, #tpu.memory_space<vmem>>, vector<1x128xf32>
    tpu.vector_store %arg10[%c34_90, %c0_91], %138 {strides = array<i32>} : memref<64x128xf32, #tpu.memory_space<vmem>>, vector<1x128xf32>,
    %c28_92 = arith.constant 28 : index
    %140 = memref.load %arg1[%c28_92] : memref<64xi32, #tpu.memory_space<smem>>
    %141 = arith.index_cast %140 : i32 to index
    %c0_93 = arith.constant 0 : index
    %142 = vector.load %arg2[%141, %c0_93] : memref<56x128xf32, #tpu.memory_space<vmem>>, vector<1x128xf32>
    %c35_94 = arith.constant 35 : index
    %c0_95 = arith.constant 0 : index
    %143 = vector.load %arg10[%c35_94, %c0_95] : memref<64x128xf32, #tpu.memory_space<vmem>>, vector<1x128xf32>
    tpu.vector_store %arg10[%c35_94, %c0_95], %142 {strides = array<i32>} : memref<64x128xf32, #tpu.memory_space<vmem>>, vector<1x128xf32>,
    %c36 = arith.constant 36 : index
    %144 = memref.load %arg1[%c36] : memref<64xi32, #tpu.memory_space<smem>>
    %145 = arith.index_cast %144 : i32 to index
    %c0_96 = arith.constant 0 : index
    %146 = vector.load %arg2[%145, %c0_96] : memref<56x128xf32, #tpu.memory_space<vmem>>, vector<1x128xf32>
    %c36_97 = arith.constant 36 : index
    %c0_98 = arith.constant 0 : index
    %147 = vector.load %arg10[%c36_97, %c0_98] : memref<64x128xf32, #tpu.memory_space<vmem>>, vector<1x128xf32>
    tpu.vector_store %arg10[%c36_97, %c0_98], %146 {strides = array<i32>} : memref<64x128xf32, #tpu.memory_space<vmem>>, vector<1x128xf32>,
    %c44 = arith.constant 44 : index
    %148 = memref.load %arg1[%c44] : memref<64xi32, #tpu.memory_space<smem>>
    %149 = arith.index_cast %148 : i32 to index
    %c0_99 = arith.constant 0 : index
    %150 = vector.load %arg2[%149, %c0_99] : memref<56x128xf32, #tpu.memory_space<vmem>>, vector<1x128xf32>
    %c37 = arith.constant 37 : index
    %c0_100 = arith.constant 0 : index
    %151 = vector.load %arg10[%c37, %c0_100] : memref<64x128xf32, #tpu.memory_space<vmem>>, vector<1x128xf32>
    tpu.vector_store %arg10[%c37, %c0_100], %150 {strides = array<i32>} : memref<64x128xf32, #tpu.memory_space<vmem>>, vector<1x128xf32>,
    %c52 = arith.constant 52 : index
    %152 = memref.load %arg1[%c52] : memref<64xi32, #tpu.memory_space<smem>>
    %153 = arith.index_cast %152 : i32 to index
    %c0_101 = arith.constant 0 : index
    %154 = vector.load %arg2[%153, %c0_101] : memref<56x128xf32, #tpu.memory_space<vmem>>, vector<1x128xf32>
    %c38 = arith.constant 38 : index
    %c0_102 = arith.constant 0 : index
    %155 = vector.load %arg10[%c38, %c0_102] : memref<64x128xf32, #tpu.memory_space<vmem>>, vector<1x128xf32>
    tpu.vector_store %arg10[%c38, %c0_102], %154 {strides = array<i32>} : memref<64x128xf32, #tpu.memory_space<vmem>>, vector<1x128xf32>,
    %c60 = arith.constant 60 : index
    %156 = memref.load %arg1[%c60] : memref<64xi32, #tpu.memory_space<smem>>
    %157 = arith.index_cast %156 : i32 to index
    %c0_103 = arith.constant 0 : index
    %158 = vector.load %arg2[%157, %c0_103] : memref<56x128xf32, #tpu.memory_space<vmem>>, vector<1x128xf32>
    %c39 = arith.constant 39 : index
    %c0_104 = arith.constant 0 : index
    %159 = vector.load %arg10[%c39, %c0_104] : memref<64x128xf32, #tpu.memory_space<vmem>>, vector<1x128xf32>
    tpu.vector_store %arg10[%c39, %c0_104], %158 {strides = array<i32>} : memref<64x128xf32, #tpu.memory_space<vmem>>, vector<1x128xf32>,
    %c5_105 = arith.constant 5 : index
    %160 = memref.load %arg1[%c5_105] : memref<64xi32, #tpu.memory_space<smem>>
    %161 = arith.index_cast %160 : i32 to index
    %c0_106 = arith.constant 0 : index
    %162 = vector.load %arg2[%161, %c0_106] : memref<56x128xf32, #tpu.memory_space<vmem>>, vector<1x128xf32>
    %c40_107 = arith.constant 40 : index
    %c0_108 = arith.constant 0 : index
    %163 = vector.load %arg10[%c40_107, %c0_108] : memref<64x128xf32, #tpu.memory_space<vmem>>, vector<1x128xf32>
    tpu.vector_store %arg10[%c40_107, %c0_108], %162 {strides = array<i32>} : memref<64x128xf32, #tpu.memory_space<vmem>>, vector<1x128xf32>,
    %c13_109 = arith.constant 13 : index
    %164 = memref.load %arg1[%c13_109] : memref<64xi32, #tpu.memory_space<smem>>
    %165 = arith.index_cast %164 : i32 to index
    %c0_110 = arith.constant 0 : index
    %166 = vector.load %arg2[%165, %c0_110] : memref<56x128xf32, #tpu.memory_space<vmem>>, vector<1x128xf32>
    %c41_111 = arith.constant 41 : index
    %c0_112 = arith.constant 0 : index
    %167 = vector.load %arg10[%c41_111, %c0_112] : memref<64x128xf32, #tpu.memory_space<vmem>>, vector<1x128xf32>
    tpu.vector_store %arg10[%c41_111, %c0_112], %166 {strides = array<i32>} : memref<64x128xf32, #tpu.memory_space<vmem>>, vector<1x128xf32>,
    %c21_113 = arith.constant 21 : index
    %168 = memref.load %arg1[%c21_113] : memref<64xi32, #tpu.memory_space<smem>>
    %169 = arith.index_cast %168 : i32 to index
    %c0_114 = arith.constant 0 : index
    %170 = vector.load %arg2[%169, %c0_114] : memref<56x128xf32, #tpu.memory_space<vmem>>, vector<1x128xf32>
    %c42_115 = arith.constant 42 : index
    %c0_116 = arith.constant 0 : index
    %171 = vector.load %arg10[%c42_115, %c0_116] : memref<64x128xf32, #tpu.memory_space<vmem>>, vector<1x128xf32>
    tpu.vector_store %arg10[%c42_115, %c0_116], %170 {strides = array<i32>} : memref<64x128xf32, #tpu.memory_space<vmem>>, vector<1x128xf32>,
    %c29_117 = arith.constant 29 : index
    %172 = memref.load %arg1[%c29_117] : memref<64xi32, #tpu.memory_space<smem>>
    %173 = arith.index_cast %172 : i32 to index
    %c0_118 = arith.constant 0 : index
    %174 = vector.load %arg2[%173, %c0_118] : memref<56x128xf32, #tpu.memory_space<vmem>>, vector<1x128xf32>
    %c43_119 = arith.constant 43 : index
    %c0_120 = arith.constant 0 : index
    %175 = vector.load %arg10[%c43_119, %c0_120] : memref<64x128xf32, #tpu.memory_space<vmem>>, vector<1x128xf32>
    tpu.vector_store %arg10[%c43_119, %c0_120], %174 {strides = array<i32>} : memref<64x128xf32, #tpu.memory_space<vmem>>, vector<1x128xf32>,
    %c37_121 = arith.constant 37 : index
    %176 = memref.load %arg1[%c37_121] : memref<64xi32, #tpu.memory_space<smem>>
    %177 = arith.index_cast %176 : i32 to index
    %c0_122 = arith.constant 0 : index
    %178 = vector.load %arg2[%177, %c0_122] : memref<56x128xf32, #tpu.memory_space<vmem>>, vector<1x128xf32>
    %c44_123 = arith.constant 44 : index
    %c0_124 = arith.constant 0 : index
    %179 = vector.load %arg10[%c44_123, %c0_124] : memref<64x128xf32, #tpu.memory_space<vmem>>, vector<1x128xf32>
    tpu.vector_store %arg10[%c44_123, %c0_124], %178 {strides = array<i32>} : memref<64x128xf32, #tpu.memory_space<vmem>>, vector<1x128xf32>,
    %c45 = arith.constant 45 : index
    %180 = memref.load %arg1[%c45] : memref<64xi32, #tpu.memory_space<smem>>
    %181 = arith.index_cast %180 : i32 to index
    %c0_125 = arith.constant 0 : index
    %182 = vector.load %arg2[%181, %c0_125] : memref<56x128xf32, #tpu.memory_space<vmem>>, vector<1x128xf32>
    %c45_126 = arith.constant 45 : index
    %c0_127 = arith.constant 0 : index
    %183 = vector.load %arg10[%c45_126, %c0_127] : memref<64x128xf32, #tpu.memory_space<vmem>>, vector<1x128xf32>
    tpu.vector_store %arg10[%c45_126, %c0_127], %182 {strides = array<i32>} : memref<64x128xf32, #tpu.memory_space<vmem>>, vector<1x128xf32>,
    %c53 = arith.constant 53 : index
    %184 = memref.load %arg1[%c53] : memref<64xi32, #tpu.memory_space<smem>>
    %185 = arith.index_cast %184 : i32 to index
    %c0_128 = arith.constant 0 : index
    %186 = vector.load %arg2[%185, %c0_128] : memref<56x128xf32, #tpu.memory_space<vmem>>, vector<1x128xf32>
    %c46 = arith.constant 46 : index
    %c0_129 = arith.constant 0 : index
    %187 = vector.load %arg10[%c46, %c0_129] : memref<64x128xf32, #tpu.memory_space<vmem>>, vector<1x128xf32>
    tpu.vector_store %arg10[%c46, %c0_129], %186 {strides = array<i32>} : memref<64x128xf32, #tpu.memory_space<vmem>>, vector<1x128xf32>,
    %c61 = arith.constant 61 : index
    %188 = memref.load %arg1[%c61] : memref<64xi32, #tpu.memory_space<smem>>
    %189 = arith.index_cast %188 : i32 to index
    %c0_130 = arith.constant 0 : index
    %190 = vector.load %arg2[%189, %c0_130] : memref<56x128xf32, #tpu.memory_space<vmem>>, vector<1x128xf32>
    %c47 = arith.constant 47 : index
    %c0_131 = arith.constant 0 : index
    %191 = vector.load %arg10[%c47, %c0_131] : memref<64x128xf32, #tpu.memory_space<vmem>>, vector<1x128xf32>
    tpu.vector_store %arg10[%c47, %c0_131], %190 {strides = array<i32>} : memref<64x128xf32, #tpu.memory_space<vmem>>, vector<1x128xf32>,
    %c6_132 = arith.constant 6 : index
    %192 = memref.load %arg1[%c6_132] : memref<64xi32, #tpu.memory_space<smem>>
    %193 = arith.index_cast %192 : i32 to index
    %c0_133 = arith.constant 0 : index
    %194 = vector.load %arg2[%193, %c0_133] : memref<56x128xf32, #tpu.memory_space<vmem>>, vector<1x128xf32>
    %c48_134 = arith.constant 48 : index
    %c0_135 = arith.constant 0 : index
    %195 = vector.load %arg10[%c48_134, %c0_135] : memref<64x128xf32, #tpu.memory_space<vmem>>, vector<1x128xf32>
    tpu.vector_store %arg10[%c48_134, %c0_135], %194 {strides = array<i32>} : memref<64x128xf32, #tpu.memory_space<vmem>>, vector<1x128xf32>,
    %c14_136 = arith.constant 14 : index
    %196 = memref.load %arg1[%c14_136] : memref<64xi32, #tpu.memory_space<smem>>
    %197 = arith.index_cast %196 : i32 to index
    %c0_137 = arith.constant 0 : index
    %198 = vector.load %arg2[%197, %c0_137] : memref<56x128xf32, #tpu.memory_space<vmem>>, vector<1x128xf32>
    %c49_138 = arith.constant 49 : index
    %c0_139 = arith.constant 0 : index
    %199 = vector.load %arg10[%c49_138, %c0_139] : memref<64x128xf32, #tpu.memory_space<vmem>>, vector<1x128xf32>
    tpu.vector_store %arg10[%c49_138, %c0_139], %198 {strides = array<i32>} : memref<64x128xf32, #tpu.memory_space<vmem>>, vector<1x128xf32>,
    %c22_140 = arith.constant 22 : index
    %200 = memref.load %arg1[%c22_140] : memref<64xi32, #tpu.memory_space<smem>>
    %201 = arith.index_cast %200 : i32 to index
    %c0_141 = arith.constant 0 : index
    %202 = vector.load %arg2[%201, %c0_141] : memref<56x128xf32, #tpu.memory_space<vmem>>, vector<1x128xf32>
    %c50_142 = arith.constant 50 : index
    %c0_143 = arith.constant 0 : index
    %203 = vector.load %arg10[%c50_142, %c0_143] : memref<64x128xf32, #tpu.memory_space<vmem>>, vector<1x128xf32>
    tpu.vector_store %arg10[%c50_142, %c0_143], %202 {strides = array<i32>} : memref<64x128xf32, #tpu.memory_space<vmem>>, vector<1x128xf32>,
    %c30_144 = arith.constant 30 : index
    %204 = memref.load %arg1[%c30_144] : memref<64xi32, #tpu.memory_space<smem>>
    %205 = arith.index_cast %204 : i32 to index
    %c0_145 = arith.constant 0 : index
    %206 = vector.load %arg2[%205, %c0_145] : memref<56x128xf32, #tpu.memory_space<vmem>>, vector<1x128xf32>
    %c51_146 = arith.constant 51 : index
    %c0_147 = arith.constant 0 : index
    %207 = vector.load %arg10[%c51_146, %c0_147] : memref<64x128xf32, #tpu.memory_space<vmem>>, vector<1x128xf32>
    tpu.vector_store %arg10[%c51_146, %c0_147], %206 {strides = array<i32>} : memref<64x128xf32, #tpu.memory_space<vmem>>, vector<1x128xf32>,
    %c38_148 = arith.constant 38 : index
    %208 = memref.load %arg1[%c38_148] : memref<64xi32, #tpu.memory_space<smem>>
    %209 = arith.index_cast %208 : i32 to index
    %c0_149 = arith.constant 0 : index
    %210 = vector.load %arg2[%209, %c0_149] : memref<56x128xf32, #tpu.memory_space<vmem>>, vector<1x128xf32>
    %c52_150 = arith.constant 52 : index
    %c0_151 = arith.constant 0 : index
    %211 = vector.load %arg10[%c52_150, %c0_151] : memref<64x128xf32, #tpu.memory_space<vmem>>, vector<1x128xf32>
    tpu.vector_store %arg10[%c52_150, %c0_151], %210 {strides = array<i32>} : memref<64x128xf32, #tpu.memory_space<vmem>>, vector<1x128xf32>,
    %c46_152 = arith.constant 46 : index
    %212 = memref.load %arg1[%c46_152] : memref<64xi32, #tpu.memory_space<smem>>
    %213 = arith.index_cast %212 : i32 to index
    %c0_153 = arith.constant 0 : index
    %214 = vector.load %arg2[%213, %c0_153] : memref<56x128xf32, #tpu.memory_space<vmem>>, vector<1x128xf32>
    %c53_154 = arith.constant 53 : index
    %c0_155 = arith.constant 0 : index
    %215 = vector.load %arg10[%c53_154, %c0_155] : memref<64x128xf32, #tpu.memory_space<vmem>>, vector<1x128xf32>
    tpu.vector_store %arg10[%c53_154, %c0_155], %214 {strides = array<i32>} : memref<64x128xf32, #tpu.memory_space<vmem>>, vector<1x128xf32>,
    %c54 = arith.constant 54 : index
    %216 = memref.load %arg1[%c54] : memref<64xi32, #tpu.memory_space<smem>>
    %217 = arith.index_cast %216 : i32 to index
    %c0_156 = arith.constant 0 : index
    %218 = vector.load %arg2[%217, %c0_156] : memref<56x128xf32, #tpu.memory_space<vmem>>, vector<1x128xf32>
    %c54_157 = arith.constant 54 : index
    %c0_158 = arith.constant 0 : index
    %219 = vector.load %arg10[%c54_157, %c0_158] : memref<64x128xf32, #tpu.memory_space<vmem>>, vector<1x128xf32>
    tpu.vector_store %arg10[%c54_157, %c0_158], %218 {strides = array<i32>} : memref<64x128xf32, #tpu.memory_space<vmem>>, vector<1x128xf32>,
    %c62 = arith.constant 62 : index
    %220 = memref.load %arg1[%c62] : memref<64xi32, #tpu.memory_space<smem>>
    %221 = arith.index_cast %220 : i32 to index
    %c0_159 = arith.constant 0 : index
    %222 = vector.load %arg2[%221, %c0_159] : memref<56x128xf32, #tpu.memory_space<vmem>>, vector<1x128xf32>
    %c55 = arith.constant 55 : index
    %c0_160 = arith.constant 0 : index
    %223 = vector.load %arg10[%c55, %c0_160] : memref<64x128xf32, #tpu.memory_space<vmem>>, vector<1x128xf32>
    tpu.vector_store %arg10[%c55, %c0_160], %222 {strides = array<i32>} : memref<64x128xf32, #tpu.memory_space<vmem>>, vector<1x128xf32>,
    %c7_161 = arith.constant 7 : index
    %224 = memref.load %arg1[%c7_161] : memref<64xi32, #tpu.memory_space<smem>>
    %225 = arith.index_cast %224 : i32 to index
    %c0_162 = arith.constant 0 : index
    %226 = vector.load %arg2[%225, %c0_162] : memref<56x128xf32, #tpu.memory_space<vmem>>, vector<1x128xf32>
    %c56_163 = arith.constant 56 : index
    %c0_164 = arith.constant 0 : index
    %227 = vector.load %arg10[%c56_163, %c0_164] : memref<64x128xf32, #tpu.memory_space<vmem>>, vector<1x128xf32>
    tpu.vector_store %arg10[%c56_163, %c0_164], %226 {strides = array<i32>} : memref<64x128xf32, #tpu.memory_space<vmem>>, vector<1x128xf32>,
    %c15_165 = arith.constant 15 : index
    %228 = memref.load %arg1[%c15_165] : memref<64xi32, #tpu.memory_space<smem>>
    %229 = arith.index_cast %228 : i32 to index
    %c0_166 = arith.constant 0 : index
    %230 = vector.load %arg2[%229, %c0_166] : memref<56x128xf32, #tpu.memory_space<vmem>>, vector<1x128xf32>
    %c57_167 = arith.constant 57 : index
    %c0_168 = arith.constant 0 : index
    %231 = vector.load %arg10[%c57_167, %c0_168] : memref<64x128xf32, #tpu.memory_space<vmem>>, vector<1x128xf32>
    tpu.vector_store %arg10[%c57_167, %c0_168], %230 {strides = array<i32>} : memref<64x128xf32, #tpu.memory_space<vmem>>, vector<1x128xf32>,
    %c23_169 = arith.constant 23 : index
    %232 = memref.load %arg1[%c23_169] : memref<64xi32, #tpu.memory_space<smem>>
    %233 = arith.index_cast %232 : i32 to index
    %c0_170 = arith.constant 0 : index
    %234 = vector.load %arg2[%233, %c0_170] : memref<56x128xf32, #tpu.memory_space<vmem>>, vector<1x128xf32>
    %c58_171 = arith.constant 58 : index
    %c0_172 = arith.constant 0 : index
    %235 = vector.load %arg10[%c58_171, %c0_172] : memref<64x128xf32, #tpu.memory_space<vmem>>, vector<1x128xf32>
    tpu.vector_store %arg10[%c58_171, %c0_172], %234 {strides = array<i32>} : memref<64x128xf32, #tpu.memory_space<vmem>>, vector<1x128xf32>,
    %c31_173 = arith.constant 31 : index
    %236 = memref.load %arg1[%c31_173] : memref<64xi32, #tpu.memory_space<smem>>
    %237 = arith.index_cast %236 : i32 to index
    %c0_174 = arith.constant 0 : index
    %238 = vector.load %arg2[%237, %c0_174] : memref<56x128xf32, #tpu.memory_space<vmem>>, vector<1x128xf32>
    %c59_175 = arith.constant 59 : index
    %c0_176 = arith.constant 0 : index
    %239 = vector.load %arg10[%c59_175, %c0_176] : memref<64x128xf32, #tpu.memory_space<vmem>>, vector<1x128xf32>
    tpu.vector_store %arg10[%c59_175, %c0_176], %238 {strides = array<i32>} : memref<64x128xf32, #tpu.memory_space<vmem>>, vector<1x128xf32>,
    %c39_177 = arith.constant 39 : index
    %240 = memref.load %arg1[%c39_177] : memref<64xi32, #tpu.memory_space<smem>>
    %241 = arith.index_cast %240 : i32 to index
    %c0_178 = arith.constant 0 : index
    %242 = vector.load %arg2[%241, %c0_178] : memref<56x128xf32, #tpu.memory_space<vmem>>, vector<1x128xf32>
    %c60_179 = arith.constant 60 : index
    %c0_180 = arith.constant 0 : index
    %243 = vector.load %arg10[%c60_179, %c0_180] : memref<64x128xf32, #tpu.memory_space<vmem>>, vector<1x128xf32>
    tpu.vector_store %arg10[%c60_179, %c0_180], %242 {strides = array<i32>} : memref<64x128xf32, #tpu.memory_space<vmem>>, vector<1x128xf32>,
    %c47_181 = arith.constant 47 : index
    %244 = memref.load %arg1[%c47_181] : memref<64xi32, #tpu.memory_space<smem>>
    %245 = arith.index_cast %244 : i32 to index
    %c0_182 = arith.constant 0 : index
    %246 = vector.load %arg2[%245, %c0_182] : memref<56x128xf32, #tpu.memory_space<vmem>>, vector<1x128xf32>
    %c61_183 = arith.constant 61 : index
    %c0_184 = arith.constant 0 : index
    %247 = vector.load %arg10[%c61_183, %c0_184] : memref<64x128xf32, #tpu.memory_space<vmem>>, vector<1x128xf32>
    tpu.vector_store %arg10[%c61_183, %c0_184], %246 {strides = array<i32>} : memref<64x128xf32, #tpu.memory_space<vmem>>, vector<1x128xf32>,
    %c55_185 = arith.constant 55 : index
    %248 = memref.load %arg1[%c55_185] : memref<64xi32, #tpu.memory_space<smem>>
    %249 = arith.index_cast %248 : i32 to index
    %c0_186 = arith.constant 0 : index
    %250 = vector.load %arg2[%249, %c0_186] : memref<56x128xf32, #tpu.memory_space<vmem>>, vector<1x128xf32>
    %c62_187 = arith.constant 62 : index
    %c0_188 = arith.constant 0 : index
    %251 = vector.load %arg10[%c62_187, %c0_188] : memref<64x128xf32, #tpu.memory_space<vmem>>, vector<1x128xf32>
    tpu.vector_store %arg10[%c62_187, %c0_188], %250 {strides = array<i32>} : memref<64x128xf32, #tpu.memory_space<vmem>>, vector<1x128xf32>,
    %c63 = arith.constant 63 : index
    %252 = memref.load %arg1[%c63] : memref<64xi32, #tpu.memory_space<smem>>
    %253 = arith.index_cast %252 : i32 to index
    %c0_189 = arith.constant 0 : index
    %254 = vector.load %arg2[%253, %c0_189] : memref<56x128xf32, #tpu.memory_space<vmem>>, vector<1x128xf32>
    %c63_190 = arith.constant 63 : index
    %c0_191 = arith.constant 0 : index
    %255 = vector.load %arg10[%c63_190, %c0_191] : memref<64x128xf32, #tpu.memory_space<vmem>>, vector<1x128xf32>
    tpu.vector_store %arg10[%c63_190, %c0_191], %254 {strides = array<i32>} : memref<64x128xf32, #tpu.memory_space<vmem>>, vector<1x128xf32>,
    %c0_192 = arith.constant 0 : index
    %c0_193 = arith.constant 0 : index
    %c0_194 = arith.constant 0 : index
    %256 = vector.load %arg6[%c0_192, %c0_193, %c0_194] : memref<2x8x32xf32, #tpu.memory_space<vmem>>, vector<1x8x32xf32>
    %257 = vector.shape_cast %256 : vector<1x8x32xf32> to vector<8x32xf32>
    %c1_195 = arith.constant 1 : index
    %c0_196 = arith.constant 0 : index
    %c0_197 = arith.constant 0 : index
    %258 = vector.load %arg6[%c1_195, %c0_196, %c0_197] : memref<2x8x32xf32, #tpu.memory_space<vmem>>, vector<1x8x32xf32>
    %259 = vector.shape_cast %258 : vector<1x8x32xf32> to vector<8x32xf32>
    %c0_198 = arith.constant 0 : index
    %c0_199 = arith.constant 0 : index
    %c0_200 = arith.constant 0 : index
    %260 = vector.load %arg7[%c0_198, %c0_199, %c0_200] : memref<2x8x32xf32, #tpu.memory_space<vmem>>, vector<1x8x32xf32>
    %261 = vector.shape_cast %260 : vector<1x8x32xf32> to vector<8x32xf32>
    %c1_201 = arith.constant 1 : index
    %c0_202 = arith.constant 0 : index
    %c0_203 = arith.constant 0 : index
    %262 = vector.load %arg7[%c1_201, %c0_202, %c0_203] : memref<2x8x32xf32, #tpu.memory_space<vmem>>, vector<1x8x32xf32>
    %263 = vector.shape_cast %262 : vector<1x8x32xf32> to vector<8x32xf32>
    %c0_204 = arith.constant 0 : index
    %c0_205 = arith.constant 0 : index
    %264 = vector.load %arg3[%c0_204, %c0_205] : memref<32x128xf32, #tpu.memory_space<vmem>>, vector<32x128xf32>
    %c0_206 = arith.constant 0 : index
    %c0_207 = arith.constant 0 : index
    %265 = vector.load %arg4[%c0_206, %c0_207] : memref<64x128xf32, #tpu.memory_space<vmem>>, vector<64x128xf32>
    %c0_208 = arith.constant 0 : index
    %c0_209 = arith.constant 0 : index
    %266 = vector.load %arg5[%c0_208, %c0_209] : memref<8x128xf32, #tpu.memory_space<vmem>>, vector<8x128xf32>
    %c0_210 = arith.constant 0 : index
    %c0_211 = arith.constant 0 : index
    %267 = vector.load %arg10[%c0_210, %c0_211] : memref<64x128xf32, #tpu.memory_space<vmem>>, vector<8x128xf32>
    %cst = arith.constant dense<0.000000e+00> : vector<8x128xf32>
    %268 = tpu.matmul %257, %264, %cst {dimension_numbers = #tpu.dot_dimension_numbers<[1], [0], [0], [1], [0, 0, 1, 1], [], []>} : vector<8x32xf32>, vector<32x128xf32>, vector<8x128xf32> -> vector<8x128xf32>
    %269 = arith.addf %267, %268 : vector<8x128xf32>
    %270 = vector.extract_strided_slice %269 {offsets = [0, 0], sizes = [8, 32], strides = [1, 1]} : vector<8x128xf32> to vector<8x32xf32>
    %271 = arith.negf %270 : vector<8x32xf32>
    %272 = math.exp %271 : vector<8x32xf32>
    %cst_212 = arith.constant 1.000000e+00 : f32
    %273 = vector.broadcast %cst_212 : f32 to vector<8x32xf32>
    %274 = arith.addf %273, %272 : vector<8x32xf32>
    %275 = arith.divf %273, %274 : vector<8x32xf32>
    %276 = vector.extract_strided_slice %269 {offsets = [0, 32], sizes = [8, 32], strides = [1, 1]} : vector<8x128xf32> to vector<8x32xf32>
    %277 = arith.negf %276 : vector<8x32xf32>
    %278 = math.exp %277 : vector<8x32xf32>
    %cst_213 = arith.constant 1.000000e+00 : f32
    %279 = vector.broadcast %cst_213 : f32 to vector<8x32xf32>
    %280 = arith.addf %279, %278 : vector<8x32xf32>
    %281 = arith.divf %279, %280 : vector<8x32xf32>
    %282 = vector.extract_strided_slice %269 {offsets = [0, 64], sizes = [8, 32], strides = [1, 1]} : vector<8x128xf32> to vector<8x32xf32>
    %283 = math.tanh %282 : vector<8x32xf32>
    %284 = vector.extract_strided_slice %269 {offsets = [0, 96], sizes = [8, 32], strides = [1, 1]} : vector<8x128xf32> to vector<8x32xf32>
    %285 = arith.negf %284 : vector<8x32xf32>
    %286 = math.exp %285 : vector<8x32xf32>
    %cst_214 = arith.constant 1.000000e+00 : f32
    %287 = vector.broadcast %cst_214 : f32 to vector<8x32xf32>
    %288 = arith.addf %287, %286 : vector<8x32xf32>
    %289 = arith.divf %287, %288 : vector<8x32xf32>
    %290 = arith.mulf %281, %261 : vector<8x32xf32>
    %291 = arith.mulf %275, %283 : vector<8x32xf32>
    %292 = arith.addf %290, %291 : vector<8x32xf32>
    %293 = math.tanh %292 : vector<8x32xf32>
    %294 = arith.mulf %289, %293 : vector<8x32xf32>
    %295 = tpu.concatenate %294, %259 in 1 : vector<8x32xf32>, vector<8x32xf32> -> vector<8x64xf32>
    %cst_215 = arith.constant dense<0.000000e+00> : vector<8x128xf32>
    %296 = tpu.matmul %295, %265, %cst_215 {dimension_numbers = #tpu.dot_dimension_numbers<[1], [0], [0], [1], [0, 0, 1, 1], [], []>} : vector<8x64xf32>, vector<64x128xf32>, vector<8x128xf32> -> vector<8x128xf32>
    %297 = arith.addf %296, %266 : vector<8x128xf32>
    %298 = vector.extract_strided_slice %297 {offsets = [0, 0], sizes = [8, 32], strides = [1, 1]} : vector<8x128xf32> to vector<8x32xf32>
    %299 = arith.negf %298 : vector<8x32xf32>
    %300 = math.exp %299 : vector<8x32xf32>
    %cst_216 = arith.constant 1.000000e+00 : f32
    %301 = vector.broadcast %cst_216 : f32 to vector<8x32xf32>
    %302 = arith.addf %301, %300 : vector<8x32xf32>
    %303 = arith.divf %301, %302 : vector<8x32xf32>
    %304 = vector.extract_strided_slice %297 {offsets = [0, 32], sizes = [8, 32], strides = [1, 1]} : vector<8x128xf32> to vector<8x32xf32>
    %305 = arith.negf %304 : vector<8x32xf32>
    %306 = math.exp %305 : vector<8x32xf32>
    %cst_217 = arith.constant 1.000000e+00 : f32
    %307 = vector.broadcast %cst_217 : f32 to vector<8x32xf32>
    %308 = arith.addf %307, %306 : vector<8x32xf32>
    %309 = arith.divf %307, %308 : vector<8x32xf32>
    %310 = vector.extract_strided_slice %297 {offsets = [0, 64], sizes = [8, 32], strides = [1, 1]} : vector<8x128xf32> to vector<8x32xf32>
    %311 = math.tanh %310 : vector<8x32xf32>
    %312 = vector.extract_strided_slice %297 {offsets = [0, 96], sizes = [8, 32], strides = [1, 1]} : vector<8x128xf32> to vector<8x32xf32>
    %313 = arith.negf %312 : vector<8x32xf32>
    %314 = math.exp %313 : vector<8x32xf32>
    %cst_218 = arith.constant 1.000000e+00 : f32
    %315 = vector.broadcast %cst_218 : f32 to vector<8x32xf32>
    %316 = arith.addf %315, %314 : vector<8x32xf32>
    %317 = arith.divf %315, %316 : vector<8x32xf32>
    %318 = arith.mulf %309, %263 : vector<8x32xf32>
    %319 = arith.mulf %303, %311 : vector<8x32xf32>
    %320 = arith.addf %318, %319 : vector<8x32xf32>
    %321 = math.tanh %320 : vector<8x32xf32>
    %322 = arith.mulf %317, %321 : vector<8x32xf32>
    %c8_219 = arith.constant 8 : index
    %c0_220 = arith.constant 0 : index
    %323 = vector.load %arg10[%c8_219, %c0_220] : memref<64x128xf32, #tpu.memory_space<vmem>>, vector<8x128xf32>
    %cst_221 = arith.constant dense<0.000000e+00> : vector<8x128xf32>
    %324 = tpu.matmul %294, %264, %cst_221 {dimension_numbers = #tpu.dot_dimension_numbers<[1], [0], [0], [1], [0, 0, 1, 1], [], []>} : vector<8x32xf32>, vector<32x128xf32>, vector<8x128xf32> -> vector<8x128xf32>
    %325 = arith.addf %323, %324 : vector<8x128xf32>
    %326 = vector.extract_strided_slice %325 {offsets = [0, 0], sizes = [8, 32], strides = [1, 1]} : vector<8x128xf32> to vector<8x32xf32>
    %327 = arith.negf %326 : vector<8x32xf32>
    %328 = math.exp %327 : vector<8x32xf32>
    %cst_222 = arith.constant 1.000000e+00 : f32
    %329 = vector.broadcast %cst_222 : f32 to vector<8x32xf32>
    %330 = arith.addf %329, %328 : vector<8x32xf32>
    %331 = arith.divf %329, %330 : vector<8x32xf32>
    %332 = vector.extract_strided_slice %325 {offsets = [0, 32], sizes = [8, 32], strides = [1, 1]} : vector<8x128xf32> to vector<8x32xf32>
    %333 = arith.negf %332 : vector<8x32xf32>
    %334 = math.exp %333 : vector<8x32xf32>
    %cst_223 = arith.constant 1.000000e+00 : f32
    %335 = vector.broadcast %cst_223 : f32 to vector<8x32xf32>
    %336 = arith.addf %335, %334 : vector<8x32xf32>
    %337 = arith.divf %335, %336 : vector<8x32xf32>
    %338 = vector.extract_strided_slice %325 {offsets = [0, 64], sizes = [8, 32], strides = [1, 1]} : vector<8x128xf32> to vector<8x32xf32>
    %339 = math.tanh %338 : vector<8x32xf32>
    %340 = vector.extract_strided_slice %325 {offsets = [0, 96], sizes = [8, 32], strides = [1, 1]} : vector<8x128xf32> to vector<8x32xf32>
    %341 = arith.negf %340 : vector<8x32xf32>
    %342 = math.exp %341 : vector<8x32xf32>
    %cst_224 = arith.constant 1.000000e+00 : f32
    %343 = vector.broadcast %cst_224 : f32 to vector<8x32xf32>
    %344 = arith.addf %343, %342 : vector<8x32xf32>
    %345 = arith.divf %343, %344 : vector<8x32xf32>
    %346 = arith.mulf %337, %292 : vector<8x32xf32>
    %347 = arith.mulf %331, %339 : vector<8x32xf32>
    %348 = arith.addf %346, %347 : vector<8x32xf32>
    %349 = math.tanh %348 : vector<8x32xf32>
    %350 = arith.mulf %345, %349 : vector<8x32xf32>
    %351 = tpu.concatenate %350, %322 in 1 : vector<8x32xf32>, vector<8x32xf32> -> vector<8x64xf32>
    %cst_225 = arith.constant dense<0.000000e+00> : vector<8x128xf32>
    %352 = tpu.matmul %351, %265, %cst_225 {dimension_numbers = #tpu.dot_dimension_numbers<[1], [0], [0], [1], [0, 0, 1, 1], [], []>} : vector<8x64xf32>, vector<64x128xf32>, vector<8x128xf32> -> vector<8x128xf32>
    %353 = arith.addf %352, %266 : vector<8x128xf32>
    %354 = vector.extract_strided_slice %353 {offsets = [0, 0], sizes = [8, 32], strides = [1, 1]} : vector<8x128xf32> to vector<8x32xf32>
    %355 = arith.negf %354 : vector<8x32xf32>
    %356 = math.exp %355 : vector<8x32xf32>
    %cst_226 = arith.constant 1.000000e+00 : f32
    %357 = vector.broadcast %cst_226 : f32 to vector<8x32xf32>
    %358 = arith.addf %357, %356 : vector<8x32xf32>
    %359 = arith.divf %357, %358 : vector<8x32xf32>
    %360 = vector.extract_strided_slice %353 {offsets = [0, 32], sizes = [8, 32], strides = [1, 1]} : vector<8x128xf32> to vector<8x32xf32>
    %361 = arith.negf %360 : vector<8x32xf32>
    %362 = math.exp %361 : vector<8x32xf32>
    %cst_227 = arith.constant 1.000000e+00 : f32
    %363 = vector.broadcast %cst_227 : f32 to vector<8x32xf32>
    %364 = arith.addf %363, %362 : vector<8x32xf32>
    %365 = arith.divf %363, %364 : vector<8x32xf32>
    %366 = vector.extract_strided_slice %353 {offsets = [0, 64], sizes = [8, 32], strides = [1, 1]} : vector<8x128xf32> to vector<8x32xf32>
    %367 = math.tanh %366 : vector<8x32xf32>
    %368 = vector.extract_strided_slice %353 {offsets = [0, 96], sizes = [8, 32], strides = [1, 1]} : vector<8x128xf32> to vector<8x32xf32>
    %369 = arith.negf %368 : vector<8x32xf32>
    %370 = math.exp %369 : vector<8x32xf32>
    %cst_228 = arith.constant 1.000000e+00 : f32
    %371 = vector.broadcast %cst_228 : f32 to vector<8x32xf32>
    %372 = arith.addf %371, %370 : vector<8x32xf32>
    %373 = arith.divf %371, %372 : vector<8x32xf32>
    %374 = arith.mulf %365, %320 : vector<8x32xf32>
    %375 = arith.mulf %359, %367 : vector<8x32xf32>
    %376 = arith.addf %374, %375 : vector<8x32xf32>
    %377 = math.tanh %376 : vector<8x32xf32>
    %378 = arith.mulf %373, %377 : vector<8x32xf32>
    %c16_229 = arith.constant 16 : index
    %c0_230 = arith.constant 0 : index
    %379 = vector.load %arg10[%c16_229, %c0_230] : memref<64x128xf32, #tpu.memory_space<vmem>>, vector<8x128xf32>
    %cst_231 = arith.constant dense<0.000000e+00> : vector<8x128xf32>
    %380 = tpu.matmul %350, %264, %cst_231 {dimension_numbers = #tpu.dot_dimension_numbers<[1], [0], [0], [1], [0, 0, 1, 1], [], []>} : vector<8x32xf32>, vector<32x128xf32>, vector<8x128xf32> -> vector<8x128xf32>
    %381 = arith.addf %379, %380 : vector<8x128xf32>
    %382 = vector.extract_strided_slice %381 {offsets = [0, 0], sizes = [8, 32], strides = [1, 1]} : vector<8x128xf32> to vector<8x32xf32>
    %383 = arith.negf %382 : vector<8x32xf32>
    %384 = math.exp %383 : vector<8x32xf32>
    %cst_232 = arith.constant 1.000000e+00 : f32
    %385 = vector.broadcast %cst_232 : f32 to vector<8x32xf32>
    %386 = arith.addf %385, %384 : vector<8x32xf32>
    %387 = arith.divf %385, %386 : vector<8x32xf32>
    %388 = vector.extract_strided_slice %381 {offsets = [0, 32], sizes = [8, 32], strides = [1, 1]} : vector<8x128xf32> to vector<8x32xf32>
    %389 = arith.negf %388 : vector<8x32xf32>
    %390 = math.exp %389 : vector<8x32xf32>
    %cst_233 = arith.constant 1.000000e+00 : f32
    %391 = vector.broadcast %cst_233 : f32 to vector<8x32xf32>
    %392 = arith.addf %391, %390 : vector<8x32xf32>
    %393 = arith.divf %391, %392 : vector<8x32xf32>
    %394 = vector.extract_strided_slice %381 {offsets = [0, 64], sizes = [8, 32], strides = [1, 1]} : vector<8x128xf32> to vector<8x32xf32>
    %395 = math.tanh %394 : vector<8x32xf32>
    %396 = vector.extract_strided_slice %381 {offsets = [0, 96], sizes = [8, 32], strides = [1, 1]} : vector<8x128xf32> to vector<8x32xf32>
    %397 = arith.negf %396 : vector<8x32xf32>
    %398 = math.exp %397 : vector<8x32xf32>
    %cst_234 = arith.constant 1.000000e+00 : f32
    %399 = vector.broadcast %cst_234 : f32 to vector<8x32xf32>
    %400 = arith.addf %399, %398 : vector<8x32xf32>
    %401 = arith.divf %399, %400 : vector<8x32xf32>
    %402 = arith.mulf %393, %348 : vector<8x32xf32>
    %403 = arith.mulf %387, %395 : vector<8x32xf32>
    %404 = arith.addf %402, %403 : vector<8x32xf32>
    %405 = math.tanh %404 : vector<8x32xf32>
    %406 = arith.mulf %401, %405 : vector<8x32xf32>
    %407 = tpu.concatenate %406, %378 in 1 : vector<8x32xf32>, vector<8x32xf32> -> vector<8x64xf32>
    %cst_235 = arith.constant dense<0.000000e+00> : vector<8x128xf32>
    %408 = tpu.matmul %407, %265, %cst_235 {dimension_numbers = #tpu.dot_dimension_numbers<[1], [0], [0], [1], [0, 0, 1, 1], [], []>} : vector<8x64xf32>, vector<64x128xf32>, vector<8x128xf32> -> vector<8x128xf32>
    %409 = arith.addf %408, %266 : vector<8x128xf32>
    %410 = vector.extract_strided_slice %409 {offsets = [0, 0], sizes = [8, 32], strides = [1, 1]} : vector<8x128xf32> to vector<8x32xf32>
    %411 = arith.negf %410 : vector<8x32xf32>
    %412 = math.exp %411 : vector<8x32xf32>
    %cst_236 = arith.constant 1.000000e+00 : f32
    %413 = vector.broadcast %cst_236 : f32 to vector<8x32xf32>
    %414 = arith.addf %413, %412 : vector<8x32xf32>
    %415 = arith.divf %413, %414 : vector<8x32xf32>
    %416 = vector.extract_strided_slice %409 {offsets = [0, 32], sizes = [8, 32], strides = [1, 1]} : vector<8x128xf32> to vector<8x32xf32>
    %417 = arith.negf %416 : vector<8x32xf32>
    %418 = math.exp %417 : vector<8x32xf32>
    %cst_237 = arith.constant 1.000000e+00 : f32
    %419 = vector.broadcast %cst_237 : f32 to vector<8x32xf32>
    %420 = arith.addf %419, %418 : vector<8x32xf32>
    %421 = arith.divf %419, %420 : vector<8x32xf32>
    %422 = vector.extract_strided_slice %409 {offsets = [0, 64], sizes = [8, 32], strides = [1, 1]} : vector<8x128xf32> to vector<8x32xf32>
    %423 = math.tanh %422 : vector<8x32xf32>
    %424 = vector.extract_strided_slice %409 {offsets = [0, 96], sizes = [8, 32], strides = [1, 1]} : vector<8x128xf32> to vector<8x32xf32>
    %425 = arith.negf %424 : vector<8x32xf32>
    %426 = math.exp %425 : vector<8x32xf32>
    %cst_238 = arith.constant 1.000000e+00 : f32
    %427 = vector.broadcast %cst_238 : f32 to vector<8x32xf32>
    %428 = arith.addf %427, %426 : vector<8x32xf32>
    %429 = arith.divf %427, %428 : vector<8x32xf32>
    %430 = arith.mulf %421, %376 : vector<8x32xf32>
    %431 = arith.mulf %415, %423 : vector<8x32xf32>
    %432 = arith.addf %430, %431 : vector<8x32xf32>
    %433 = math.tanh %432 : vector<8x32xf32>
    %434 = arith.mulf %429, %433 : vector<8x32xf32>
    %c24_239 = arith.constant 24 : index
    %c0_240 = arith.constant 0 : index
    %435 = vector.load %arg10[%c24_239, %c0_240] : memref<64x128xf32, #tpu.memory_space<vmem>>, vector<8x128xf32>
    %cst_241 = arith.constant dense<0.000000e+00> : vector<8x128xf32>
    %436 = tpu.matmul %406, %264, %cst_241 {dimension_numbers = #tpu.dot_dimension_numbers<[1], [0], [0], [1], [0, 0, 1, 1], [], []>} : vector<8x32xf32>, vector<32x128xf32>, vector<8x128xf32> -> vector<8x128xf32>
    %437 = arith.addf %435, %436 : vector<8x128xf32>
    %438 = vector.extract_strided_slice %437 {offsets = [0, 0], sizes = [8, 32], strides = [1, 1]} : vector<8x128xf32> to vector<8x32xf32>
    %439 = arith.negf %438 : vector<8x32xf32>
    %440 = math.exp %439 : vector<8x32xf32>
    %cst_242 = arith.constant 1.000000e+00 : f32
    %441 = vector.broadcast %cst_242 : f32 to vector<8x32xf32>
    %442 = arith.addf %441, %440 : vector<8x32xf32>
    %443 = arith.divf %441, %442 : vector<8x32xf32>
    %444 = vector.extract_strided_slice %437 {offsets = [0, 32], sizes = [8, 32], strides = [1, 1]} : vector<8x128xf32> to vector<8x32xf32>
    %445 = arith.negf %444 : vector<8x32xf32>
    %446 = math.exp %445 : vector<8x32xf32>
    %cst_243 = arith.constant 1.000000e+00 : f32
    %447 = vector.broadcast %cst_243 : f32 to vector<8x32xf32>
    %448 = arith.addf %447, %446 : vector<8x32xf32>
    %449 = arith.divf %447, %448 : vector<8x32xf32>
    %450 = vector.extract_strided_slice %437 {offsets = [0, 64], sizes = [8, 32], strides = [1, 1]} : vector<8x128xf32> to vector<8x32xf32>
    %451 = math.tanh %450 : vector<8x32xf32>
    %452 = vector.extract_strided_slice %437 {offsets = [0, 96], sizes = [8, 32], strides = [1, 1]} : vector<8x128xf32> to vector<8x32xf32>
    %453 = arith.negf %452 : vector<8x32xf32>
    %454 = math.exp %453 : vector<8x32xf32>
    %cst_244 = arith.constant 1.000000e+00 : f32
    %455 = vector.broadcast %cst_244 : f32 to vector<8x32xf32>
    %456 = arith.addf %455, %454 : vector<8x32xf32>
    %457 = arith.divf %455, %456 : vector<8x32xf32>
    %458 = arith.mulf %449, %404 : vector<8x32xf32>
    %459 = arith.mulf %443, %451 : vector<8x32xf32>
    %460 = arith.addf %458, %459 : vector<8x32xf32>
    %461 = math.tanh %460 : vector<8x32xf32>
    %462 = arith.mulf %457, %461 : vector<8x32xf32>
    %463 = tpu.concatenate %462, %434 in 1 : vector<8x32xf32>, vector<8x32xf32> -> vector<8x64xf32>
    %cst_245 = arith.constant dense<0.000000e+00> : vector<8x128xf32>
    %464 = tpu.matmul %463, %265, %cst_245 {dimension_numbers = #tpu.dot_dimension_numbers<[1], [0], [0], [1], [0, 0, 1, 1], [], []>} : vector<8x64xf32>, vector<64x128xf32>, vector<8x128xf32> -> vector<8x128xf32>
    %465 = arith.addf %464, %266 : vector<8x128xf32>
    %466 = vector.extract_strided_slice %465 {offsets = [0, 0], sizes = [8, 32], strides = [1, 1]} : vector<8x128xf32> to vector<8x32xf32>
    %467 = arith.negf %466 : vector<8x32xf32>
    %468 = math.exp %467 : vector<8x32xf32>
    %cst_246 = arith.constant 1.000000e+00 : f32
    %469 = vector.broadcast %cst_246 : f32 to vector<8x32xf32>
    %470 = arith.addf %469, %468 : vector<8x32xf32>
    %471 = arith.divf %469, %470 : vector<8x32xf32>
    %472 = vector.extract_strided_slice %465 {offsets = [0, 32], sizes = [8, 32], strides = [1, 1]} : vector<8x128xf32> to vector<8x32xf32>
    %473 = arith.negf %472 : vector<8x32xf32>
    %474 = math.exp %473 : vector<8x32xf32>
    %cst_247 = arith.constant 1.000000e+00 : f32
    %475 = vector.broadcast %cst_247 : f32 to vector<8x32xf32>
    %476 = arith.addf %475, %474 : vector<8x32xf32>
    %477 = arith.divf %475, %476 : vector<8x32xf32>
    %478 = vector.extract_strided_slice %465 {offsets = [0, 64], sizes = [8, 32], strides = [1, 1]} : vector<8x128xf32> to vector<8x32xf32>
    %479 = math.tanh %478 : vector<8x32xf32>
    %480 = vector.extract_strided_slice %465 {offsets = [0, 96], sizes = [8, 32], strides = [1, 1]} : vector<8x128xf32> to vector<8x32xf32>
    %481 = arith.negf %480 : vector<8x32xf32>
    %482 = math.exp %481 : vector<8x32xf32>
    %cst_248 = arith.constant 1.000000e+00 : f32
    %483 = vector.broadcast %cst_248 : f32 to vector<8x32xf32>
    %484 = arith.addf %483, %482 : vector<8x32xf32>
    %485 = arith.divf %483, %484 : vector<8x32xf32>
    %486 = arith.mulf %477, %432 : vector<8x32xf32>
    %487 = arith.mulf %471, %479 : vector<8x32xf32>
    %488 = arith.addf %486, %487 : vector<8x32xf32>
    %489 = math.tanh %488 : vector<8x32xf32>
    %490 = arith.mulf %485, %489 : vector<8x32xf32>
    %c32_249 = arith.constant 32 : index
    %c0_250 = arith.constant 0 : index
    %491 = vector.load %arg10[%c32_249, %c0_250] : memref<64x128xf32, #tpu.memory_space<vmem>>, vector<8x128xf32>
    %cst_251 = arith.constant dense<0.000000e+00> : vector<8x128xf32>
    %492 = tpu.matmul %462, %264, %cst_251 {dimension_numbers = #tpu.dot_dimension_numbers<[1], [0], [0], [1], [0, 0, 1, 1], [], []>} : vector<8x32xf32>, vector<32x128xf32>, vector<8x128xf32> -> vector<8x128xf32>
    %493 = arith.addf %491, %492 : vector<8x128xf32>
    %494 = vector.extract_strided_slice %493 {offsets = [0, 0], sizes = [8, 32], strides = [1, 1]} : vector<8x128xf32> to vector<8x32xf32>
    %495 = arith.negf %494 : vector<8x32xf32>
    %496 = math.exp %495 : vector<8x32xf32>
    %cst_252 = arith.constant 1.000000e+00 : f32
    %497 = vector.broadcast %cst_252 : f32 to vector<8x32xf32>
    %498 = arith.addf %497, %496 : vector<8x32xf32>
    %499 = arith.divf %497, %498 : vector<8x32xf32>
    %500 = vector.extract_strided_slice %493 {offsets = [0, 32], sizes = [8, 32], strides = [1, 1]} : vector<8x128xf32> to vector<8x32xf32>
    %501 = arith.negf %500 : vector<8x32xf32>
    %502 = math.exp %501 : vector<8x32xf32>
    %cst_253 = arith.constant 1.000000e+00 : f32
    %503 = vector.broadcast %cst_253 : f32 to vector<8x32xf32>
    %504 = arith.addf %503, %502 : vector<8x32xf32>
    %505 = arith.divf %503, %504 : vector<8x32xf32>
    %506 = vector.extract_strided_slice %493 {offsets = [0, 64], sizes = [8, 32], strides = [1, 1]} : vector<8x128xf32> to vector<8x32xf32>
    %507 = math.tanh %506 : vector<8x32xf32>
    %508 = vector.extract_strided_slice %493 {offsets = [0, 96], sizes = [8, 32], strides = [1, 1]} : vector<8x128xf32> to vector<8x32xf32>
    %509 = arith.negf %508 : vector<8x32xf32>
    %510 = math.exp %509 : vector<8x32xf32>
    %cst_254 = arith.constant 1.000000e+00 : f32
    %511 = vector.broadcast %cst_254 : f32 to vector<8x32xf32>
    %512 = arith.addf %511, %510 : vector<8x32xf32>
    %513 = arith.divf %511, %512 : vector<8x32xf32>
    %514 = arith.mulf %505, %460 : vector<8x32xf32>
    %515 = arith.mulf %499, %507 : vector<8x32xf32>
    %516 = arith.addf %514, %515 : vector<8x32xf32>
    %517 = math.tanh %516 : vector<8x32xf32>
    %518 = arith.mulf %513, %517 : vector<8x32xf32>
    %519 = tpu.concatenate %518, %490 in 1 : vector<8x32xf32>, vector<8x32xf32> -> vector<8x64xf32>
    %cst_255 = arith.constant dense<0.000000e+00> : vector<8x128xf32>
    %520 = tpu.matmul %519, %265, %cst_255 {dimension_numbers = #tpu.dot_dimension_numbers<[1], [0], [0], [1], [0, 0, 1, 1], [], []>} : vector<8x64xf32>, vector<64x128xf32>, vector<8x128xf32> -> vector<8x128xf32>
    %521 = arith.addf %520, %266 : vector<8x128xf32>
    %522 = vector.extract_strided_slice %521 {offsets = [0, 0], sizes = [8, 32], strides = [1, 1]} : vector<8x128xf32> to vector<8x32xf32>
    %523 = arith.negf %522 : vector<8x32xf32>
    %524 = math.exp %523 : vector<8x32xf32>
    %cst_256 = arith.constant 1.000000e+00 : f32
    %525 = vector.broadcast %cst_256 : f32 to vector<8x32xf32>
    %526 = arith.addf %525, %524 : vector<8x32xf32>
    %527 = arith.divf %525, %526 : vector<8x32xf32>
    %528 = vector.extract_strided_slice %521 {offsets = [0, 32], sizes = [8, 32], strides = [1, 1]} : vector<8x128xf32> to vector<8x32xf32>
    %529 = arith.negf %528 : vector<8x32xf32>
    %530 = math.exp %529 : vector<8x32xf32>
    %cst_257 = arith.constant 1.000000e+00 : f32
    %531 = vector.broadcast %cst_257 : f32 to vector<8x32xf32>
    %532 = arith.addf %531, %530 : vector<8x32xf32>
    %533 = arith.divf %531, %532 : vector<8x32xf32>
    %534 = vector.extract_strided_slice %521 {offsets = [0, 64], sizes = [8, 32], strides = [1, 1]} : vector<8x128xf32> to vector<8x32xf32>
    %535 = math.tanh %534 : vector<8x32xf32>
    %536 = vector.extract_strided_slice %521 {offsets = [0, 96], sizes = [8, 32], strides = [1, 1]} : vector<8x128xf32> to vector<8x32xf32>
    %537 = arith.negf %536 : vector<8x32xf32>
    %538 = math.exp %537 : vector<8x32xf32>
    %cst_258 = arith.constant 1.000000e+00 : f32
    %539 = vector.broadcast %cst_258 : f32 to vector<8x32xf32>
    %540 = arith.addf %539, %538 : vector<8x32xf32>
    %541 = arith.divf %539, %540 : vector<8x32xf32>
    %542 = arith.mulf %533, %488 : vector<8x32xf32>
    %543 = arith.mulf %527, %535 : vector<8x32xf32>
    %544 = arith.addf %542, %543 : vector<8x32xf32>
    %545 = math.tanh %544 : vector<8x32xf32>
    %546 = arith.mulf %541, %545 : vector<8x32xf32>
    %c40_259 = arith.constant 40 : index
    %c0_260 = arith.constant 0 : index
    %547 = vector.load %arg10[%c40_259, %c0_260] : memref<64x128xf32, #tpu.memory_space<vmem>>, vector<8x128xf32>
    %cst_261 = arith.constant dense<0.000000e+00> : vector<8x128xf32>
    %548 = tpu.matmul %518, %264, %cst_261 {dimension_numbers = #tpu.dot_dimension_numbers<[1], [0], [0], [1], [0, 0, 1, 1], [], []>} : vector<8x32xf32>, vector<32x128xf32>, vector<8x128xf32> -> vector<8x128xf32>
    %549 = arith.addf %547, %548 : vector<8x128xf32>
    %550 = vector.extract_strided_slice %549 {offsets = [0, 0], sizes = [8, 32], strides = [1, 1]} : vector<8x128xf32> to vector<8x32xf32>
    %551 = arith.negf %550 : vector<8x32xf32>
    %552 = math.exp %551 : vector<8x32xf32>
    %cst_262 = arith.constant 1.000000e+00 : f32
    %553 = vector.broadcast %cst_262 : f32 to vector<8x32xf32>
    %554 = arith.addf %553, %552 : vector<8x32xf32>
    %555 = arith.divf %553, %554 : vector<8x32xf32>
    %556 = vector.extract_strided_slice %549 {offsets = [0, 32], sizes = [8, 32], strides = [1, 1]} : vector<8x128xf32> to vector<8x32xf32>
    %557 = arith.negf %556 : vector<8x32xf32>
    %558 = math.exp %557 : vector<8x32xf32>
    %cst_263 = arith.constant 1.000000e+00 : f32
    %559 = vector.broadcast %cst_263 : f32 to vector<8x32xf32>
    %560 = arith.addf %559, %558 : vector<8x32xf32>
    %561 = arith.divf %559, %560 : vector<8x32xf32>
    %562 = vector.extract_strided_slice %549 {offsets = [0, 64], sizes = [8, 32], strides = [1, 1]} : vector<8x128xf32> to vector<8x32xf32>
    %563 = math.tanh %562 : vector<8x32xf32>
    %564 = vector.extract_strided_slice %549 {offsets = [0, 96], sizes = [8, 32], strides = [1, 1]} : vector<8x128xf32> to vector<8x32xf32>
    %565 = arith.negf %564 : vector<8x32xf32>
    %566 = math.exp %565 : vector<8x32xf32>
    %cst_264 = arith.constant 1.000000e+00 : f32
    %567 = vector.broadcast %cst_264 : f32 to vector<8x32xf32>
    %568 = arith.addf %567, %566 : vector<8x32xf32>
    %569 = arith.divf %567, %568 : vector<8x32xf32>
    %570 = arith.mulf %561, %516 : vector<8x32xf32>
    %571 = arith.mulf %555, %563 : vector<8x32xf32>
    %572 = arith.addf %570, %571 : vector<8x32xf32>
    %573 = math.tanh %572 : vector<8x32xf32>
    %574 = arith.mulf %569, %573 : vector<8x32xf32>
    %575 = tpu.concatenate %574, %546 in 1 : vector<8x32xf32>, vector<8x32xf32> -> vector<8x64xf32>
    %cst_265 = arith.constant dense<0.000000e+00> : vector<8x128xf32>
    %576 = tpu.matmul %575, %265, %cst_265 {dimension_numbers = #tpu.dot_dimension_numbers<[1], [0], [0], [1], [0, 0, 1, 1], [], []>} : vector<8x64xf32>, vector<64x128xf32>, vector<8x128xf32> -> vector<8x128xf32>
    %577 = arith.addf %576, %266 : vector<8x128xf32>
    %578 = vector.extract_strided_slice %577 {offsets = [0, 0], sizes = [8, 32], strides = [1, 1]} : vector<8x128xf32> to vector<8x32xf32>
    %579 = arith.negf %578 : vector<8x32xf32>
    %580 = math.exp %579 : vector<8x32xf32>
    %cst_266 = arith.constant 1.000000e+00 : f32
    %581 = vector.broadcast %cst_266 : f32 to vector<8x32xf32>
    %582 = arith.addf %581, %580 : vector<8x32xf32>
    %583 = arith.divf %581, %582 : vector<8x32xf32>
    %584 = vector.extract_strided_slice %577 {offsets = [0, 32], sizes = [8, 32], strides = [1, 1]} : vector<8x128xf32> to vector<8x32xf32>
    %585 = arith.negf %584 : vector<8x32xf32>
    %586 = math.exp %585 : vector<8x32xf32>
    %cst_267 = arith.constant 1.000000e+00 : f32
    %587 = vector.broadcast %cst_267 : f32 to vector<8x32xf32>
    %588 = arith.addf %587, %586 : vector<8x32xf32>
    %589 = arith.divf %587, %588 : vector<8x32xf32>
    %590 = vector.extract_strided_slice %577 {offsets = [0, 64], sizes = [8, 32], strides = [1, 1]} : vector<8x128xf32> to vector<8x32xf32>
    %591 = math.tanh %590 : vector<8x32xf32>
    %592 = vector.extract_strided_slice %577 {offsets = [0, 96], sizes = [8, 32], strides = [1, 1]} : vector<8x128xf32> to vector<8x32xf32>
    %593 = arith.negf %592 : vector<8x32xf32>
    %594 = math.exp %593 : vector<8x32xf32>
    %cst_268 = arith.constant 1.000000e+00 : f32
    %595 = vector.broadcast %cst_268 : f32 to vector<8x32xf32>
    %596 = arith.addf %595, %594 : vector<8x32xf32>
    %597 = arith.divf %595, %596 : vector<8x32xf32>
    %598 = arith.mulf %589, %544 : vector<8x32xf32>
    %599 = arith.mulf %583, %591 : vector<8x32xf32>
    %600 = arith.addf %598, %599 : vector<8x32xf32>
    %601 = math.tanh %600 : vector<8x32xf32>
    %602 = arith.mulf %597, %601 : vector<8x32xf32>
    %c48_269 = arith.constant 48 : index
    %c0_270 = arith.constant 0 : index
    %603 = vector.load %arg10[%c48_269, %c0_270] : memref<64x128xf32, #tpu.memory_space<vmem>>, vector<8x128xf32>
    %cst_271 = arith.constant dense<0.000000e+00> : vector<8x128xf32>
    %604 = tpu.matmul %574, %264, %cst_271 {dimension_numbers = #tpu.dot_dimension_numbers<[1], [0], [0], [1], [0, 0, 1, 1], [], []>} : vector<8x32xf32>, vector<32x128xf32>, vector<8x128xf32> -> vector<8x128xf32>
    %605 = arith.addf %603, %604 : vector<8x128xf32>
    %606 = vector.extract_strided_slice %605 {offsets = [0, 0], sizes = [8, 32], strides = [1, 1]} : vector<8x128xf32> to vector<8x32xf32>
    %607 = arith.negf %606 : vector<8x32xf32>
    %608 = math.exp %607 : vector<8x32xf32>
    %cst_272 = arith.constant 1.000000e+00 : f32
    %609 = vector.broadcast %cst_272 : f32 to vector<8x32xf32>
    %610 = arith.addf %609, %608 : vector<8x32xf32>
    %611 = arith.divf %609, %610 : vector<8x32xf32>
    %612 = vector.extract_strided_slice %605 {offsets = [0, 32], sizes = [8, 32], strides = [1, 1]} : vector<8x128xf32> to vector<8x32xf32>
    %613 = arith.negf %612 : vector<8x32xf32>
    %614 = math.exp %613 : vector<8x32xf32>
    %cst_273 = arith.constant 1.000000e+00 : f32
    %615 = vector.broadcast %cst_273 : f32 to vector<8x32xf32>
    %616 = arith.addf %615, %614 : vector<8x32xf32>
    %617 = arith.divf %615, %616 : vector<8x32xf32>
    %618 = vector.extract_strided_slice %605 {offsets = [0, 64], sizes = [8, 32], strides = [1, 1]} : vector<8x128xf32> to vector<8x32xf32>
    %619 = math.tanh %618 : vector<8x32xf32>
    %620 = vector.extract_strided_slice %605 {offsets = [0, 96], sizes = [8, 32], strides = [1, 1]} : vector<8x128xf32> to vector<8x32xf32>
    %621 = arith.negf %620 : vector<8x32xf32>
    %622 = math.exp %621 : vector<8x32xf32>
    %cst_274 = arith.constant 1.000000e+00 : f32
    %623 = vector.broadcast %cst_274 : f32 to vector<8x32xf32>
    %624 = arith.addf %623, %622 : vector<8x32xf32>
    %625 = arith.divf %623, %624 : vector<8x32xf32>
    %626 = arith.mulf %617, %572 : vector<8x32xf32>
    %627 = arith.mulf %611, %619 : vector<8x32xf32>
    %628 = arith.addf %626, %627 : vector<8x32xf32>
    %629 = math.tanh %628 : vector<8x32xf32>
    %630 = arith.mulf %625, %629 : vector<8x32xf32>
    %631 = tpu.concatenate %630, %602 in 1 : vector<8x32xf32>, vector<8x32xf32> -> vector<8x64xf32>
    %cst_275 = arith.constant dense<0.000000e+00> : vector<8x128xf32>
    %632 = tpu.matmul %631, %265, %cst_275 {dimension_numbers = #tpu.dot_dimension_numbers<[1], [0], [0], [1], [0, 0, 1, 1], [], []>} : vector<8x64xf32>, vector<64x128xf32>, vector<8x128xf32> -> vector<8x128xf32>
    %633 = arith.addf %632, %266 : vector<8x128xf32>
    %634 = vector.extract_strided_slice %633 {offsets = [0, 0], sizes = [8, 32], strides = [1, 1]} : vector<8x128xf32> to vector<8x32xf32>
    %635 = arith.negf %634 : vector<8x32xf32>
    %636 = math.exp %635 : vector<8x32xf32>
    %cst_276 = arith.constant 1.000000e+00 : f32
    %637 = vector.broadcast %cst_276 : f32 to vector<8x32xf32>
    %638 = arith.addf %637, %636 : vector<8x32xf32>
    %639 = arith.divf %637, %638 : vector<8x32xf32>
    %640 = vector.extract_strided_slice %633 {offsets = [0, 32], sizes = [8, 32], strides = [1, 1]} : vector<8x128xf32> to vector<8x32xf32>
    %641 = arith.negf %640 : vector<8x32xf32>
    %642 = math.exp %641 : vector<8x32xf32>
    %cst_277 = arith.constant 1.000000e+00 : f32
    %643 = vector.broadcast %cst_277 : f32 to vector<8x32xf32>
    %644 = arith.addf %643, %642 : vector<8x32xf32>
    %645 = arith.divf %643, %644 : vector<8x32xf32>
    %646 = vector.extract_strided_slice %633 {offsets = [0, 64], sizes = [8, 32], strides = [1, 1]} : vector<8x128xf32> to vector<8x32xf32>
    %647 = math.tanh %646 : vector<8x32xf32>
    %648 = vector.extract_strided_slice %633 {offsets = [0, 96], sizes = [8, 32], strides = [1, 1]} : vector<8x128xf32> to vector<8x32xf32>
    %649 = arith.negf %648 : vector<8x32xf32>
    %650 = math.exp %649 : vector<8x32xf32>
    %cst_278 = arith.constant 1.000000e+00 : f32
    %651 = vector.broadcast %cst_278 : f32 to vector<8x32xf32>
    %652 = arith.addf %651, %650 : vector<8x32xf32>
    %653 = arith.divf %651, %652 : vector<8x32xf32>
    %654 = arith.mulf %645, %600 : vector<8x32xf32>
    %655 = arith.mulf %639, %647 : vector<8x32xf32>
    %656 = arith.addf %654, %655 : vector<8x32xf32>
    %657 = math.tanh %656 : vector<8x32xf32>
    %658 = arith.mulf %653, %657 : vector<8x32xf32>
    %c56_279 = arith.constant 56 : index
    %c0_280 = arith.constant 0 : index
    %659 = vector.load %arg10[%c56_279, %c0_280] : memref<64x128xf32, #tpu.memory_space<vmem>>, vector<8x128xf32>
    %cst_281 = arith.constant dense<0.000000e+00> : vector<8x128xf32>
    %660 = tpu.matmul %630, %264, %cst_281 {dimension_numbers = #tpu.dot_dimension_numbers<[1], [0], [0], [1], [0, 0, 1, 1], [], []>} : vector<8x32xf32>, vector<32x128xf32>, vector<8x128xf32> -> vector<8x128xf32>
    %661 = arith.addf %659, %660 : vector<8x128xf32>
    %662 = vector.extract_strided_slice %661 {offsets = [0, 0], sizes = [8, 32], strides = [1, 1]} : vector<8x128xf32> to vector<8x32xf32>
    %663 = arith.negf %662 : vector<8x32xf32>
    %664 = math.exp %663 : vector<8x32xf32>
    %cst_282 = arith.constant 1.000000e+00 : f32
    %665 = vector.broadcast %cst_282 : f32 to vector<8x32xf32>
    %666 = arith.addf %665, %664 : vector<8x32xf32>
    %667 = arith.divf %665, %666 : vector<8x32xf32>
    %668 = vector.extract_strided_slice %661 {offsets = [0, 32], sizes = [8, 32], strides = [1, 1]} : vector<8x128xf32> to vector<8x32xf32>
    %669 = arith.negf %668 : vector<8x32xf32>
    %670 = math.exp %669 : vector<8x32xf32>
    %cst_283 = arith.constant 1.000000e+00 : f32
    %671 = vector.broadcast %cst_283 : f32 to vector<8x32xf32>
    %672 = arith.addf %671, %670 : vector<8x32xf32>
    %673 = arith.divf %671, %672 : vector<8x32xf32>
    %674 = vector.extract_strided_slice %661 {offsets = [0, 64], sizes = [8, 32], strides = [1, 1]} : vector<8x128xf32> to vector<8x32xf32>
    %675 = math.tanh %674 : vector<8x32xf32>
    %676 = vector.extract_strided_slice %661 {offsets = [0, 96], sizes = [8, 32], strides = [1, 1]} : vector<8x128xf32> to vector<8x32xf32>
    %677 = arith.negf %676 : vector<8x32xf32>
    %678 = math.exp %677 : vector<8x32xf32>
    %cst_284 = arith.constant 1.000000e+00 : f32
    %679 = vector.broadcast %cst_284 : f32 to vector<8x32xf32>
    %680 = arith.addf %679, %678 : vector<8x32xf32>
    %681 = arith.divf %679, %680 : vector<8x32xf32>
    %682 = arith.mulf %673, %628 : vector<8x32xf32>
    %683 = arith.mulf %667, %675 : vector<8x32xf32>
    %684 = arith.addf %682, %683 : vector<8x32xf32>
    %685 = math.tanh %684 : vector<8x32xf32>
    %686 = arith.mulf %681, %685 : vector<8x32xf32>
    %687 = tpu.concatenate %686, %658 in 1 : vector<8x32xf32>, vector<8x32xf32> -> vector<8x64xf32>
    %cst_285 = arith.constant dense<0.000000e+00> : vector<8x128xf32>
    %688 = tpu.matmul %687, %265, %cst_285 {dimension_numbers = #tpu.dot_dimension_numbers<[1], [0], [0], [1], [0, 0, 1, 1], [], []>} : vector<8x64xf32>, vector<64x128xf32>, vector<8x128xf32> -> vector<8x128xf32>
    %689 = arith.addf %688, %266 : vector<8x128xf32>
    %690 = vector.extract_strided_slice %689 {offsets = [0, 0], sizes = [8, 32], strides = [1, 1]} : vector<8x128xf32> to vector<8x32xf32>
    %691 = arith.negf %690 : vector<8x32xf32>
    %692 = math.exp %691 : vector<8x32xf32>
    %cst_286 = arith.constant 1.000000e+00 : f32
    %693 = vector.broadcast %cst_286 : f32 to vector<8x32xf32>
    %694 = arith.addf %693, %692 : vector<8x32xf32>
    %695 = arith.divf %693, %694 : vector<8x32xf32>
    %696 = vector.extract_strided_slice %689 {offsets = [0, 32], sizes = [8, 32], strides = [1, 1]} : vector<8x128xf32> to vector<8x32xf32>
    %697 = arith.negf %696 : vector<8x32xf32>
    %698 = math.exp %697 : vector<8x32xf32>
    %cst_287 = arith.constant 1.000000e+00 : f32
    %699 = vector.broadcast %cst_287 : f32 to vector<8x32xf32>
    %700 = arith.addf %699, %698 : vector<8x32xf32>
    %701 = arith.divf %699, %700 : vector<8x32xf32>
    %702 = vector.extract_strided_slice %689 {offsets = [0, 64], sizes = [8, 32], strides = [1, 1]} : vector<8x128xf32> to vector<8x32xf32>
    %703 = math.tanh %702 : vector<8x32xf32>
    %704 = vector.extract_strided_slice %689 {offsets = [0, 96], sizes = [8, 32], strides = [1, 1]} : vector<8x128xf32> to vector<8x32xf32>
    %705 = arith.negf %704 : vector<8x32xf32>
    %706 = math.exp %705 : vector<8x32xf32>
    %cst_288 = arith.constant 1.000000e+00 : f32
    %707 = vector.broadcast %cst_288 : f32 to vector<8x32xf32>
    %708 = arith.addf %707, %706 : vector<8x32xf32>
    %709 = arith.divf %707, %708 : vector<8x32xf32>
    %710 = arith.mulf %701, %656 : vector<8x32xf32>
    %711 = arith.mulf %695, %703 : vector<8x32xf32>
    %712 = arith.addf %710, %711 : vector<8x32xf32>
    %713 = math.tanh %712 : vector<8x32xf32>
    %714 = arith.mulf %709, %713 : vector<8x32xf32>
    %c0_289 = arith.constant 0 : index
    %c0_290 = arith.constant 0 : index
    %c0_291 = arith.constant 0 : index
    %715 = vector.load %arg8[%c0_289, %c0_290, %c0_291] : memref<2x8x32xf32, #tpu.memory_space<vmem>>, vector<1x8x32xf32>
    %716 = vector.shape_cast %715 : vector<1x8x32xf32> to vector<8x32xf32>
    %717 = vector.shape_cast %686 : vector<8x32xf32> to vector<1x8x32xf32>
    tpu.vector_store %arg8[%c0_289, %c0_290, %c0_291], %717 {strides = array<i32>} : memref<2x8x32xf32, #tpu.memory_space<vmem>>, vector<1x8x32xf32>,
    %c0_292 = arith.constant 0 : index
    %c0_293 = arith.constant 0 : index
    %c0_294 = arith.constant 0 : index
    %718 = vector.load %arg9[%c0_292, %c0_293, %c0_294] : memref<2x8x32xf32, #tpu.memory_space<vmem>>, vector<1x8x32xf32>
    %719 = vector.shape_cast %718 : vector<1x8x32xf32> to vector<8x32xf32>
    %720 = vector.shape_cast %684 : vector<8x32xf32> to vector<1x8x32xf32>
    tpu.vector_store %arg9[%c0_292, %c0_293, %c0_294], %720 {strides = array<i32>} : memref<2x8x32xf32, #tpu.memory_space<vmem>>, vector<1x8x32xf32>,
    %c1_295 = arith.constant 1 : index
    %c0_296 = arith.constant 0 : index
    %c0_297 = arith.constant 0 : index
    %721 = vector.load %arg8[%c1_295, %c0_296, %c0_297] : memref<2x8x32xf32, #tpu.memory_space<vmem>>, vector<1x8x32xf32>
    %722 = vector.shape_cast %721 : vector<1x8x32xf32> to vector<8x32xf32>
    %723 = vector.shape_cast %714 : vector<8x32xf32> to vector<1x8x32xf32>
    tpu.vector_store %arg8[%c1_295, %c0_296, %c0_297], %723 {strides = array<i32>} : memref<2x8x32xf32, #tpu.memory_space<vmem>>, vector<1x8x32xf32>,
    %c1_298 = arith.constant 1 : index
    %c0_299 = arith.constant 0 : index
    %c0_300 = arith.constant 0 : index
    %724 = vector.load %arg9[%c1_298, %c0_299, %c0_300] : memref<2x8x32xf32, #tpu.memory_space<vmem>>, vector<1x8x32xf32>
    %725 = vector.shape_cast %724 : vector<1x8x32xf32> to vector<8x32xf32>
    %726 = vector.shape_cast %712 : vector<8x32xf32> to vector<1x8x32xf32>
    tpu.vector_store %arg9[%c1_298, %c0_299, %c0_300], %726 {strides = array<i32>} : memref<2x8x32xf32, #tpu.memory_space<vmem>>, vector<1x8x32xf32>,
    return
  }
  func.func @transform_0(%arg0: i32, %arg1: memref<64xi32, #tpu.memory_space<smem>>) -> (i32, i32) {
    %c0_i32 = arith.constant 0 : i32
    %c0_i32_0 = arith.constant 0 : i32
    %c0_i32_1 = arith.constant 0 : i32
    return %c0_i32, %c0_i32_0 : i32, i32
  }
  func.func @transform_1(%arg0: i32, %arg1: memref<64xi32, #tpu.memory_space<smem>>) -> (i32, i32) {
    %c0_i32 = arith.constant 0 : i32
    %c0_i32_0 = arith.constant 0 : i32
    %c0_i32_1 = arith.constant 0 : i32
    return %c0_i32, %c0_i32_0 : i32, i32
  }
  func.func @transform_2(%arg0: i32, %arg1: memref<64xi32, #tpu.memory_space<smem>>) -> (i32, i32) {
    %c0_i32 = arith.constant 0 : i32
    %c0_i32_0 = arith.constant 0 : i32
    %c0_i32_1 = arith.constant 0 : i32
    return %c0_i32, %c0_i32_0 : i32, i32
  }
  func.func @transform_3(%arg0: i32, %arg1: memref<64xi32, #tpu.memory_space<smem>>) -> (i32, i32) {
    %c0_i32 = arith.constant 0 : i32
    %c0_i32_0 = arith.constant 0 : i32
    %c0_i32_1 = arith.constant 0 : i32
    return %c0_i32, %c0_i32_0 : i32, i32
  }
  func.func @transform_4(%arg0: i32, %arg1: memref<64xi32, #tpu.memory_space<smem>>) -> (i32, i32, i32) {
    %c0_i32 = arith.constant 0 : i32
    %c0_i32_0 = arith.constant 0 : i32
    %c0_i32_1 = arith.constant 0 : i32
    %c0_i32_2 = arith.constant 0 : i32
    return %c0_i32, %c0_i32_0, %c0_i32_1 : i32, i32, i32
  }
  func.func @transform_5(%arg0: i32, %arg1: memref<64xi32, #tpu.memory_space<smem>>) -> (i32, i32, i32) {
    %c0_i32 = arith.constant 0 : i32
    %c0_i32_0 = arith.constant 0 : i32
    %c0_i32_1 = arith.constant 0 : i32
    %c0_i32_2 = arith.constant 0 : i32
    return %c0_i32, %c0_i32_0, %c0_i32_1 : i32, i32, i32
  }
  func.func @transform_6(%arg0: i32, %arg1: memref<64xi32, #tpu.memory_space<smem>>) -> (i32, i32, i32) {
    %c0_i32 = arith.constant 0 : i32
    %c0_i32_0 = arith.constant 0 : i32
    %c0_i32_1 = arith.constant 0 : i32
    %c0_i32_2 = arith.constant 0 : i32
    return %c0_i32, %c0_i32_0, %c0_i32_1 : i32, i32, i32
  }
  func.func @transform_7(%arg0: i32, %arg1: memref<64xi32, #tpu.memory_space<smem>>) -> (i32, i32, i32) {
    %c0_i32 = arith.constant 0 : i32
    %c0_i32_0 = arith.constant 0 : i32
    %c0_i32_1 = arith.constant 0 : i32
    %c0_i32_2 = arith.constant 0 : i32
    return %c0_i32, %c0_i32_0, %c0_i32_1 : i32, i32, i32
  }
}

</mosaic_0001>

<llo_original>
// kernel: rnn_sentiment_forward.1
$region0: #{rnn_sentiment_forward.1}
  #allocation0 [shape = 'u32[]', space=smem, size = 0x4, offset = 0x4, fixed_abs, tag = 'smem constant byte address 0x4 - core index']
  #allocation1 [shape = 'u32[144,128]{1,0:T(1,128)}', space=vmem, size = 0x12000, scoped, tag = 'internal scratch']
  #allocation2 [shape = 'f32[64,128]{1,0:T(8,128)}', space=vmem, size = 0x8000, scoped, tag = 'scratch operand']
  #allocation3 [shape = 's32[1]{0}', space=sflag, size = 0x4, scoped, tag = 'scoped memory for rnn_sentiment_forward.1']
  #allocation4 [shape = 'u8[512]{0}', space=smem, size = 0x200, scoped, tag = 'prefetched SMEM operand 0']
  %s0 = inlined_call_operand.vmem [shape: s32[64], index: 0, kind: input, shape index: {}]
  %s1 = inlined_call_operand.hbm [shape: f32[56,128], index: 1, kind: input, shape index: {}]
  %s2 = inlined_call_operand.hbm [shape: f32[32,128], index: 2, kind: input, shape index: {}]
  %s3 = inlined_call_operand.hbm [shape: f32[64,128], index: 3, kind: input, shape index: {}]
  %s4 = inlined_call_operand.vmem [shape: f32[8,128], index: 4, kind: input, shape index: {}]
  %s5 = inlined_call_operand.vmem [shape: f32[2,8,32], index: 5, kind: input, shape index: {}]
  %s6 = inlined_call_operand.hbm [shape: f32[2,8,32], index: 6, kind: input, shape index: {}]
  %s7 = inlined_call_operand.vmem [shape: f32[2,8,32], index: 7, kind: output, shape index: {0}]
  %s8 = inlined_call_operand.hbm [shape: f32[2,8,32], index: 8, kind: output, shape index: {1}]
  %9 = xla_tuple %s7, %s8
  %s10 = sld [smem:[#allocation0]]
  $region58: #{rnn_sentiment_forward.1} parent=0
    _
  %s12 = ssub.s32 1, %s10
  %s13 = scalar_select 0, %s12, %s10
  %s14 = sshll.u32 %s0, 4
  %s15 = int_to_ptr.vmem [resolvable:$true] %s14
  %17 = dma.vmem_to_smem %s15, 16, [#allocation4], [#allocation3]
  %18 = dma.done [#allocation3], 16
  %19 = sfence
  $region1: #{rnn_sentiment_forward.1} parent=0
    #allocation5 [shape = 'u8[28672]{0}', space=vmem, size = 0x7000, scoped, tag = 'input window, operand 1, single buffered']
    #allocation6 [shape = 's32[1]{0}', space=sflag, size = 0x4, scoped, tag = 'scoped memory for rnn_sentiment_forward.1']
    #allocation7 [shape = 's32[1]{0}', space=sflag, size = 0x4, scoped, tag = 'scoped memory for rnn_sentiment_forward.1']
    #allocation8 [shape = 'u8[16384]{0}', space=vmem, size = 0x4000, scoped, tag = 'input window, operand 2, single buffered']
    #allocation9 [shape = 's32[1]{0}', space=sflag, size = 0x4, scoped, tag = 'scoped memory for rnn_sentiment_forward.1']
    #allocation10 [shape = 'u8[32768]{0}', space=vmem, size = 0x8000, scoped, tag = 'input window, operand 3, single buffered']
    #allocation11 [shape = 'u8[8192]{0}', space=vmem, size = 0x2000, scoped, tag = 'input window, operand 6, single buffered']
    #allocation12 [shape = 's32[1]{0}', space=sflag, size = 0x4, scoped, tag = 'scoped memory for rnn_sentiment_forward.1']
    #allocation13 [shape = 'u8[8192]{0}', space=vmem, size = 0x2000, scoped, tag = 'output window, operand 1, single buffered']
    %20 = vsyncpa [#allocation6], 0
    %21 = vsyncpa [#allocation9], 0
    %22 = vsyncpa [#allocation12], 0
    %23 = vsyncpa [#allocation7], 0
    // Predicated region
    $region2: #{rnn_sentiment_forward.1} parent=1 // pred_check
      _
    $region3: #{rnn_sentiment_forward.1} parent=1 // pred_check_branch
      %25 = sbr.rel (0) target = $region5
    $region4: #{rnn_sentiment_forward.1} parent=1 // pred_region
      %s27 = ssub.s32 896, 896
      %28 = vsyncadd [#allocation6], %s27
      %s29 = sshll.u32 [#allocation5], 4
      %s30 = int_to_ptr.vmem [resolvable:$true] %s29
      %35 = dma.hbm_to_vmem [thread:$0]  %s1, 896, %s30, [#allocation6], 128, 128, 8
    $region5: #{rnn_sentiment_forward.1} parent=1 // pred_fallthru
      _
    // Predicated region
    $region6: #{rnn_sentiment_forward.1} parent=1 // pred_check
      _
    $region7: #{rnn_sentiment_forward.1} parent=1 // pred_check_branch
      %37 = sbr.rel (0) target = $region9
    $region8: #{rnn_sentiment_forward.1} parent=1 // pred_region
      %s39 = ssub.s32 512, 512
      %40 = vsyncadd [#allocation9], %s39
      %s41 = sshll.u32 [#allocation8], 4
      %s42 = int_to_ptr.vmem [resolvable:$true] %s41
      %47 = dma.hbm_to_vmem [thread:$0]  %s2, 512, %s42, [#allocation9], 128, 128, 8
    $region9: #{rnn_sentiment_forward.1} parent=1 // pred_fallthru
      _
    // Predicated region
    $region10: #{rnn_sentiment_forward.1} parent=1 // pred_check
      _
    $region11: #{rnn_sentiment_forward.1} parent=1 // pred_check_branch
      %49 = sbr.rel (0) target = $region13
    $region12: #{rnn_sentiment_forward.1} parent=1 // pred_region
      %s51 = ssub.s32 1024, 1024
      %52 = vsyncadd [#allocation9], %s51
      %s53 = sshll.u32 [#allocation10], 4
      %s54 = int_to_ptr.vmem [resolvable:$true] %s53
      %59 = dma.hbm_to_vmem [thread:$0]  %s3, 1024, %s54, [#allocation9], 128, 128, 8
    $region13: #{rnn_sentiment_forward.1} parent=1 // pred_fallthru
      _
    // Predicated region
    $region14: #{rnn_sentiment_forward.1} parent=1 // pred_check
      _
    $region15: #{rnn_sentiment_forward.1} parent=1 // pred_check_branch
      %61 = sbr.rel (0) target = $region17
    $region16: #{rnn_sentiment_forward.1} parent=1 // pred_region
      _
    $region17: #{rnn_sentiment_forward.1} parent=1 // pred_fallthru
      _
    // Predicated region
    $region18: #{rnn_sentiment_forward.1} parent=1 // pred_check
      _
    $region19: #{rnn_sentiment_forward.1} parent=1 // pred_check_branch
      %63 = sbr.rel (0) target = $region21
    $region20: #{rnn_sentiment_forward.1} parent=1 // pred_region
      _
    $region21: #{rnn_sentiment_forward.1} parent=1 // pred_fallthru
      _
    // Predicated region
    $region22: #{rnn_sentiment_forward.1} parent=1 // pred_check
      _
    $region23: #{rnn_sentiment_forward.1} parent=1 // pred_check_branch
      %65 = sbr.rel (0) target = $region25
    $region24: #{rnn_sentiment_forward.1} parent=1 // pred_region
      %s67 = ssub.s32 256, 256
      %68 = vsyncadd [#allocation12], %s67
      %s69 = sshll.u32 [#allocation11], 4
      %s70 = int_to_ptr.vmem [resolvable:$true] %s69
      %75 = dma.hbm_to_vmem [thread:$0]  %s6, 256, %s70, [#allocation12], 128, 128, 8
    $region25: #{rnn_sentiment_forward.1} parent=1 // pred_fallthru
      _
    // Predicated region
    $region26: #{rnn_sentiment_forward.1} parent=1 // pred_check
      _
    $region27: #{rnn_sentiment_forward.1} parent=1 // pred_check_branch
      %77 = sbr.rel (0) target = $region29
    $region28: #{rnn_sentiment_forward.1} parent=1 // pred_region
      %78 = dma.done [#allocation6], 896
    $region29: #{rnn_sentiment_forward.1} parent=1 // pred_fallthru
      _
    // Predicated region
    $region30: #{rnn_sentiment_forward.1} parent=1 // pred_check
      _
    $region31: #{rnn_sentiment_forward.1} parent=1 // pred_check_branch
      %80 = sbr.rel (0) target = $region33
    $region32: #{rnn_sentiment_forward.1} parent=1 // pred_region
      %81 = dma.done [#allocation9], 512
    $region33: #{rnn_sentiment_forward.1} parent=1 // pred_fallthru
      _
    // Predicated region
    $region34: #{rnn_sentiment_forward.1} parent=1 // pred_check
      _
    $region35: #{rnn_sentiment_forward.1} parent=1 // pred_check_branch
      %83 = sbr.rel (0) target = $region37
    $region36: #{rnn_sentiment_forward.1} parent=1 // pred_region
      %84 = dma.done [#allocation9], 1024
    $region37: #{rnn_sentiment_forward.1} parent=1 // pred_fallthru
      _
    // Predicated region
    $region38: #{rnn_sentiment_forward.1} parent=1 // pred_check
      _
    $region39: #{rnn_sentiment_forward.1} parent=1 // pred_check_branch
      %86 = sbr.rel (0) target = $region41
    $region40: #{rnn_sentiment_forward.1} parent=1 // pred_region
      %87 = dma.done [#allocation12], 256
    $region41: #{rnn_sentiment_forward.1} parent=1 // pred_fallthru
      _
    %s88 = sld [smem:[#allocation4]]
    %s89 = scalar_lea.vmem [#allocation5], %s88
    %v90 = vld [vmem:[%s89] sm:$0x1]
    %91 = vst [vmem:[#allocation2] sm:$0x1] %v90
    %s92 = sld [smem:[#allocation4 + $0x8]]
    %s93 = scalar_lea.vmem [#allocation5], %s92
    %v94 = vld [vmem:[%s93] sm:$0x1]
    %95 = vst [vmem:[#allocation2 + $0x1] sm:$0x1] %v94
    %s96 = sld [smem:[#allocation4 + $0x10]]
    %s97 = scalar_lea.vmem [#allocation5], %s96
    %v98 = vld [vmem:[%s97] sm:$0x1]
    %99 = vst [vmem:[#allocation2 + $0x2] sm:$0x1] %v98
    %s100 = sld [smem:[#allocation4 + $0x18]]
    %s101 = scalar_lea.vmem [#allocation5], %s100
    %v102 = vld [vmem:[%s101] sm:$0x1]
    %103 = vst [vmem:[#allocation2 + $0x3] sm:$0x1] %v102
    %s104 = sld [smem:[#allocation4 + $0x20]]
    %s105 = scalar_lea.vmem [#allocation5], %s104
    %v106 = vld [vmem:[%s105] sm:$0x1]
    %107 = vst [vmem:[#allocation2 + $0x4] sm:$0x1] %v106
    %s108 = sld [smem:[#allocation4 + $0x28]]
    %s109 = scalar_lea.vmem [#allocation5], %s108
    %v110 = vld [vmem:[%s109] sm:$0x1]
    %111 = vst [vmem:[#allocation2 + $0x5] sm:$0x1] %v110
    %s112 = sld [smem:[#allocation4 + $0x30]]
    %s113 = scalar_lea.vmem [#allocation5], %s112
    %v114 = vld [vmem:[%s113] sm:$0x1]
    %115 = vst [vmem:[#allocation2 + $0x6] sm:$0x1] %v114
    %s116 = sld [smem:[#allocation4 + $0x38]]
    %s117 = scalar_lea.vmem [#allocation5], %s116
    %v118 = vld [vmem:[%s117] sm:$0x1]
    %119 = vst [vmem:[#allocation2 + $0x7] sm:$0x1] %v118
    %s120 = sld [smem:[#allocation4 + $0x1]]
    %s121 = scalar_lea.vmem [#allocation5], %s120
    %v122 = vld [vmem:[%s121] sm:$0x1]
    %123 = vst [vmem:[#allocation2 + $0x8] sm:$0x1] %v122
    %s124 = sld [smem:[#allocation4 + $0x9]]
    %s125 = scalar_lea.vmem [#allocation5], %s124
    %v126 = vld [vmem:[%s125] sm:$0x1]
    %127 = vst [vmem:[#allocation2 + $0x9] sm:$0x1] %v126
    %s128 = sld [smem:[#allocation4 + $0x11]]
    %s129 = scalar_lea.vmem [#allocation5], %s128
    %v130 = vld [vmem:[%s129] sm:$0x1]
    %131 = vst [vmem:[#allocation2 + $0xa] sm:$0x1] %v130
    %s132 = sld [smem:[#allocation4 + $0x19]]
    %s133 = scalar_lea.vmem [#allocation5], %s132
    %v134 = vld [vmem:[%s133] sm:$0x1]
    %135 = vst [vmem:[#allocation2 + $0xb] sm:$0x1] %v134
    %s136 = sld [smem:[#allocation4 + $0x21]]
    %s137 = scalar_lea.vmem [#allocation5], %s136
    %v138 = vld [vmem:[%s137] sm:$0x1]
    %139 = vst [vmem:[#allocation2 + $0xc] sm:$0x1] %v138
    %s140 = sld [smem:[#allocation4 + $0x29]]
    %s141 = scalar_lea.vmem [#allocation5], %s140
    %v142 = vld [vmem:[%s141] sm:$0x1]
    %143 = vst [vmem:[#allocation2 + $0xd] sm:$0x1] %v142
    %s144 = sld [smem:[#allocation4 + $0x31]]
    %s145 = scalar_lea.vmem [#allocation5], %s144
    %v146 = vld [vmem:[%s145] sm:$0x1]
    %147 = vst [vmem:[#allocation2 + $0xe] sm:$0x1] %v146
    %s148 = sld [smem:[#allocation4 + $0x39]]
    %s149 = scalar_lea.vmem [#allocation5], %s148
    %v150 = vld [vmem:[%s149] sm:$0x1]
    %151 = vst [vmem:[#allocation2 + $0xf] sm:$0x1] %v150
    %s152 = sld [smem:[#allocation4 + $0x2]]
    %s153 = scalar_lea.vmem [#allocation5], %s152
    %v154 = vld [vmem:[%s153] sm:$0x1]
    %155 = vst [vmem:[#allocation2 + $0x10] sm:$0x1] %v154
    %s156 = sld [smem:[#allocation4 + $0xa]]
    %s157 = scalar_lea.vmem [#allocation5], %s156
    %v158 = vld [vmem:[%s157] sm:$0x1]
    %159 = vst [vmem:[#allocation2 + $0x11] sm:$0x1] %v158
    %s160 = sld [smem:[#allocation4 + $0x12]]
    %s161 = scalar_lea.vmem [#allocation5], %s160
    %v162 = vld [vmem:[%s161] sm:$0x1]
    %163 = vst [vmem:[#allocation2 + $0x12] sm:$0x1] %v162
    %s164 = sld [smem:[#allocation4 + $0x1a]]
    %s165 = scalar_lea.vmem [#allocation5], %s164
    %v166 = vld [vmem:[%s165] sm:$0x1]
    %167 = vst [vmem:[#allocation2 + $0x13] sm:$0x1] %v166
    %s168 = sld [smem:[#allocation4 + $0x22]]
    %s169 = scalar_lea.vmem [#allocation5], %s168
    %v170 = vld [vmem:[%s169] sm:$0x1]
    %171 = vst [vmem:[#allocation2 + $0x14] sm:$0x1] %v170
    %s172 = sld [smem:[#allocation4 + $0x2a]]
    %s173 = scalar_lea.vmem [#allocation5], %s172
    %v174 = vld [vmem:[%s173] sm:$0x1]
    %175 = vst [vmem:[#allocation2 + $0x15] sm:$0x1] %v174
    %s176 = sld [smem:[#allocation4 + $0x32]]
    %s177 = scalar_lea.vmem [#allocation5], %s176
    %v178 = vld [vmem:[%s177] sm:$0x1]
    %179 = vst [vmem:[#allocation2 + $0x16] sm:$0x1] %v178
    %s180 = sld [smem:[#allocation4 + $0x3a]]
    %s181 = scalar_lea.vmem [#allocation5], %s180
    %v182 = vld [vmem:[%s181] sm:$0x1]
    %183 = vst [vmem:[#allocation2 + $0x17] sm:$0x1] %v182
    %s184 = sld [smem:[#allocation4 + $0x3]]
    %s185 = scalar_lea.vmem [#allocation5], %s184
    %v186 = vld [vmem:[%s185] sm:$0x1]
    %187 = vst [vmem:[#allocation2 + $0x18] sm:$0x1] %v186
    %s188 = sld [smem:[#allocation4 + $0xb]]
    %s189 = scalar_lea.vmem [#allocation5], %s188
    %v190 = vld [vmem:[%s189] sm:$0x1]
    %191 = vst [vmem:[#allocation2 + $0x19] sm:$0x1] %v190
    %s192 = sld [smem:[#allocation4 + $0x13]]
    %s193 = scalar_lea.vmem [#allocation5], %s192
    %v194 = vld [vmem:[%s193] sm:$0x1]
    %195 = vst [vmem:[#allocation2 + $0x1a] sm:$0x1] %v194
    %s196 = sld [smem:[#allocation4 + $0x1b]]
    %s197 = scalar_lea.vmem [#allocation5], %s196
    %v198 = vld [vmem:[%s197] sm:$0x1]
    %199 = vst [vmem:[#allocation2 + $0x1b] sm:$0x1] %v198
    %s200 = sld [smem:[#allocation4 + $0x23]]
    %s201 = scalar_lea.vmem [#allocation5], %s200
    %v202 = vld [vmem:[%s201] sm:$0x1]
    %203 = vst [vmem:[#allocation2 + $0x1c] sm:$0x1] %v202
    %s204 = sld [smem:[#allocation4 + $0x2b]]
    %s205 = scalar_lea.vmem [#allocation5], %s204
    %v206 = vld [vmem:[%s205] sm:$0x1]
    %207 = vst [vmem:[#allocation2 + $0x1d] sm:$0x1] %v206
    %s208 = sld [smem:[#allocation4 + $0x33]]
    %s209 = scalar_lea.vmem [#allocation5], %s208
    %v210 = vld [vmem:[%s209] sm:$0x1]
    %211 = vst [vmem:[#allocation2 + $0x1e] sm:$0x1] %v210
    %s212 = sld [smem:[#allocation4 + $0x3b]]
    %s213 = scalar_lea.vmem [#allocation5], %s212
    %v214 = vld [vmem:[%s213] sm:$0x1]
    %215 = vst [vmem:[#allocation2 + $0x1f] sm:$0x1] %v214
    %s216 = sld [smem:[#allocation4 + $0x4]]
    %s217 = scalar_lea.vmem [#allocation5], %s216
    %v218 = vld [vmem:[%s217] sm:$0x1]
    %219 = vst [vmem:[#allocation2 + $0x20] sm:$0x1] %v218
    %s220 = sld [smem:[#allocation4 + $0xc]]
    %s221 = scalar_lea.vmem [#allocation5], %s220
    %v222 = vld [vmem:[%s221] sm:$0x1]
    %223 = vst [vmem:[#allocation2 + $0x21] sm:$0x1] %v222
    %s224 = sld [smem:[#allocation4 + $0x14]]
    %s225 = scalar_lea.vmem [#allocation5], %s224
    %v226 = vld [vmem:[%s225] sm:$0x1]
    %227 = vst [vmem:[#allocation2 + $0x22] sm:$0x1] %v226
    %s228 = sld [smem:[#allocation4 + $0x1c]]
    %s229 = scalar_lea.vmem [#allocation5], %s228
    %v230 = vld [vmem:[%s229] sm:$0x1]
    %231 = vst [vmem:[#allocation2 + $0x23] sm:$0x1] %v230
    %s232 = sld [smem:[#allocation4 + $0x24]]
    %s233 = scalar_lea.vmem [#allocation5], %s232
    %v234 = vld [vmem:[%s233] sm:$0x1]
    %235 = vst [vmem:[#allocation2 + $0x24] sm:$0x1] %v234
    %s236 = sld [smem:[#allocation4 + $0x2c]]
    %s237 = scalar_lea.vmem [#allocation5], %s236
    %v238 = vld [vmem:[%s237] sm:$0x1]
    %239 = vst [vmem:[#allocation2 + $0x25] sm:$0x1] %v238
    %s240 = sld [smem:[#allocation4 + $0x34]]
    %s241 = scalar_lea.vmem [#allocation5], %s240
    %v242 = vld [vmem:[%s241] sm:$0x1]
    %243 = vst [vmem:[#allocation2 + $0x26] sm:$0x1] %v242
    %s244 = sld [smem:[#allocation4 + $0x3c]]
    %s245 = scalar_lea.vmem [#allocation5], %s244
    %v246 = vld [vmem:[%s245] sm:$0x1]
    %247 = vst [vmem:[#allocation2 + $0x27] sm:$0x1] %v246
    %s248 = sld [smem:[#allocation4 + $0x5]]
    %s249 = scalar_lea.vmem [#allocation5], %s248
    %v250 = vld [vmem:[%s249] sm:$0x1]
    %251 = vst [vmem:[#allocation2 + $0x28] sm:$0x1] %v250
    %s252 = sld [smem:[#allocation4 + $0xd]]
    %s253 = scalar_lea.vmem [#allocation5], %s252
    %v254 = vld [vmem:[%s253] sm:$0x1]
    %255 = vst [vmem:[#allocation2 + $0x29] sm:$0x1] %v254
    %s256 = sld [smem:[#allocation4 + $0x15]]
    %s257 = scalar_lea.vmem [#allocation5], %s256
    %v258 = vld [vmem:[%s257] sm:$0x1]
    %259 = vst [vmem:[#allocation2 + $0x2a] sm:$0x1] %v258
    %s260 = sld [smem:[#allocation4 + $0x1d]]
    %s261 = scalar_lea.vmem [#allocation5], %s260
    %v262 = vld [vmem:[%s261] sm:$0x1]
    %263 = vst [vmem:[#allocation2 + $0x2b] sm:$0x1] %v262
    %s264 = sld [smem:[#allocation4 + $0x25]]
    %s265 = scalar_lea.vmem [#allocation5], %s264
    %v266 = vld [vmem:[%s265] sm:$0x1]
    %267 = vst [vmem:[#allocation2 + $0x2c] sm:$0x1] %v266
    %s268 = sld [smem:[#allocation4 + $0x2d]]
    %s269 = scalar_lea.vmem [#allocation5], %s268
    %v270 = vld [vmem:[%s269] sm:$0x1]
    %271 = vst [vmem:[#allocation2 + $0x2d] sm:$0x1] %v270
    %s272 = sld [smem:[#allocation4 + $0x35]]
    %s273 = scalar_lea.vmem [#allocation5], %s272
    %v274 = vld [vmem:[%s273] sm:$0x1]
    %275 = vst [vmem:[#allocation2 + $0x2e] sm:$0x1] %v274
    %s276 = sld [smem:[#allocation4 + $0x3d]]
    %s277 = scalar_lea.vmem [#allocation5], %s276
    %v278 = vld [vmem:[%s277] sm:$0x1]
    %279 = vst [vmem:[#allocation2 + $0x2f] sm:$0x1] %v278
    %s280 = sld [smem:[#allocation4 + $0x6]]
    %s281 = scalar_lea.vmem [#allocation5], %s280
    %v282 = vld [vmem:[%s281] sm:$0x1]
    %283 = vst [vmem:[#allocation2 + $0x30] sm:$0x1] %v282
    %s284 = sld [smem:[#allocation4 + $0xe]]
    %s285 = scalar_lea.vmem [#allocation5], %s284
    %v286 = vld [vmem:[%s285] sm:$0x1]
    %287 = vst [vmem:[#allocation2 + $0x31] sm:$0x1] %v286
    %s288 = sld [smem:[#allocation4 + $0x16]]
    %s289 = scalar_lea.vmem [#allocation5], %s288
    %v290 = vld [vmem:[%s289] sm:$0x1]
    %291 = vst [vmem:[#allocation2 + $0x32] sm:$0x1] %v290
    %s292 = sld [smem:[#allocation4 + $0x1e]]
    %s293 = scalar_lea.vmem [#allocation5], %s292
    %v294 = vld [vmem:[%s293] sm:$0x1]
    %295 = vst [vmem:[#allocation2 + $0x33] sm:$0x1] %v294
    %s296 = sld [smem:[#allocation4 + $0x26]]
    %s297 = scalar_lea.vmem [#allocation5], %s296
    %v298 = vld [vmem:[%s297] sm:$0x1]
    %299 = vst [vmem:[#allocation2 + $0x34] sm:$0x1] %v298
    %s300 = sld [smem:[#allocation4 + $0x2e]]
    %s301 = scalar_lea.vmem [#allocation5], %s300
    %v302 = vld [vmem:[%s301] sm:$0x1]
    %303 = vst [vmem:[#allocation2 + $0x35] sm:$0x1] %v302
    %s304 = sld [smem:[#allocation4 + $0x36]]
    %s305 = scalar_lea.vmem [#allocation5], %s304
    %v306 = vld [vmem:[%s305] sm:$0x1]
    %307 = vst [vmem:[#allocation2 + $0x36] sm:$0x1] %v306
    %s308 = sld [smem:[#allocation4 + $0x3e]]
    %s309 = scalar_lea.vmem [#allocation5], %s308
    %v310 = vld [vmem:[%s309] sm:$0x1]
    %311 = vst [vmem:[#allocation2 + $0x37] sm:$0x1] %v310
    %s312 = sld [smem:[#allocation4 + $0x7]]
    %s313 = scalar_lea.vmem [#allocation5], %s312
    %v314 = vld [vmem:[%s313] sm:$0x1]
    %315 = vst [vmem:[#allocation2 + $0x38] sm:$0x1] %v314
    %s316 = sld [smem:[#allocation4 + $0xf]]
    %s317 = scalar_lea.vmem [#allocation5], %s316
    %v318 = vld [vmem:[%s317] sm:$0x1]
    %319 = vst [vmem:[#allocation2 + $0x39] sm:$0x1] %v318
    %s320 = sld [smem:[#allocation4 + $0x17]]
    %s321 = scalar_lea.vmem [#allocation5], %s320
    %v322 = vld [vmem:[%s321] sm:$0x1]
    %323 = vst [vmem:[#allocation2 + $0x3a] sm:$0x1] %v322
    %s324 = sld [smem:[#allocation4 + $0x1f]]
    %s325 = scalar_lea.vmem [#allocation5], %s324
    %v326 = vld [vmem:[%s325] sm:$0x1]
    %327 = vst [vmem:[#allocation2 + $0x3b] sm:$0x1] %v326
    %s328 = sld [smem:[#allocation4 + $0x27]]
    %s329 = scalar_lea.vmem [#allocation5], %s328
    %v330 = vld [vmem:[%s329] sm:$0x1]
    %331 = vst [vmem:[#allocation2 + $0x3c] sm:$0x1] %v330
    %s332 = sld [smem:[#allocation4 + $0x2f]]
    %s333 = scalar_lea.vmem [#allocation5], %s332
    %v334 = vld [vmem:[%s333] sm:$0x1]
    %335 = vst [vmem:[#allocation2 + $0x3d] sm:$0x1] %v334
    %s336 = sld [smem:[#allocation4 + $0x37]]
    %s337 = scalar_lea.vmem [#allocation5], %s336
    %v338 = vld [vmem:[%s337] sm:$0x1]
    %339 = vst [vmem:[#allocation2 + $0x3e] sm:$0x1] %v338
    %s340 = sld [smem:[#allocation4 + $0x3f]]
    %s341 = scalar_lea.vmem [#allocation5], %s340
    %v342 = vld [vmem:[%s341] sm:$0x1]
    %343 = vst [vmem:[#allocation2 + $0x3f] sm:$0x1] %v342
    %v344 = vld [vmem:[%s5] sm:$0xff]
    %s345 = scalar_lea.vmem %s5, 8
    %v346 = vld [vmem:[%s345] sm:$0xff]
    %v347 = vld [vmem:[#allocation11] sm:$0xff]
    %s348 = scalar_lea.vmem [#allocation11], 8
    %v349 = vld [vmem:[%s348] sm:$0xff]
    %v350 = vld [vmem:[#allocation8] sm:$0xff]
    %v351 = vld [vmem:[#allocation8 + $0x8] sm:$0xff]
    %v352 = vld [vmem:[#allocation8 + $0x10] sm:$0xff]
    %v353 = vld [vmem:[#allocation8 + $0x18] sm:$0xff]
    %v354 = vld [vmem:[#allocation10] sm:$0xff]
    %v355 = vld [vmem:[#allocation10 + $0x8] sm:$0xff]
    %v356 = vld [vmem:[#allocation10 + $0x10] sm:$0xff]
    %v357 = vld [vmem:[#allocation10 + $0x18] sm:$0xff]
    %v358 = vld [vmem:[#allocation10 + $0x20] sm:$0xff]
    %v359 = vld [vmem:[#allocation10 + $0x28] sm:$0xff]
    %v360 = vld [vmem:[#allocation10 + $0x30] sm:$0xff]
    %v361 = vld [vmem:[#allocation10 + $0x38] sm:$0xff]
    %v362 = vld [vmem:[%s4] sm:$0xff]
    %v363 = vld [vmem:[#allocation2] sm:$0xff]
    %vm364 = vcmask 261120
    %v366 = vsel %vm364, %v344, 0
    %368 = vmatprep.subr.mxu0 0.0
    %369 = vmatpush1.msra.mxu0 %v350
    %370 = vmatprep.subr.mxu0 0.0
    %371 = vmatpush1.msra.mxu0 %v351
    %372 = vmatprep.subr.mxu0 0.0
    %373 = vmatpush1.msra.mxu0 %v352
    %374 = vmatprep.subr.mxu0 0.0
    %375 = vmatpush1.msra.mxu0 %v353
    %376 = vmatprep.subr.mxu0 0.0
    %377 = vmatpush1.msra.mxu0 0.0
    %378 = vmatprep.subr.mxu0 0.0
    %379 = vmatpush1.msra.mxu0 0.0
    %380 = vmatprep.subr.mxu0 0.0
    %381 = vmatpush1.msra.mxu0 0.0
    %382 = vmatprep.subr.mxu0 0.0
    %383 = vmatpush1.msra.mxu0 0.0
    %384 = vmatprep.subr.mxu0 0.0
    %385 = vmatpush1.msra.mxu0 0.0
    %386 = vmatprep.subr.mxu0 0.0
    %387 = vmatpush1.msra.mxu0 0.0
    %388 = vmatprep.subr.mxu0 0.0
    %389 = vmatpush1.msra.mxu0 0.0
    %390 = vmatprep.subr.mxu0 0.0
    %391 = vmatpush1.msra.mxu0 0.0
    %392 = vmatprep.subr.mxu0 0.0
    %393 = vmatpush1.msra.mxu0 0.0
    %394 = vmatprep.subr.mxu0 0.0
    %395 = vmatpush1.msra.mxu0 0.0
    %396 = vmatprep.subr.mxu0 0.0
    %397 = vmatpush1.msra.mxu0 0.0
    %398 = vmatprep.subr.mxu0 0.0
    %399 = vmatpush1.msra.mxu0 0.0
    %400 = vmatprep.subr.mxu0 0.0
    %401 = vmatpush1.msra.mxu0 0.0
    %402 = vmatprep.subr.mxu0 0.0
    %403 = vmatpush1.msra.mxu0 0.0
    %404 = vmatprep.subr.mxu0 0.0
    %405 = vmatpush1.msra.mxu0 0.0
    %406 = vmatprep.subr.mxu0 0.0
    %407 = vmatpush1.msra.mxu0 0.0
    %408 = vmatprep.subr.mxu0 0.0
    %409 = vmatpush1.msra.mxu0 0.0
    %410 = vmatprep.subr.mxu0 0.0
    %411 = vmatpush1.msra.mxu0 0.0
    %412 = vmatprep.subr.mxu0 0.0
    %413 = vmatpush1.msra.mxu0 0.0
    %414 = vmatprep.subr.mxu0 0.0
    %415 = vmatpush1.msra.mxu0 0.0
    %416 = vmatprep.subr.mxu0 0.0
    %417 = vmatpush1.msra.mxu0 0.0
    %418 = vmatprep.subr.mxu0 0.0
    %419 = vmatpush1.msra.mxu0 0.0
    %420 = vmatprep.subr.mxu0 0.0
    %421 = vmatpush1.msra.mxu0 0.0
    %422 = vmatprep.subr.mxu0 0.0
    %423 = vmatpush1.msra.mxu0 0.0
    %424 = vmatprep.subr.mxu0 0.0
    %425 = vmatpush1.msra.mxu0 0.0
    %426 = vmatprep.subr.mxu0 0.0
    %427 = vmatpush1.msra.mxu0 0.0
    %428 = vmatprep.subr.mxu0 0.0
    %429 = vmatpush1.msra.mxu0 0.0
    %430 = vmatprep.subr.mxu0 0.0
    %431 = vmatpush1.msra.mxu0 0.0
    %432 = vmatprep.mubr.f32.mxu0 0.0
    %433 = vmatmul.mubr.f32.gmra.mrb[0].mxu0 %v366
    %v434 = vpop.f32.mrb[0].mxu0
    %v435 = vadd.f32 0.0, %v434
    %v436 = vpop.f32.mrb[0].mxu0
    %437 = vdwg.mxu0
    %v438 = vadd.f32 %v363, %v435
    %v439 = vxor.u32 %v438, 2147483648
    %v440 = vmul.f32 %v439, 1.442695
    %v441 = vpow.pop %v440
    %v442 = vadd.f32 %v441, 1.0
    %v443 = vrcp.pop %v442
    %v444 = vmul.f32 1.0, %v443
    %v445 = vtanh.pop %v438
    %447 = vrot.lane.b32.xlu0 %v347, 32
    %v448 = vpop.permute.xlu0 %447
    %v450 = vmul.f32 %v444, %v448
    %452 = vrot.lane.b32.xlu0 %v445, 64
    %v453 = vpop.permute.xlu0 %452
    %v455 = vmul.f32 %v444, %v453
    %457 = vrot.lane.b32.xlu0 %v455, 32
    %v458 = vpop.permute.xlu0 %457
    %v460 = vadd.f32 %v450, %v458
    %v461 = vtanh.pop %v460
    %463 = vrot.lane.b32.xlu0 %v461, 64
    %v464 = vpop.permute.xlu0 %463
    %v466 = vmul.f32 %v444, %v464
    %468 = vrot.lane.b32.xlu0 %v466, 32
    %v469 = vpop.permute.xlu0 %468
    %472 = vrot.lane.b32.xlu0 %v346, 32
    %v473 = vpop.permute.xlu0 %472
    %v475 = vsel %vm364, %v469, %v473
    %vm476 = vcmask 523264
    %v478 = vsel %vm476, %v475, 0
    %480 = vmatprep.subr.mxu0 0.0
    %481 = vmatpush1.msra.mxu0 %v354
    %482 = vmatprep.subr.mxu0 0.0
    %483 = vmatpush1.msra.mxu0 %v355
    %484 = vmatprep.subr.mxu0 0.0
    %485 = vmatpush1.msra.mxu0 %v356
    %486 = vmatprep.subr.mxu0 0.0
    %487 = vmatpush1.msra.mxu0 %v357
    %488 = vmatprep.subr.mxu0 0.0
    %489 = vmatpush1.msra.mxu0 %v358
    %490 = vmatprep.subr.mxu0 0.0
    %491 = vmatpush1.msra.mxu0 %v359
    %492 = vmatprep.subr.mxu0 0.0
    %493 = vmatpush1.msra.mxu0 %v360
    %494 = vmatprep.subr.mxu0 0.0
    %495 = vmatpush1.msra.mxu0 %v361
    %496 = vmatprep.subr.mxu0 0.0
    %497 = vmatpush1.msra.mxu0 0.0
    %498 = vmatprep.subr.mxu0 0.0
    %499 = vmatpush1.msra.mxu0 0.0
    %500 = vmatprep.subr.mxu0 0.0
    %501 = vmatpush1.msra.mxu0 0.0
    %502 = vmatprep.subr.mxu0 0.0
    %503 = vmatpush1.msra.mxu0 0.0
    %504 = vmatprep.subr.mxu0 0.0
    %505 = vmatpush1.msra.mxu0 0.0
    %506 = vmatprep.subr.mxu0 0.0
    %507 = vmatpush1.msra.mxu0 0.0
    %508 = vmatprep.subr.mxu0 0.0
    %509 = vmatpush1.msra.mxu0 0.0
    %510 = vmatprep.subr.mxu0 0.0
    %511 = vmatpush1.msra.mxu0 0.0
    %512 = vmatprep.subr.mxu0 0.0
    %513 = vmatpush1.msra.mxu0 0.0
    %514 = vmatprep.subr.mxu0 0.0
    %515 = vmatpush1.msra.mxu0 0.0
    %516 = vmatprep.subr.mxu0 0.0
    %517 = vmatpush1.msra.mxu0 0.0
    %518 = vmatprep.subr.mxu0 0.0
    %519 = vmatpush1.msra.mxu0 0.0
    %520 = vmatprep.subr.mxu0 0.0
    %521 = vmatpush1.msra.mxu0 0.0
    %522 = vmatprep.subr.mxu0 0.0
    %523 = vmatpush1.msra.mxu0 0.0
    %524 = vmatprep.subr.mxu0 0.0
    %525 = vmatpush1.msra.mxu0 0.0
    %526 = vmatprep.subr.mxu0 0.0
    %527 = vmatpush1.msra.mxu0 0.0
    %528 = vmatprep.subr.mxu0 0.0
    %529 = vmatpush1.msra.mxu0 0.0
    %530 = vmatprep.subr.mxu0 0.0
    %531 = vmatpush1.msra.mxu0 0.0
    %532 = vmatprep.subr.mxu0 0.0
    %533 = vmatpush1.msra.mxu0 0.0
    %534 = vmatprep.subr.mxu0 0.0
    %535 = vmatpush1.msra.mxu0 0.0
    %536 = vmatprep.subr.mxu0 0.0
    %537 = vmatpush1.msra.mxu0 0.0
    %538 = vmatprep.subr.mxu0 0.0
    %539 = vmatpush1.msra.mxu0 0.0
    %540 = vmatprep.subr.mxu0 0.0
    %541 = vmatpush1.msra.mxu0 0.0
    %542 = vmatprep.subr.mxu0 0.0
    %543 = vmatpush1.msra.mxu0 0.0
    %544 = vmatprep.mubr.f32.mxu0 0.0
    %545 = vmatmul.mubr.f32.gmra.mrb[0].mxu0 %v478
    %v546 = vpop.f32.mrb[0].mxu0
    %v547 = vadd.f32 %v362, %v546
    %v548 = vpop.f32.mrb[0].mxu0
    %549 = vdwg.mxu0
    %v550 = vxor.u32 %v547, 2147483648
    %v551 = vmul.f32 %v550, 1.442695
    %v552 = vpow.pop %v551
    %v553 = vadd.f32 %v552, 1.0
    %v554 = vrcp.pop %v553
    %v555 = vmul.f32 1.0, %v554
    %v556 = vtanh.pop %v547
    %558 = vrot.lane.b32.xlu0 %v349, 32
    %v559 = vpop.permute.xlu0 %558
    %v561 = vmul.f32 %v555, %v559
    %563 = vrot.lane.b32.xlu0 %v556, 64
    %v564 = vpop.permute.xlu0 %563
    %v566 = vmul.f32 %v555, %v564
    %568 = vrot.lane.b32.xlu0 %v566, 32
    %v569 = vpop.permute.xlu0 %568
    %v571 = vadd.f32 %v561, %v569
    %v572 = vtanh.pop %v571
    %574 = vrot.lane.b32.xlu0 %v572, 64
    %v575 = vpop.permute.xlu0 %574
    %v577 = vmul.f32 %v555, %v575
    %v578 = vld [vmem:[#allocation2 + $0x8] sm:$0xff]
    %v579 = vsel %vm364, %v469, 0
    %581 = vmatprep.subr.mxu0 0.0
    %582 = vmatpush1.msra.mxu0 %v350
    %583 = vmatprep.subr.mxu0 0.0
    %584 = vmatpush1.msra.mxu0 %v351
    %585 = vmatprep.subr.mxu0 0.0
    %586 = vmatpush1.msra.mxu0 %v352
    %587 = vmatprep.subr.mxu0 0.0
    %588 = vmatpush1.msra.mxu0 %v353
    %589 = vmatprep.subr.mxu0 0.0
    %590 = vmatpush1.msra.mxu0 0.0
    %591 = vmatprep.subr.mxu0 0.0
    %592 = vmatpush1.msra.mxu0 0.0
    %593 = vmatprep.subr.mxu0 0.0
    %594 = vmatpush1.msra.mxu0 0.0
    %595 = vmatprep.subr.mxu0 0.0
    %596 = vmatpush1.msra.mxu0 0.0
    %597 = vmatprep.subr.mxu0 0.0
    %598 = vmatpush1.msra.mxu0 0.0
    %599 = vmatprep.subr.mxu0 0.0
    %600 = vmatpush1.msra.mxu0 0.0
    %601 = vmatprep.subr.mxu0 0.0
    %602 = vmatpush1.msra.mxu0 0.0
    %603 = vmatprep.subr.mxu0 0.0
    %604 = vmatpush1.msra.mxu0 0.0
    %605 = vmatprep.subr.mxu0 0.0
    %606 = vmatpush1.msra.mxu0 0.0
    %607 = vmatprep.subr.mxu0 0.0
    %608 = vmatpush1.msra.mxu0 0.0
    %609 = vmatprep.subr.mxu0 0.0
    %610 = vmatpush1.msra.mxu0 0.0
    %611 = vmatprep.subr.mxu0 0.0
    %612 = vmatpush1.msra.mxu0 0.0
    %613 = vmatprep.subr.mxu0 0.0
    %614 = vmatpush1.msra.mxu0 0.0
    %615 = vmatprep.subr.mxu0 0.0
    %616 = vmatpush1.msra.mxu0 0.0
    %617 = vmatprep.subr.mxu0 0.0
    %618 = vmatpush1.msra.mxu0 0.0
    %619 = vmatprep.subr.mxu0 0.0
    %620 = vmatpush1.msra.mxu0 0.0
    %621 = vmatprep.subr.mxu0 0.0
    %622 = vmatpush1.msra.mxu0 0.0
    %623 = vmatprep.subr.mxu0 0.0
    %624 = vmatpush1.msra.mxu0 0.0
    %625 = vmatprep.subr.mxu0 0.0
    %626 = vmatpush1.msra.mxu0 0.0
    %627 = vmatprep.subr.mxu0 0.0
    %628 = vmatpush1.msra.mxu0 0.0
    %629 = vmatprep.subr.mxu0 0.0
    %630 = vmatpush1.msra.mxu0 0.0
    %631 = vmatprep.subr.mxu0 0.0
    %632 = vmatpush1.msra.mxu0 0.0
    %633 = vmatprep.subr.mxu0 0.0
    %634 = vmatpush1.msra.mxu0 0.0
    %635 = vmatprep.subr.mxu0 0.0
    %636 = vmatpush1.msra.mxu0 0.0
    %637 = vmatprep.subr.mxu0 0.0
    %638 = vmatpush1.msra.mxu0 0.0
    %639 = vmatprep.subr.mxu0 0.0
    %640 = vmatpush1.msra.mxu0 0.0
    %641 = vmatprep.subr.mxu0 0.0
    %642 = vmatpush1.msra.mxu0 0.0
    %643 = vmatprep.subr.mxu0 0.0
    %644 = vmatpush1.msra.mxu0 0.0
    %645 = vmatprep.mubr.f32.mxu0 0.0
    %646 = vmatmul.mubr.f32.gmra.mrb[0].mxu0 %v579
    %v647 = vpop.f32.mrb[0].mxu0
    %v648 = vadd.f32 0.0, %v647
    %v649 = vpop.f32.mrb[0].mxu0
    %650 = vdwg.mxu0
    %v651 = vadd.f32 %v578, %v648
    %v652 = vxor.u32 %v651, 2147483648
    %v653 = vmul.f32 %v652, 1.442695
    %v654 = vpow.pop %v653
    %v655 = vadd.f32 %v654, 1.0
    %v656 = vrcp.pop %v655
    %v657 = vmul.f32 1.0, %v656
    %v658 = vtanh.pop %v651
    %v659 = vmul.f32 %v657, %v460
    %661 = vrot.lane.b32.xlu0 %v658, 64
    %v662 = vpop.permute.xlu0 %661
    %v664 = vmul.f32 %v657, %v662
    %666 = vrot.lane.b32.xlu0 %v664, 32
    %v667 = vpop.permute.xlu0 %666
    %v669 = vadd.f32 %v659, %v667
    %v670 = vtanh.pop %v669
    %672 = vrot.lane.b32.xlu0 %v670, 64
    %v673 = vpop.permute.xlu0 %672
    %v675 = vmul.f32 %v657, %v673
    %677 = vrot.lane.b32.xlu0 %v675, 32
    %v678 = vpop.permute.xlu0 %677
    %681 = vrot.lane.b32.xlu0 %v577, 64
    %v682 = vpop.permute.xlu0 %681
    %v684 = vsel %vm364, %v678, %v682
    %v686 = vsel %vm476, %v684, 0
    %688 = vmatprep.subr.mxu0 0.0
    %689 = vmatpush1.msra.mxu0 %v354
    %690 = vmatprep.subr.mxu0 0.0
    %691 = vmatpush1.msra.mxu0 %v355
    %692 = vmatprep.subr.mxu0 0.0
    %693 = vmatpush1.msra.mxu0 %v356
    %694 = vmatprep.subr.mxu0 0.0
    %695 = vmatpush1.msra.mxu0 %v357
    %696 = vmatprep.subr.mxu0 0.0
    %697 = vmatpush1.msra.mxu0 %v358
    %698 = vmatprep.subr.mxu0 0.0
    %699 = vmatpush1.msra.mxu0 %v359
    %700 = vmatprep.subr.mxu0 0.0
    %701 = vmatpush1.msra.mxu0 %v360
    %702 = vmatprep.subr.mxu0 0.0
    %703 = vmatpush1.msra.mxu0 %v361
    %704 = vmatprep.subr.mxu0 0.0
    %705 = vmatpush1.msra.mxu0 0.0
    %706 = vmatprep.subr.mxu0 0.0
    %707 = vmatpush1.msra.mxu0 0.0
    %708 = vmatprep.subr.mxu0 0.0
    %709 = vmatpush1.msra.mxu0 0.0
    %710 = vmatprep.subr.mxu0 0.0
    %711 = vmatpush1.msra.mxu0 0.0
    %712 = vmatprep.subr.mxu0 0.0
    %713 = vmatpush1.msra.mxu0 0.0
    %714 = vmatprep.subr.mxu0 0.0
    %715 = vmatpush1.msra.mxu0 0.0
    %716 = vmatprep.subr.mxu0 0.0
    %717 = vmatpush1.msra.mxu0 0.0
    %718 = vmatprep.subr.mxu0 0.0
    %719 = vmatpush1.msra.mxu0 0.0
    %720 = vmatprep.subr.mxu0 0.0
    %721 = vmatpush1.msra.mxu0 0.0
    %722 = vmatprep.subr.mxu0 0.0
    %723 = vmatpush1.msra.mxu0 0.0
    %724 = vmatprep.subr.mxu0 0.0
    %725 = vmatpush1.msra.mxu0 0.0
    %726 = vmatprep.subr.mxu0 0.0
    %727 = vmatpush1.msra.mxu0 0.0
    %728 = vmatprep.subr.mxu0 0.0
    %729 = vmatpush1.msra.mxu0 0.0
    %730 = vmatprep.subr.mxu0 0.0
    %731 = vmatpush1.msra.mxu0 0.0
    %732 = vmatprep.subr.mxu0 0.0
    %733 = vmatpush1.msra.mxu0 0.0
    %734 = vmatprep.subr.mxu0 0.0
    %735 = vmatpush1.msra.mxu0 0.0
    %736 = vmatprep.subr.mxu0 0.0
    %737 = vmatpush1.msra.mxu0 0.0
    %738 = vmatprep.subr.mxu0 0.0
    %739 = vmatpush1.msra.mxu0 0.0
    %740 = vmatprep.subr.mxu0 0.0
    %741 = vmatpush1.msra.mxu0 0.0
    %742 = vmatprep.subr.mxu0 0.0
    %743 = vmatpush1.msra.mxu0 0.0
    %744 = vmatprep.subr.mxu0 0.0
    %745 = vmatpush1.msra.mxu0 0.0
    %746 = vmatprep.subr.mxu0 0.0
    %747 = vmatpush1.msra.mxu0 0.0
    %748 = vmatprep.subr.mxu0 0.0
    %749 = vmatpush1.msra.mxu0 0.0
    %750 = vmatprep.subr.mxu0 0.0
    %751 = vmatpush1.msra.mxu0 0.0
    %752 = vmatprep.mubr.f32.mxu0 0.0
    %753 = vmatmul.mubr.f32.gmra.mrb[0].mxu0 %v686
    %v754 = vpop.f32.mrb[0].mxu0
    %v755 = vadd.f32 %v362, %v754
    %v756 = vpop.f32.mrb[0].mxu0
    %757 = vdwg.mxu0
    %v758 = vxor.u32 %v755, 2147483648
    %v759 = vmul.f32 %v758, 1.442695
    %v760 = vpow.pop %v759
    %v761 = vadd.f32 %v760, 1.0
    %v762 = vrcp.pop %v761
    %v763 = vmul.f32 1.0, %v762
    %v764 = vtanh.pop %v755
    %v765 = vmul.f32 %v763, %v571
    %767 = vrot.lane.b32.xlu0 %v764, 64
    %v768 = vpop.permute.xlu0 %767
    %v770 = vmul.f32 %v763, %v768
    %772 = vrot.lane.b32.xlu0 %v770, 32
    %v773 = vpop.permute.xlu0 %772
    %v775 = vadd.f32 %v765, %v773
    %v776 = vtanh.pop %v775
    %778 = vrot.lane.b32.xlu0 %v776, 64
    %v779 = vpop.permute.xlu0 %778
    %v781 = vmul.f32 %v763, %v779
    %v782 = vld [vmem:[#allocation2 + $0x10] sm:$0xff]
    %v783 = vsel %vm364, %v678, 0
    %785 = vmatprep.subr.mxu0 0.0
    %786 = vmatpush1.msra.mxu0 %v350
    %787 = vmatprep.subr.mxu0 0.0
    %788 = vmatpush1.msra.mxu0 %v351
    %789 = vmatprep.subr.mxu0 0.0
    %790 = vmatpush1.msra.mxu0 %v352
    %791 = vmatprep.subr.mxu0 0.0
    %792 = vmatpush1.msra.mxu0 %v353
    %793 = vmatprep.subr.mxu0 0.0
    %794 = vmatpush1.msra.mxu0 0.0
    %795 = vmatprep.subr.mxu0 0.0
    %796 = vmatpush1.msra.mxu0 0.0
    %797 = vmatprep.subr.mxu0 0.0
    %798 = vmatpush1.msra.mxu0 0.0
    %799 = vmatprep.subr.mxu0 0.0
    %800 = vmatpush1.msra.mxu0 0.0
    %801 = vmatprep.subr.mxu0 0.0
    %802 = vmatpush1.msra.mxu0 0.0
    %803 = vmatprep.subr.mxu0 0.0
    %804 = vmatpush1.msra.mxu0 0.0
    %805 = vmatprep.subr.mxu0 0.0
    %806 = vmatpush1.msra.mxu0 0.0
    %807 = vmatprep.subr.mxu0 0.0
    %808 = vmatpush1.msra.mxu0 0.0
    %809 = vmatprep.subr.mxu0 0.0
    %810 = vmatpush1.msra.mxu0 0.0
    %811 = vmatprep.subr.mxu0 0.0
    %812 = vmatpush1.msra.mxu0 0.0
    %813 = vmatprep.subr.mxu0 0.0
    %814 = vmatpush1.msra.mxu0 0.0
    %815 = vmatprep.subr.mxu0 0.0
    %816 = vmatpush1.msra.mxu0 0.0
    %817 = vmatprep.subr.mxu0 0.0
    %818 = vmatpush1.msra.mxu0 0.0
    %819 = vmatprep.subr.mxu0 0.0
    %820 = vmatpush1.msra.mxu0 0.0
    %821 = vmatprep.subr.mxu0 0.0
    %822 = vmatpush1.msra.mxu0 0.0
    %823 = vmatprep.subr.mxu0 0.0
    %824 = vmatpush1.msra.mxu0 0.0
    %825 = vmatprep.subr.mxu0 0.0
    %826 = vmatpush1.msra.mxu0 0.0
    %827 = vmatprep.subr.mxu0 0.0
    %828 = vmatpush1.msra.mxu0 0.0
    %829 = vmatprep.subr.mxu0 0.0
    %830 = vmatpush1.msra.mxu0 0.0
    %831 = vmatprep.subr.mxu0 0.0
    %832 = vmatpush1.msra.mxu0 0.0
    %833 = vmatprep.subr.mxu0 0.0
    %834 = vmatpush1.msra.mxu0 0.0
    %835 = vmatprep.subr.mxu0 0.0
    %836 = vmatpush1.msra.mxu0 0.0
    %837 = vmatprep.subr.mxu0 0.0
    %838 = vmatpush1.msra.mxu0 0.0
    %839 = vmatprep.subr.mxu0 0.0
    %840 = vmatpush1.msra.mxu0 0.0
    %841 = vmatprep.subr.mxu0 0.0
    %842 = vmatpush1.msra.mxu0 0.0
    %843 = vmatprep.subr.mxu0 0.0
    %844 = vmatpush1.msra.mxu0 0.0
    %845 = vmatprep.subr.mxu0 0.0
    %846 = vmatpush1.msra.mxu0 0.0
    %847 = vmatprep.subr.mxu0 0.0
    %848 = vmatpush1.msra.mxu0 0.0
    %849 = vmatprep.mubr.f32.mxu0 0.0
    %850 = vmatmul.mubr.f32.gmra.mrb[0].mxu0 %v783
    %v851 = vpop.f32.mrb[0].mxu0
    %v852 = vadd.f32 0.0, %v851
    %v853 = vpop.f32.mrb[0].mxu0
    %854 = vdwg.mxu0
    %v855 = vadd.f32 %v782, %v852
    %v856 = vxor.u32 %v855, 2147483648
    %v857 = vmul.f32 %v856, 1.442695
    %v858 = vpow.pop %v857
    %v859 = vadd.f32 %v858, 1.0
    %v860 = vrcp.pop %v859
    %v861 = vmul.f32 1.0, %v860
    %v862 = vtanh.pop %v855
    %v863 = vmul.f32 %v861, %v669
    %865 = vrot.lane.b32.xlu0 %v862, 64
    %v866 = vpop.permute.xlu0 %865
    %v868 = vmul.f32 %v861, %v866
    %870 = vrot.lane.b32.xlu0 %v868, 32
    %v871 = vpop.permute.xlu0 %870
    %v873 = vadd.f32 %v863, %v871
    %v874 = vtanh.pop %v873
    %876 = vrot.lane.b32.xlu0 %v874, 64
    %v877 = vpop.permute.xlu0 %876
    %v879 = vmul.f32 %v861, %v877
    %881 = vrot.lane.b32.xlu0 %v879, 32
    %v882 = vpop.permute.xlu0 %881
    %885 = vrot.lane.b32.xlu0 %v781, 64
    %v886 = vpop.permute.xlu0 %885
    %v888 = vsel %vm364, %v882, %v886
    %v890 = vsel %vm476, %v888, 0
    %892 = vmatprep.subr.mxu0 0.0
    %893 = vmatpush1.msra.mxu0 %v354
    %894 = vmatprep.subr.mxu0 0.0
    %895 = vmatpush1.msra.mxu0 %v355
    %896 = vmatprep.subr.mxu0 0.0
    %897 = vmatpush1.msra.mxu0 %v356
    %898 = vmatprep.subr.mxu0 0.0
    %899 = vmatpush1.msra.mxu0 %v357
    %900 = vmatprep.subr.mxu0 0.0
    %901 = vmatpush1.msra.mxu0 %v358
    %902 = vmatprep.subr.mxu0 0.0
    %903 = vmatpush1.msra.mxu0 %v359
    %904 = vmatprep.subr.mxu0 0.0
    %905 = vmatpush1.msra.mxu0 %v360
    %906 = vmatprep.subr.mxu0 0.0
    %907 = vmatpush1.msra.mxu0 %v361
    %908 = vmatprep.subr.mxu0 0.0
    %909 = vmatpush1.msra.mxu0 0.0
    %910 = vmatprep.subr.mxu0 0.0
    %911 = vmatpush1.msra.mxu0 0.0
    %912 = vmatprep.subr.mxu0 0.0
    %913 = vmatpush1.msra.mxu0 0.0
    %914 = vmatprep.subr.mxu0 0.0
    %915 = vmatpush1.msra.mxu0 0.0
    %916 = vmatprep.subr.mxu0 0.0
    %917 = vmatpush1.msra.mxu0 0.0
    %918 = vmatprep.subr.mxu0 0.0
    %919 = vmatpush1.msra.mxu0 0.0
    %920 = vmatprep.subr.mxu0 0.0
    %921 = vmatpush1.msra.mxu0 0.0
    %922 = vmatprep.subr.mxu0 0.0
    %923 = vmatpush1.msra.mxu0 0.0
    %924 = vmatprep.subr.mxu0 0.0
    %925 = vmatpush1.msra.mxu0 0.0
    %926 = vmatprep.subr.mxu0 0.0
    %927 = vmatpush1.msra.mxu0 0.0
    %928 = vmatprep.subr.mxu0 0.0
    %929 = vmatpush1.msra.mxu0 0.0
    %930 = vmatprep.subr.mxu0 0.0
    %931 = vmatpush1.msra.mxu0 0.0
    %932 = vmatprep.subr.mxu0 0.0
    %933 = vmatpush1.msra.mxu0 0.0
    %934 = vmatprep.subr.mxu0 0.0
    %935 = vmatpush1.msra.mxu0 0.0
    %936 = vmatprep.subr.mxu0 0.0
    %937 = vmatpush1.msra.mxu0 0.0
    %938 = vmatprep.subr.mxu0 0.0
    %939 = vmatpush1.msra.mxu0 0.0
    %940 = vmatprep.subr.mxu0 0.0
    %941 = vmatpush1.msra.mxu0 0.0
    %942 = vmatprep.subr.mxu0 0.0
    %943 = vmatpush1.msra.mxu0 0.0
    %944 = vmatprep.subr.mxu0 0.0
    %945 = vmatpush1.msra.mxu0 0.0
    %946 = vmatprep.subr.mxu0 0.0
    %947 = vmatpush1.msra.mxu0 0.0
    %948 = vmatprep.subr.mxu0 0.0
    %949 = vmatpush1.msra.mxu0 0.0
    %950 = vmatprep.subr.mxu0 0.0
    %951 = vmatpush1.msra.mxu0 0.0
    %952 = vmatprep.subr.mxu0 0.0
    %953 = vmatpush1.msra.mxu0 0.0
    %954 = vmatprep.subr.mxu0 0.0
    %955 = vmatpush1.msra.mxu0 0.0
    %956 = vmatprep.mubr.f32.mxu0 0.0
    %957 = vmatmul.mubr.f32.gmra.mrb[0].mxu0 %v890
    %v958 = vpop.f32.mrb[0].mxu0
    %v959 = vadd.f32 %v362, %v958
    %v960 = vpop.f32.mrb[0].mxu0
    %961 = vdwg.mxu0
    %v962 = vxor.u32 %v959, 2147483648
    %v963 = vmul.f32 %v962, 1.442695
    %v964 = vpow.pop %v963
    %v965 = vadd.f32 %v964, 1.0
    %v966 = vrcp.pop %v965
    %v967 = vmul.f32 1.0, %v966
    %v968 = vtanh.pop %v959
    %v969 = vmul.f32 %v967, %v775
    %971 = vrot.lane.b32.xlu0 %v968, 64
    %v972 = vpop.permute.xlu0 %971
    %v974 = vmul.f32 %v967, %v972
    %976 = vrot.lane.b32.xlu0 %v974, 32
    %v977 = vpop.permute.xlu0 %976
    %v979 = vadd.f32 %v969, %v977
    %v980 = vtanh.pop %v979
    %982 = vrot.lane.b32.xlu0 %v980, 64
    %v983 = vpop.permute.xlu0 %982
    %v985 = vmul.f32 %v967, %v983
    %v986 = vld [vmem:[#allocation2 + $0x18] sm:$0xff]
    %v987 = vsel %vm364, %v882, 0
    %989 = vmatprep.subr.mxu0 0.0
    %990 = vmatpush1.msra.mxu0 %v350
    %991 = vmatprep.subr.mxu0 0.0
    %992 = vmatpush1.msra.mxu0 %v351
    %993 = vmatprep.subr.mxu0 0.0
    %994 = vmatpush1.msra.mxu0 %v352
    %995 = vmatprep.subr.mxu0 0.0
    %996 = vmatpush1.msra.mxu0 %v353
    %997 = vmatprep.subr.mxu0 0.0
    %998 = vmatpush1.msra.mxu0 0.0
    %999 = vmatprep.subr.mxu0 0.0
    %1000 = vmatpush1.msra.mxu0 0.0
    %1001 = vmatprep.subr.mxu0 0.0
    %1002 = vmatpush1.msra.mxu0 0.0
    %1003 = vmatprep.subr.mxu0 0.0
    %1004 = vmatpush1.msra.mxu0 0.0
    %1005 = vmatprep.subr.mxu0 0.0
    %1006 = vmatpush1.msra.mxu0 0.0
    %1007 = vmatprep.subr.mxu0 0.0
    %1008 = vmatpush1.msra.mxu0 0.0
    %1009 = vmatprep.subr.mxu0 0.0
    %1010 = vmatpush1.msra.mxu0 0.0
    %1011 = vmatprep.subr.mxu0 0.0
    %1012 = vmatpush1.msra.mxu0 0.0
    %1013 = vmatprep.subr.mxu0 0.0
    %1014 = vmatpush1.msra.mxu0 0.0
    %1015 = vmatprep.subr.mxu0 0.0
    %1016 = vmatpush1.msra.mxu0 0.0
    %1017 = vmatprep.subr.mxu0 0.0
    %1018 = vmatpush1.msra.mxu0 0.0
    %1019 = vmatprep.subr.mxu0 0.0
    %1020 = vmatpush1.msra.mxu0 0.0
    %1021 = vmatprep.subr.mxu0 0.0
    %1022 = vmatpush1.msra.mxu0 0.0
    %1023 = vmatprep.subr.mxu0 0.0
    %1024 = vmatpush1.msra.mxu0 0.0
    %1025 = vmatprep.subr.mxu0 0.0
    %1026 = vmatpush1.msra.mxu0 0.0
    %1027 = vmatprep.subr.mxu0 0.0
    %1028 = vmatpush1.msra.mxu0 0.0
    %1029 = vmatprep.subr.mxu0 0.0
    %1030 = vmatpush1.msra.mxu0 0.0
    %1031 = vmatprep.subr.mxu0 0.0
    %1032 = vmatpush1.msra.mxu0 0.0
    %1033 = vmatprep.subr.mxu0 0.0
    %1034 = vmatpush1.msra.mxu0 0.0
    %1035 = vmatprep.subr.mxu0 0.0
    %1036 = vmatpush1.msra.mxu0 0.0
    %1037 = vmatprep.subr.mxu0 0.0
    %1038 = vmatpush1.msra.mxu0 0.0
    %1039 = vmatprep.subr.mxu0 0.0
    %1040 = vmatpush1.msra.mxu0 0.0
    %1041 = vmatprep.subr.mxu0 0.0
    %1042 = vmatpush1.msra.mxu0 0.0
    %1043 = vmatprep.subr.mxu0 0.0
    %1044 = vmatpush1.msra.mxu0 0.0
    %1045 = vmatprep.subr.mxu0 0.0
    %1046 = vmatpush1.msra.mxu0 0.0
    %1047 = vmatprep.subr.mxu0 0.0
    %1048 = vmatpush1.msra.mxu0 0.0
    %1049 = vmatprep.subr.mxu0 0.0
    %1050 = vmatpush1.msra.mxu0 0.0
    %1051 = vmatprep.subr.mxu0 0.0
    %1052 = vmatpush1.msra.mxu0 0.0
    %1053 = vmatprep.mubr.f32.mxu0 0.0
    %1054 = vmatmul.mubr.f32.gmra.mrb[0].mxu0 %v987
    %v1055 = vpop.f32.mrb[0].mxu0
    %v1056 = vadd.f32 0.0, %v1055
    %v1057 = vpop.f32.mrb[0].mxu0
    %1058 = vdwg.mxu0
    %v1059 = vadd.f32 %v986, %v1056
    %v1060 = vxor.u32 %v1059, 2147483648
    %v1061 = vmul.f32 %v1060, 1.442695
    %v1062 = vpow.pop %v1061
    %v1063 = vadd.f32 %v1062, 1.0
    %v1064 = vrcp.pop %v1063
    %v1065 = vmul.f32 1.0, %v1064
    %v1066 = vtanh.pop %v1059
    %v1067 = vmul.f32 %v1065, %v873
    %1069 = vrot.lane.b32.xlu0 %v1066, 64
    %v1070 = vpop.permute.xlu0 %1069
    %v1072 = vmul.f32 %v1065, %v1070
    %1074 = vrot.lane.b32.xlu0 %v1072, 32
    %v1075 = vpop.permute.xlu0 %1074
    %v1077 = vadd.f32 %v1067, %v1075
    %v1078 = vtanh.pop %v1077
    %1080 = vrot.lane.b32.xlu0 %v1078, 64
    %v1081 = vpop.permute.xlu0 %1080
    %v1083 = vmul.f32 %v1065, %v1081
    %1085 = vrot.lane.b32.xlu0 %v1083, 32
    %v1086 = vpop.permute.xlu0 %1085
    %1089 = vrot.lane.b32.xlu0 %v985, 64
    %v1090 = vpop.permute.xlu0 %1089
    %v1092 = vsel %vm364, %v1086, %v1090
    %v1094 = vsel %vm476, %v1092, 0
    %1096 = vmatprep.subr.mxu0 0.0
    %1097 = vmatpush1.msra.mxu0 %v354
    %1098 = vmatprep.subr.mxu0 0.0
    %1099 = vmatpush1.msra.mxu0 %v355
    %1100 = vmatprep.subr.mxu0 0.0
    %1101 = vmatpush1.msra.mxu0 %v356
    %1102 = vmatprep.subr.mxu0 0.0
    %1103 = vmatpush1.msra.mxu0 %v357
    %1104 = vmatprep.subr.mxu0 0.0
    %1105 = vmatpush1.msra.mxu0 %v358
    %1106 = vmatprep.subr.mxu0 0.0
    %1107 = vmatpush1.msra.mxu0 %v359
    %1108 = vmatprep.subr.mxu0 0.0
    %1109 = vmatpush1.msra.mxu0 %v360
    %1110 = vmatprep.subr.mxu0 0.0
    %1111 = vmatpush1.msra.mxu0 %v361
    %1112 = vmatprep.subr.mxu0 0.0
    %1113 = vmatpush1.msra.mxu0 0.0
    %1114 = vmatprep.subr.mxu0 0.0
    %1115 = vmatpush1.msra.mxu0 0.0
    %1116 = vmatprep.subr.mxu0 0.0
    %1117 = vmatpush1.msra.mxu0 0.0
    %1118 = vmatprep.subr.mxu0 0.0
    %1119 = vmatpush1.msra.mxu0 0.0
    %1120 = vmatprep.subr.mxu0 0.0
    %1121 = vmatpush1.msra.mxu0 0.0
    %1122 = vmatprep.subr.mxu0 0.0
    %1123 = vmatpush1.msra.mxu0 0.0
    %1124 = vmatprep.subr.mxu0 0.0
    %1125 = vmatpush1.msra.mxu0 0.0
    %1126 = vmatprep.subr.mxu0 0.0
    %1127 = vmatpush1.msra.mxu0 0.0
    %1128 = vmatprep.subr.mxu0 0.0
    %1129 = vmatpush1.msra.mxu0 0.0
    %1130 = vmatprep.subr.mxu0 0.0
    %1131 = vmatpush1.msra.mxu0 0.0
    %1132 = vmatprep.subr.mxu0 0.0
    %1133 = vmatpush1.msra.mxu0 0.0
    %1134 = vmatprep.subr.mxu0 0.0
    %1135 = vmatpush1.msra.mxu0 0.0
    %1136 = vmatprep.subr.mxu0 0.0
    %1137 = vmatpush1.msra.mxu0 0.0
    %1138 = vmatprep.subr.mxu0 0.0
    %1139 = vmatpush1.msra.mxu0 0.0
    %1140 = vmatprep.subr.mxu0 0.0
    %1141 = vmatpush1.msra.mxu0 0.0
    %1142 = vmatprep.subr.mxu0 0.0
    %1143 = vmatpush1.msra.mxu0 0.0
    %1144 = vmatprep.subr.mxu0 0.0
    %1145 = vmatpush1.msra.mxu0 0.0
    %1146 = vmatprep.subr.mxu0 0.0
    %1147 = vmatpush1.msra.mxu0 0.0
    %1148 = vmatprep.subr.mxu0 0.0
    %1149 = vmatpush1.msra.mxu0 0.0
    %1150 = vmatprep.subr.mxu0 0.0
    %1151 = vmatpush1.msra.mxu0 0.0
    %1152 = vmatprep.subr.mxu0 0.0
    %1153 = vmatpush1.msra.mxu0 0.0
    %1154 = vmatprep.subr.mxu0 0.0
    %1155 = vmatpush1.msra.mxu0 0.0
    %1156 = vmatprep.subr.mxu0 0.0
    %1157 = vmatpush1.msra.mxu0 0.0
    %1158 = vmatprep.subr.mxu0 0.0
    %1159 = vmatpush1.msra.mxu0 0.0
    %1160 = vmatprep.mubr.f32.mxu0 0.0
    %1161 = vmatmul.mubr.f32.gmra.mrb[0].mxu0 %v1094
    %v1162 = vpop.f32.mrb[0].mxu0
    %v1163 = vadd.f32 %v362, %v1162
    %v1164 = vpop.f32.mrb[0].mxu0
    %1165 = vdwg.mxu0
    %v1166 = vxor.u32 %v1163, 2147483648
    %v1167 = vmul.f32 %v1166, 1.442695
    %v1168 = vpow.pop %v1167
    %v1169 = vadd.f32 %v1168, 1.0
    %v1170 = vrcp.pop %v1169
    %v1171 = vmul.f32 1.0, %v1170
    %v1172 = vtanh.pop %v1163
    %v1173 = vmul.f32 %v1171, %v979
    %1175 = vrot.lane.b32.xlu0 %v1172, 64
    %v1176 = vpop.permute.xlu0 %1175
    %v1178 = vmul.f32 %v1171, %v1176
    %1180 = vrot.lane.b32.xlu0 %v1178, 32
    %v1181 = vpop.permute.xlu0 %1180
    %v1183 = vadd.f32 %v1173, %v1181
    %v1184 = vtanh.pop %v1183
    %1186 = vrot.lane.b32.xlu0 %v1184, 64
    %v1187 = vpop.permute.xlu0 %1186
    %v1189 = vmul.f32 %v1171, %v1187
    %v1190 = vld [vmem:[#allocation2 + $0x20] sm:$0xff]
    %v1191 = vsel %vm364, %v1086, 0
    %1193 = vmatprep.subr.mxu0 0.0
    %1194 = vmatpush1.msra.mxu0 %v350
    %1195 = vmatprep.subr.mxu0 0.0
    %1196 = vmatpush1.msra.mxu0 %v351
    %1197 = vmatprep.subr.mxu0 0.0
    %1198 = vmatpush1.msra.mxu0 %v352
    %1199 = vmatprep.subr.mxu0 0.0
    %1200 = vmatpush1.msra.mxu0 %v353
    %1201 = vmatprep.subr.mxu0 0.0
    %1202 = vmatpush1.msra.mxu0 0.0
    %1203 = vmatprep.subr.mxu0 0.0
    %1204 = vmatpush1.msra.mxu0 0.0
    %1205 = vmatprep.subr.mxu0 0.0
    %1206 = vmatpush1.msra.mxu0 0.0
    %1207 = vmatprep.subr.mxu0 0.0
    %1208 = vmatpush1.msra.mxu0 0.0
    %1209 = vmatprep.subr.mxu0 0.0
    %1210 = vmatpush1.msra.mxu0 0.0
    %1211 = vmatprep.subr.mxu0 0.0
    %1212 = vmatpush1.msra.mxu0 0.0
    %1213 = vmatprep.subr.mxu0 0.0
    %1214 = vmatpush1.msra.mxu0 0.0
    %1215 = vmatprep.subr.mxu0 0.0
    %1216 = vmatpush1.msra.mxu0 0.0
    %1217 = vmatprep.subr.mxu0 0.0
    %1218 = vmatpush1.msra.mxu0 0.0
    %1219 = vmatprep.subr.mxu0 0.0
    %1220 = vmatpush1.msra.mxu0 0.0
    %1221 = vmatprep.subr.mxu0 0.0
    %1222 = vmatpush1.msra.mxu0 0.0
    %1223 = vmatprep.subr.mxu0 0.0
    %1224 = vmatpush1.msra.mxu0 0.0
    %1225 = vmatprep.subr.mxu0 0.0
    %1226 = vmatpush1.msra.mxu0 0.0
    %1227 = vmatprep.subr.mxu0 0.0
    %1228 = vmatpush1.msra.mxu0 0.0
    %1229 = vmatprep.subr.mxu0 0.0
    %1230 = vmatpush1.msra.mxu0 0.0
    %1231 = vmatprep.subr.mxu0 0.0
    %1232 = vmatpush1.msra.mxu0 0.0
    %1233 = vmatprep.subr.mxu0 0.0
    %1234 = vmatpush1.msra.mxu0 0.0
    %1235 = vmatprep.subr.mxu0 0.0
    %1236 = vmatpush1.msra.mxu0 0.0
    %1237 = vmatprep.subr.mxu0 0.0
    %1238 = vmatpush1.msra.mxu0 0.0
    %1239 = vmatprep.subr.mxu0 0.0
    %1240 = vmatpush1.msra.mxu0 0.0
    %1241 = vmatprep.subr.mxu0 0.0
    %1242 = vmatpush1.msra.mxu0 0.0
    %1243 = vmatprep.subr.mxu0 0.0
    %1244 = vmatpush1.msra.mxu0 0.0
    %1245 = vmatprep.subr.mxu0 0.0
    %1246 = vmatpush1.msra.mxu0 0.0
    %1247 = vmatprep.subr.mxu0 0.0
    %1248 = vmatpush1.msra.mxu0 0.0
    %1249 = vmatprep.subr.mxu0 0.0
    %1250 = vmatpush1.msra.mxu0 0.0
    %1251 = vmatprep.subr.mxu0 0.0
    %1252 = vmatpush1.msra.mxu0 0.0
    %1253 = vmatprep.subr.mxu0 0.0
    %1254 = vmatpush1.msra.mxu0 0.0
    %1255 = vmatprep.subr.mxu0 0.0
    %1256 = vmatpush1.msra.mxu0 0.0
    %1257 = vmatprep.mubr.f32.mxu0 0.0
    %1258 = vmatmul.mubr.f32.gmra.mrb[0].mxu0 %v1191
    %v1259 = vpop.f32.mrb[0].mxu0
    %v1260 = vadd.f32 0.0, %v1259
    %v1261 = vpop.f32.mrb[0].mxu0
    %1262 = vdwg.mxu0
    %v1263 = vadd.f32 %v1190, %v1260
    %v1264 = vxor.u32 %v1263, 2147483648
    %v1265 = vmul.f32 %v1264, 1.442695
    %v1266 = vpow.pop %v1265
    %v1267 = vadd.f32 %v1266, 1.0
    %v1268 = vrcp.pop %v1267
    %v1269 = vmul.f32 1.0, %v1268
    %v1270 = vtanh.pop %v1263
    %v1271 = vmul.f32 %v1269, %v1077
    %1273 = vrot.lane.b32.xlu0 %v1270, 64
    %v1274 = vpop.permute.xlu0 %1273
    %v1276 = vmul.f32 %v1269, %v1274
    %1278 = vrot.lane.b32.xlu0 %v1276, 32
    %v1279 = vpop.permute.xlu0 %1278
    %v1281 = vadd.f32 %v1271, %v1279
    %v1282 = vtanh.pop %v1281
    %1284 = vrot.lane.b32.xlu0 %v1282, 64
    %v1285 = vpop.permute.xlu0 %1284
    %v1287 = vmul.f32 %v1269, %v1285
    %1289 = vrot.lane.b32.xlu0 %v1287, 32
    %v1290 = vpop.permute.xlu0 %1289
    %1293 = vrot.lane.b32.xlu0 %v1189, 64
    %v1294 = vpop.permute.xlu0 %1293
    %v1296 = vsel %vm364, %v1290, %v1294
    %v1298 = vsel %vm476, %v1296, 0
    %1300 = vmatprep.subr.mxu0 0.0
    %1301 = vmatpush1.msra.mxu0 %v354
    %1302 = vmatprep.subr.mxu0 0.0
    %1303 = vmatpush1.msra.mxu0 %v355
    %1304 = vmatprep.subr.mxu0 0.0
    %1305 = vmatpush1.msra.mxu0 %v356
    %1306 = vmatprep.subr.mxu0 0.0
    %1307 = vmatpush1.msra.mxu0 %v357
    %1308 = vmatprep.subr.mxu0 0.0
    %1309 = vmatpush1.msra.mxu0 %v358
    %1310 = vmatprep.subr.mxu0 0.0
    %1311 = vmatpush1.msra.mxu0 %v359
    %1312 = vmatprep.subr.mxu0 0.0
    %1313 = vmatpush1.msra.mxu0 %v360
    %1314 = vmatprep.subr.mxu0 0.0
    %1315 = vmatpush1.msra.mxu0 %v361
    %1316 = vmatprep.subr.mxu0 0.0
    %1317 = vmatpush1.msra.mxu0 0.0
    %1318 = vmatprep.subr.mxu0 0.0
    %1319 = vmatpush1.msra.mxu0 0.0
    %1320 = vmatprep.subr.mxu0 0.0
    %1321 = vmatpush1.msra.mxu0 0.0
    %1322 = vmatprep.subr.mxu0 0.0
    %1323 = vmatpush1.msra.mxu0 0.0
    %1324 = vmatprep.subr.mxu0 0.0
    %1325 = vmatpush1.msra.mxu0 0.0
    %1326 = vmatprep.subr.mxu0 0.0
    %1327 = vmatpush1.msra.mxu0 0.0
    %1328 = vmatprep.subr.mxu0 0.0
    %1329 = vmatpush1.msra.mxu0 0.0
    %1330 = vmatprep.subr.mxu0 0.0
    %1331 = vmatpush1.msra.mxu0 0.0
    %1332 = vmatprep.subr.mxu0 0.0
    %1333 = vmatpush1.msra.mxu0 0.0
    %1334 = vmatprep.subr.mxu0 0.0
    %1335 = vmatpush1.msra.mxu0 0.0
    %1336 = vmatprep.subr.mxu0 0.0
    %1337 = vmatpush1.msra.mxu0 0.0
    %1338 = vmatprep.subr.mxu0 0.0
    %1339 = vmatpush1.msra.mxu0 0.0
    %1340 = vmatprep.subr.mxu0 0.0
    %1341 = vmatpush1.msra.mxu0 0.0
    %1342 = vmatprep.subr.mxu0 0.0
    %1343 = vmatpush1.msra.mxu0 0.0
    %1344 = vmatprep.subr.mxu0 0.0
    %1345 = vmatpush1.msra.mxu0 0.0
    %1346 = vmatprep.subr.mxu0 0.0
    %1347 = vmatpush1.msra.mxu0 0.0
    %1348 = vmatprep.subr.mxu0 0.0
    %1349 = vmatpush1.msra.mxu0 0.0
    %1350 = vmatprep.subr.mxu0 0.0
    %1351 = vmatpush1.msra.mxu0 0.0
    %1352 = vmatprep.subr.mxu0 0.0
    %1353 = vmatpush1.msra.mxu0 0.0
    %1354 = vmatprep.subr.mxu0 0.0
    %1355 = vmatpush1.msra.mxu0 0.0
    %1356 = vmatprep.subr.mxu0 0.0
    %1357 = vmatpush1.msra.mxu0 0.0
    %1358 = vmatprep.subr.mxu0 0.0
    %1359 = vmatpush1.msra.mxu0 0.0
    %1360 = vmatprep.subr.mxu0 0.0
    %1361 = vmatpush1.msra.mxu0 0.0
    %1362 = vmatprep.subr.mxu0 0.0
    %1363 = vmatpush1.msra.mxu0 0.0
    %1364 = vmatprep.mubr.f32.mxu0 0.0
    %1365 = vmatmul.mubr.f32.gmra.mrb[0].mxu0 %v1298
    %v1366 = vpop.f32.mrb[0].mxu0
    %v1367 = vadd.f32 %v362, %v1366
    %v1368 = vpop.f32.mrb[0].mxu0
    %1369 = vdwg.mxu0
    %v1370 = vxor.u32 %v1367, 2147483648
    %v1371 = vmul.f32 %v1370, 1.442695
    %v1372 = vpow.pop %v1371
    %v1373 = vadd.f32 %v1372, 1.0
    %v1374 = vrcp.pop %v1373
    %v1375 = vmul.f32 1.0, %v1374
    %v1376 = vtanh.pop %v1367
    %v1377 = vmul.f32 %v1375, %v1183
    %1379 = vrot.lane.b32.xlu0 %v1376, 64
    %v1380 = vpop.permute.xlu0 %1379
    %v1382 = vmul.f32 %v1375, %v1380
    %1384 = vrot.lane.b32.xlu0 %v1382, 32
    %v1385 = vpop.permute.xlu0 %1384
    %v1387 = vadd.f32 %v1377, %v1385
    %v1388 = vtanh.pop %v1387
    %1390 = vrot.lane.b32.xlu0 %v1388, 64
    %v1391 = vpop.permute.xlu0 %1390
    %v1393 = vmul.f32 %v1375, %v1391
    %v1394 = vld [vmem:[#allocation2 + $0x28] sm:$0xff]
    %v1395 = vsel %vm364, %v1290, 0
    %1397 = vmatprep.subr.mxu0 0.0
    %1398 = vmatpush1.msra.mxu0 %v350
    %1399 = vmatprep.subr.mxu0 0.0
    %1400 = vmatpush1.msra.mxu0 %v351
    %1401 = vmatprep.subr.mxu0 0.0
    %1402 = vmatpush1.msra.mxu0 %v352
    %1403 = vmatprep.subr.mxu0 0.0
    %1404 = vmatpush1.msra.mxu0 %v353
    %1405 = vmatprep.subr.mxu0 0.0
    %1406 = vmatpush1.msra.mxu0 0.0
    %1407 = vmatprep.subr.mxu0 0.0
    %1408 = vmatpush1.msra.mxu0 0.0
    %1409 = vmatprep.subr.mxu0 0.0
    %1410 = vmatpush1.msra.mxu0 0.0
    %1411 = vmatprep.subr.mxu0 0.0
    %1412 = vmatpush1.msra.mxu0 0.0
    %1413 = vmatprep.subr.mxu0 0.0
    %1414 = vmatpush1.msra.mxu0 0.0
    %1415 = vmatprep.subr.mxu0 0.0
    %1416 = vmatpush1.msra.mxu0 0.0
    %1417 = vmatprep.subr.mxu0 0.0
    %1418 = vmatpush1.msra.mxu0 0.0
    %1419 = vmatprep.subr.mxu0 0.0
    %1420 = vmatpush1.msra.mxu0 0.0
    %1421 = vmatprep.subr.mxu0 0.0
    %1422 = vmatpush1.msra.mxu0 0.0
    %1423 = vmatprep.subr.mxu0 0.0
    %1424 = vmatpush1.msra.mxu0 0.0
    %1425 = vmatprep.subr.mxu0 0.0
    %1426 = vmatpush1.msra.mxu0 0.0
    %1427 = vmatprep.subr.mxu0 0.0
    %1428 = vmatpush1.msra.mxu0 0.0
    %1429 = vmatprep.subr.mxu0 0.0
    %1430 = vmatpush1.msra.mxu0 0.0
    %1431 = vmatprep.subr.mxu0 0.0
    %1432 = vmatpush1.msra.mxu0 0.0
    %1433 = vmatprep.subr.mxu0 0.0
    %1434 = vmatpush1.msra.mxu0 0.0
    %1435 = vmatprep.subr.mxu0 0.0
    %1436 = vmatpush1.msra.mxu0 0.0
    %1437 = vmatprep.subr.mxu0 0.0
    %1438 = vmatpush1.msra.mxu0 0.0
    %1439 = vmatprep.subr.mxu0 0.0
    %1440 = vmatpush1.msra.mxu0 0.0
    %1441 = vmatprep.subr.mxu0 0.0
    %1442 = vmatpush1.msra.mxu0 0.0
    %1443 = vmatprep.subr.mxu0 0.0
    %1444 = vmatpush1.msra.mxu0 0.0
    %1445 = vmatprep.subr.mxu0 0.0
    %1446 = vmatpush1.msra.mxu0 0.0
    %1447 = vmatprep.subr.mxu0 0.0
    %1448 = vmatpush1.msra.mxu0 0.0
    %1449 = vmatprep.subr.mxu0 0.0
    %1450 = vmatpush1.msra.mxu0 0.0
    %1451 = vmatprep.subr.mxu0 0.0
    %1452 = vmatpush1.msra.mxu0 0.0
    %1453 = vmatprep.subr.mxu0 0.0
    %1454 = vmatpush1.msra.mxu0 0.0
    %1455 = vmatprep.subr.mxu0 0.0
    %1456 = vmatpush1.msra.mxu0 0.0
    %1457 = vmatprep.subr.mxu0 0.0
    %1458 = vmatpush1.msra.mxu0 0.0
    %1459 = vmatprep.subr.mxu0 0.0
    %1460 = vmatpush1.msra.mxu0 0.0
    %1461 = vmatprep.mubr.f32.mxu0 0.0
    %1462 = vmatmul.mubr.f32.gmra.mrb[0].mxu0 %v1395
    %v1463 = vpop.f32.mrb[0].mxu0
    %v1464 = vadd.f32 0.0, %v1463
    %v1465 = vpop.f32.mrb[0].mxu0
    %1466 = vdwg.mxu0
    %v1467 = vadd.f32 %v1394, %v1464
    %v1468 = vxor.u32 %v1467, 2147483648
    %v1469 = vmul.f32 %v1468, 1.442695
    %v1470 = vpow.pop %v1469
    %v1471 = vadd.f32 %v1470, 1.0
    %v1472 = vrcp.pop %v1471
    %v1473 = vmul.f32 1.0, %v1472
    %v1474 = vtanh.pop %v1467
    %v1475 = vmul.f32 %v1473, %v1281
    %1477 = vrot.lane.b32.xlu0 %v1474, 64
    %v1478 = vpop.permute.xlu0 %1477
    %v1480 = vmul.f32 %v1473, %v1478
    %1482 = vrot.lane.b32.xlu0 %v1480, 32
    %v1483 = vpop.permute.xlu0 %1482
    %v1485 = vadd.f32 %v1475, %v1483
    %v1486 = vtanh.pop %v1485
    %1488 = vrot.lane.b32.xlu0 %v1486, 64
    %v1489 = vpop.permute.xlu0 %1488
    %v1491 = vmul.f32 %v1473, %v1489
    %1493 = vrot.lane.b32.xlu0 %v1491, 32
    %v1494 = vpop.permute.xlu0 %1493
    %1497 = vrot.lane.b32.xlu0 %v1393, 64
    %v1498 = vpop.permute.xlu0 %1497
    %v1500 = vsel %vm364, %v1494, %v1498
    %v1502 = vsel %vm476, %v1500, 0
    %1504 = vmatprep.subr.mxu0 0.0
    %1505 = vmatpush1.msra.mxu0 %v354
    %1506 = vmatprep.subr.mxu0 0.0
    %1507 = vmatpush1.msra.mxu0 %v355
    %1508 = vmatprep.subr.mxu0 0.0
    %1509 = vmatpush1.msra.mxu0 %v356
    %1510 = vmatprep.subr.mxu0 0.0
    %1511 = vmatpush1.msra.mxu0 %v357
    %1512 = vmatprep.subr.mxu0 0.0
    %1513 = vmatpush1.msra.mxu0 %v358
    %1514 = vmatprep.subr.mxu0 0.0
    %1515 = vmatpush1.msra.mxu0 %v359
    %1516 = vmatprep.subr.mxu0 0.0
    %1517 = vmatpush1.msra.mxu0 %v360
    %1518 = vmatprep.subr.mxu0 0.0
    %1519 = vmatpush1.msra.mxu0 %v361
    %1520 = vmatprep.subr.mxu0 0.0
    %1521 = vmatpush1.msra.mxu0 0.0
    %1522 = vmatprep.subr.mxu0 0.0
    %1523 = vmatpush1.msra.mxu0 0.0
    %1524 = vmatprep.subr.mxu0 0.0
    %1525 = vmatpush1.msra.mxu0 0.0
    %1526 = vmatprep.subr.mxu0 0.0
    %1527 = vmatpush1.msra.mxu0 0.0
    %1528 = vmatprep.subr.mxu0 0.0
    %1529 = vmatpush1.msra.mxu0 0.0
    %1530 = vmatprep.subr.mxu0 0.0
    %1531 = vmatpush1.msra.mxu0 0.0
    %1532 = vmatprep.subr.mxu0 0.0
    %1533 = vmatpush1.msra.mxu0 0.0
    %1534 = vmatprep.subr.mxu0 0.0
    %1535 = vmatpush1.msra.mxu0 0.0
    %1536 = vmatprep.subr.mxu0 0.0
    %1537 = vmatpush1.msra.mxu0 0.0
    %1538 = vmatprep.subr.mxu0 0.0
    %1539 = vmatpush1.msra.mxu0 0.0
    %1540 = vmatprep.subr.mxu0 0.0
    %1541 = vmatpush1.msra.mxu0 0.0
    %1542 = vmatprep.subr.mxu0 0.0
    %1543 = vmatpush1.msra.mxu0 0.0
    %1544 = vmatprep.subr.mxu0 0.0
    %1545 = vmatpush1.msra.mxu0 0.0
    %1546 = vmatprep.subr.mxu0 0.0
    %1547 = vmatpush1.msra.mxu0 0.0
    %1548 = vmatprep.subr.mxu0 0.0
    %1549 = vmatpush1.msra.mxu0 0.0
    %1550 = vmatprep.subr.mxu0 0.0
    %1551 = vmatpush1.msra.mxu0 0.0
    %1552 = vmatprep.subr.mxu0 0.0
    %1553 = vmatpush1.msra.mxu0 0.0
    %1554 = vmatprep.subr.mxu0 0.0
    %1555 = vmatpush1.msra.mxu0 0.0
    %1556 = vmatprep.subr.mxu0 0.0
    %1557 = vmatpush1.msra.mxu0 0.0
    %1558 = vmatprep.subr.mxu0 0.0
    %1559 = vmatpush1.msra.mxu0 0.0
    %1560 = vmatprep.subr.mxu0 0.0
    %1561 = vmatpush1.msra.mxu0 0.0
    %1562 = vmatprep.subr.mxu0 0.0
    %1563 = vmatpush1.msra.mxu0 0.0
    %1564 = vmatprep.subr.mxu0 0.0
    %1565 = vmatpush1.msra.mxu0 0.0
    %1566 = vmatprep.subr.mxu0 0.0
    %1567 = vmatpush1.msra.mxu0 0.0
    %1568 = vmatprep.mubr.f32.mxu0 0.0
    %1569 = vmatmul.mubr.f32.gmra.mrb[0].mxu0 %v1502
    %v1570 = vpop.f32.mrb[0].mxu0
    %v1571 = vadd.f32 %v362, %v1570
    %v1572 = vpop.f32.mrb[0].mxu0
    %1573 = vdwg.mxu0
    %v1574 = vxor.u32 %v1571, 2147483648
    %v1575 = vmul.f32 %v1574, 1.442695
    %v1576 = vpow.pop %v1575
    %v1577 = vadd.f32 %v1576, 1.0
    %v1578 = vrcp.pop %v1577
    %v1579 = vmul.f32 1.0, %v1578
    %v1580 = vtanh.pop %v1571
    %v1581 = vmul.f32 %v1579, %v1387
    %1583 = vrot.lane.b32.xlu0 %v1580, 64
    %v1584 = vpop.permute.xlu0 %1583
    %v1586 = vmul.f32 %v1579, %v1584
    %1588 = vrot.lane.b32.xlu0 %v1586, 32
    %v1589 = vpop.permute.xlu0 %1588
    %v1591 = vadd.f32 %v1581, %v1589
    %v1592 = vtanh.pop %v1591
    %1594 = vrot.lane.b32.xlu0 %v1592, 64
    %v1595 = vpop.permute.xlu0 %1594
    %v1597 = vmul.f32 %v1579, %v1595
    %v1598 = vld [vmem:[#allocation2 + $0x30] sm:$0xff]
    %v1599 = vsel %vm364, %v1494, 0
    %1601 = vmatprep.subr.mxu0 0.0
    %1602 = vmatpush1.msra.mxu0 %v350
    %1603 = vmatprep.subr.mxu0 0.0
    %1604 = vmatpush1.msra.mxu0 %v351
    %1605 = vmatprep.subr.mxu0 0.0
    %1606 = vmatpush1.msra.mxu0 %v352
    %1607 = vmatprep.subr.mxu0 0.0
    %1608 = vmatpush1.msra.mxu0 %v353
    %1609 = vmatprep.subr.mxu0 0.0
    %1610 = vmatpush1.msra.mxu0 0.0
    %1611 = vmatprep.subr.mxu0 0.0
    %1612 = vmatpush1.msra.mxu0 0.0
    %1613 = vmatprep.subr.mxu0 0.0
    %1614 = vmatpush1.msra.mxu0 0.0
    %1615 = vmatprep.subr.mxu0 0.0
    %1616 = vmatpush1.msra.mxu0 0.0
    %1617 = vmatprep.subr.mxu0 0.0
    %1618 = vmatpush1.msra.mxu0 0.0
    %1619 = vmatprep.subr.mxu0 0.0
    %1620 = vmatpush1.msra.mxu0 0.0
    %1621 = vmatprep.subr.mxu0 0.0
    %1622 = vmatpush1.msra.mxu0 0.0
    %1623 = vmatprep.subr.mxu0 0.0
    %1624 = vmatpush1.msra.mxu0 0.0
    %1625 = vmatprep.subr.mxu0 0.0
    %1626 = vmatpush1.msra.mxu0 0.0
    %1627 = vmatprep.subr.mxu0 0.0
    %1628 = vmatpush1.msra.mxu0 0.0
    %1629 = vmatprep.subr.mxu0 0.0
    %1630 = vmatpush1.msra.mxu0 0.0
    %1631 = vmatprep.subr.mxu0 0.0
    %1632 = vmatpush1.msra.mxu0 0.0
    %1633 = vmatprep.subr.mxu0 0.0
    %1634 = vmatpush1.msra.mxu0 0.0
    %1635 = vmatprep.subr.mxu0 0.0
    %1636 = vmatpush1.msra.mxu0 0.0
    %1637 = vmatprep.subr.mxu0 0.0
    %1638 = vmatpush1.msra.mxu0 0.0
    %1639 = vmatprep.subr.mxu0 0.0
    %1640 = vmatpush1.msra.mxu0 0.0
    %1641 = vmatprep.subr.mxu0 0.0
    %1642 = vmatpush1.msra.mxu0 0.0
    %1643 = vmatprep.subr.mxu0 0.0
    %1644 = vmatpush1.msra.mxu0 0.0
    %1645 = vmatprep.subr.mxu0 0.0
    %1646 = vmatpush1.msra.mxu0 0.0
    %1647 = vmatprep.subr.mxu0 0.0
    %1648 = vmatpush1.msra.mxu0 0.0
    %1649 = vmatprep.subr.mxu0 0.0
    %1650 = vmatpush1.msra.mxu0 0.0
    %1651 = vmatprep.subr.mxu0 0.0
    %1652 = vmatpush1.msra.mxu0 0.0
    %1653 = vmatprep.subr.mxu0 0.0
    %1654 = vmatpush1.msra.mxu0 0.0
    %1655 = vmatprep.subr.mxu0 0.0
    %1656 = vmatpush1.msra.mxu0 0.0
    %1657 = vmatprep.subr.mxu0 0.0
    %1658 = vmatpush1.msra.mxu0 0.0
    %1659 = vmatprep.subr.mxu0 0.0
    %1660 = vmatpush1.msra.mxu0 0.0
    %1661 = vmatprep.subr.mxu0 0.0
    %1662 = vmatpush1.msra.mxu0 0.0
    %1663 = vmatprep.subr.mxu0 0.0
    %1664 = vmatpush1.msra.mxu0 0.0
    %1665 = vmatprep.mubr.f32.mxu0 0.0
    %1666 = vmatmul.mubr.f32.gmra.mrb[0].mxu0 %v1599
    %v1667 = vpop.f32.mrb[0].mxu0
    %v1668 = vadd.f32 0.0, %v1667
    %v1669 = vpop.f32.mrb[0].mxu0
    %1670 = vdwg.mxu0
    %v1671 = vadd.f32 %v1598, %v1668
    %v1672 = vxor.u32 %v1671, 2147483648
    %v1673 = vmul.f32 %v1672, 1.442695
    %v1674 = vpow.pop %v1673
    %v1675 = vadd.f32 %v1674, 1.0
    %v1676 = vrcp.pop %v1675
    %v1677 = vmul.f32 1.0, %v1676
    %v1678 = vtanh.pop %v1671
    %v1679 = vmul.f32 %v1677, %v1485
    %1681 = vrot.lane.b32.xlu0 %v1678, 64
    %v1682 = vpop.permute.xlu0 %1681
    %v1684 = vmul.f32 %v1677, %v1682
    %1686 = vrot.lane.b32.xlu0 %v1684, 32
    %v1687 = vpop.permute.xlu0 %1686
    %v1689 = vadd.f32 %v1679, %v1687
    %v1690 = vtanh.pop %v1689
    %1692 = vrot.lane.b32.xlu0 %v1690, 64
    %v1693 = vpop.permute.xlu0 %1692
    %v1695 = vmul.f32 %v1677, %v1693
    %1697 = vrot.lane.b32.xlu0 %v1695, 32
    %v1698 = vpop.permute.xlu0 %1697
    %1701 = vrot.lane.b32.xlu0 %v1597, 64
    %v1702 = vpop.permute.xlu0 %1701
    %v1704 = vsel %vm364, %v1698, %v1702
    %v1706 = vsel %vm476, %v1704, 0
    %1708 = vmatprep.subr.mxu0 0.0
    %1709 = vmatpush1.msra.mxu0 %v354
    %1710 = vmatprep.subr.mxu0 0.0
    %1711 = vmatpush1.msra.mxu0 %v355
    %1712 = vmatprep.subr.mxu0 0.0
    %1713 = vmatpush1.msra.mxu0 %v356
    %1714 = vmatprep.subr.mxu0 0.0
    %1715 = vmatpush1.msra.mxu0 %v357
    %1716 = vmatprep.subr.mxu0 0.0
    %1717 = vmatpush1.msra.mxu0 %v358
    %1718 = vmatprep.subr.mxu0 0.0
    %1719 = vmatpush1.msra.mxu0 %v359
    %1720 = vmatprep.subr.mxu0 0.0
    %1721 = vmatpush1.msra.mxu0 %v360
    %1722 = vmatprep.subr.mxu0 0.0
    %1723 = vmatpush1.msra.mxu0 %v361
    %1724 = vmatprep.subr.mxu0 0.0
    %1725 = vmatpush1.msra.mxu0 0.0
    %1726 = vmatprep.subr.mxu0 0.0
    %1727 = vmatpush1.msra.mxu0 0.0
    %1728 = vmatprep.subr.mxu0 0.0
    %1729 = vmatpush1.msra.mxu0 0.0
    %1730 = vmatprep.subr.mxu0 0.0
    %1731 = vmatpush1.msra.mxu0 0.0
    %1732 = vmatprep.subr.mxu0 0.0
    %1733 = vmatpush1.msra.mxu0 0.0
    %1734 = vmatprep.subr.mxu0 0.0
    %1735 = vmatpush1.msra.mxu0 0.0
    %1736 = vmatprep.subr.mxu0 0.0
    %1737 = vmatpush1.msra.mxu0 0.0
    %1738 = vmatprep.subr.mxu0 0.0
    %1739 = vmatpush1.msra.mxu0 0.0
    %1740 = vmatprep.subr.mxu0 0.0
    %1741 = vmatpush1.msra.mxu0 0.0
    %1742 = vmatprep.subr.mxu0 0.0
    %1743 = vmatpush1.msra.mxu0 0.0
    %1744 = vmatprep.subr.mxu0 0.0
    %1745 = vmatpush1.msra.mxu0 0.0
    %1746 = vmatprep.subr.mxu0 0.0
    %1747 = vmatpush1.msra.mxu0 0.0
    %1748 = vmatprep.subr.mxu0 0.0
    %1749 = vmatpush1.msra.mxu0 0.0
    %1750 = vmatprep.subr.mxu0 0.0
    %1751 = vmatpush1.msra.mxu0 0.0
    %1752 = vmatprep.subr.mxu0 0.0
    %1753 = vmatpush1.msra.mxu0 0.0
    %1754 = vmatprep.subr.mxu0 0.0
    %1755 = vmatpush1.msra.mxu0 0.0
    %1756 = vmatprep.subr.mxu0 0.0
    %1757 = vmatpush1.msra.mxu0 0.0
    %1758 = vmatprep.subr.mxu0 0.0
    %1759 = vmatpush1.msra.mxu0 0.0
    %1760 = vmatprep.subr.mxu0 0.0
    %1761 = vmatpush1.msra.mxu0 0.0
    %1762 = vmatprep.subr.mxu0 0.0
    %1763 = vmatpush1.msra.mxu0 0.0
    %1764 = vmatprep.subr.mxu0 0.0
    %1765 = vmatpush1.msra.mxu0 0.0
    %1766 = vmatprep.subr.mxu0 0.0
    %1767 = vmatpush1.msra.mxu0 0.0
    %1768 = vmatprep.subr.mxu0 0.0
    %1769 = vmatpush1.msra.mxu0 0.0
    %1770 = vmatprep.subr.mxu0 0.0
    %1771 = vmatpush1.msra.mxu0 0.0
    %1772 = vmatprep.mubr.f32.mxu0 0.0
    %1773 = vmatmul.mubr.f32.gmra.mrb[0].mxu0 %v1706
    %v1774 = vpop.f32.mrb[0].mxu0
    %v1775 = vadd.f32 %v362, %v1774
    %v1776 = vpop.f32.mrb[0].mxu0
    %1777 = vdwg.mxu0
    %v1778 = vxor.u32 %v1775, 2147483648
    %v1779 = vmul.f32 %v1778, 1.442695
    %v1780 = vpow.pop %v1779
    %v1781 = vadd.f32 %v1780, 1.0
    %v1782 = vrcp.pop %v1781
    %v1783 = vmul.f32 1.0, %v1782
    %v1784 = vtanh.pop %v1775
    %v1785 = vmul.f32 %v1783, %v1591
    %1787 = vrot.lane.b32.xlu0 %v1784, 64
    %v1788 = vpop.permute.xlu0 %1787
    %v1790 = vmul.f32 %v1783, %v1788
    %1792 = vrot.lane.b32.xlu0 %v1790, 32
    %v1793 = vpop.permute.xlu0 %1792
    %v1795 = vadd.f32 %v1785, %v1793
    %v1796 = vtanh.pop %v1795
    %1798 = vrot.lane.b32.xlu0 %v1796, 64
    %v1799 = vpop.permute.xlu0 %1798
    %v1801 = vmul.f32 %v1783, %v1799
    %v1802 = vld [vmem:[#allocation2 + $0x38] sm:$0xff]
    %v1803 = vsel %vm364, %v1698, 0
    %1805 = vmatprep.subr.mxu0 0.0
    %1806 = vmatpush1.msra.mxu0 %v350
    %1807 = vmatprep.subr.mxu0 0.0
    %1808 = vmatpush1.msra.mxu0 %v351
    %1809 = vmatprep.subr.mxu0 0.0
    %1810 = vmatpush1.msra.mxu0 %v352
    %1811 = vmatprep.subr.mxu0 0.0
    %1812 = vmatpush1.msra.mxu0 %v353
    %1813 = vmatprep.subr.mxu0 0.0
    %1814 = vmatpush1.msra.mxu0 0.0
    %1815 = vmatprep.subr.mxu0 0.0
    %1816 = vmatpush1.msra.mxu0 0.0
    %1817 = vmatprep.subr.mxu0 0.0
    %1818 = vmatpush1.msra.mxu0 0.0
    %1819 = vmatprep.subr.mxu0 0.0
    %1820 = vmatpush1.msra.mxu0 0.0
    %1821 = vmatprep.subr.mxu0 0.0
    %1822 = vmatpush1.msra.mxu0 0.0
    %1823 = vmatprep.subr.mxu0 0.0
    %1824 = vmatpush1.msra.mxu0 0.0
    %1825 = vmatprep.subr.mxu0 0.0
    %1826 = vmatpush1.msra.mxu0 0.0
    %1827 = vmatprep.subr.mxu0 0.0
    %1828 = vmatpush1.msra.mxu0 0.0
    %1829 = vmatprep.subr.mxu0 0.0
    %1830 = vmatpush1.msra.mxu0 0.0
    %1831 = vmatprep.subr.mxu0 0.0
    %1832 = vmatpush1.msra.mxu0 0.0
    %1833 = vmatprep.subr.mxu0 0.0
    %1834 = vmatpush1.msra.mxu0 0.0
    %1835 = vmatprep.subr.mxu0 0.0
    %1836 = vmatpush1.msra.mxu0 0.0
    %1837 = vmatprep.subr.mxu0 0.0
    %1838 = vmatpush1.msra.mxu0 0.0
    %1839 = vmatprep.subr.mxu0 0.0
    %1840 = vmatpush1.msra.mxu0 0.0
    %1841 = vmatprep.subr.mxu0 0.0
    %1842 = vmatpush1.msra.mxu0 0.0
    %1843 = vmatprep.subr.mxu0 0.0
    %1844 = vmatpush1.msra.mxu0 0.0
    %1845 = vmatprep.subr.mxu0 0.0
    %1846 = vmatpush1.msra.mxu0 0.0
    %1847 = vmatprep.subr.mxu0 0.0
    %1848 = vmatpush1.msra.mxu0 0.0
    %1849 = vmatprep.subr.mxu0 0.0
    %1850 = vmatpush1.msra.mxu0 0.0
    %1851 = vmatprep.subr.mxu0 0.0
    %1852 = vmatpush1.msra.mxu0 0.0
    %1853 = vmatprep.subr.mxu0 0.0
    %1854 = vmatpush1.msra.mxu0 0.0
    %1855 = vmatprep.subr.mxu0 0.0
    %1856 = vmatpush1.msra.mxu0 0.0
    %1857 = vmatprep.subr.mxu0 0.0
    %1858 = vmatpush1.msra.mxu0 0.0
    %1859 = vmatprep.subr.mxu0 0.0
    %1860 = vmatpush1.msra.mxu0 0.0
    %1861 = vmatprep.subr.mxu0 0.0
    %1862 = vmatpush1.msra.mxu0 0.0
    %1863 = vmatprep.subr.mxu0 0.0
    %1864 = vmatpush1.msra.mxu0 0.0
    %1865 = vmatprep.subr.mxu0 0.0
    %1866 = vmatpush1.msra.mxu0 0.0
    %1867 = vmatprep.subr.mxu0 0.0
    %1868 = vmatpush1.msra.mxu0 0.0
    %1869 = vmatprep.mubr.f32.mxu0 0.0
    %1870 = vmatmul.mubr.f32.gmra.mrb[0].mxu0 %v1803
    %v1871 = vpop.f32.mrb[0].mxu0
    %v1872 = vadd.f32 0.0, %v1871
    %v1873 = vpop.f32.mrb[0].mxu0
    %1874 = vdwg.mxu0
    %v1875 = vadd.f32 %v1802, %v1872
    %v1876 = vxor.u32 %v1875, 2147483648
    %v1877 = vmul.f32 %v1876, 1.442695
    %v1878 = vpow.pop %v1877
    %v1879 = vadd.f32 %v1878, 1.0
    %v1880 = vrcp.pop %v1879
    %v1881 = vmul.f32 1.0, %v1880
    %v1882 = vtanh.pop %v1875
    %v1883 = vmul.f32 %v1881, %v1689
    %1885 = vrot.lane.b32.xlu0 %v1882, 64
    %v1886 = vpop.permute.xlu0 %1885
    %v1888 = vmul.f32 %v1881, %v1886
    %1890 = vrot.lane.b32.xlu0 %v1888, 32
    %v1891 = vpop.permute.xlu0 %1890
    %v1893 = vadd.f32 %v1883, %v1891
    %v1894 = vtanh.pop %v1893
    %1896 = vrot.lane.b32.xlu0 %v1894, 64
    %v1897 = vpop.permute.xlu0 %1896
    %v1899 = vmul.f32 %v1881, %v1897
    %1901 = vrot.lane.b32.xlu0 %v1899, 32
    %v1902 = vpop.permute.xlu0 %1901
    %1905 = vrot.lane.b32.xlu0 %v1801, 64
    %v1906 = vpop.permute.xlu0 %1905
    %v1908 = vsel %vm364, %v1902, %v1906
    %v1910 = vsel %vm476, %v1908, 0
    %1912 = vmatprep.subr.mxu0 0.0
    %1913 = vmatpush1.msra.mxu0 %v354
    %1914 = vmatprep.subr.mxu0 0.0
    %1915 = vmatpush1.msra.mxu0 %v355
    %1916 = vmatprep.subr.mxu0 0.0
    %1917 = vmatpush1.msra.mxu0 %v356
    %1918 = vmatprep.subr.mxu0 0.0
    %1919 = vmatpush1.msra.mxu0 %v357
    %1920 = vmatprep.subr.mxu0 0.0
    %1921 = vmatpush1.msra.mxu0 %v358
    %1922 = vmatprep.subr.mxu0 0.0
    %1923 = vmatpush1.msra.mxu0 %v359
    %1924 = vmatprep.subr.mxu0 0.0
    %1925 = vmatpush1.msra.mxu0 %v360
    %1926 = vmatprep.subr.mxu0 0.0
    %1927 = vmatpush1.msra.mxu0 %v361
    %1928 = vmatprep.subr.mxu0 0.0
    %1929 = vmatpush1.msra.mxu0 0.0
    %1930 = vmatprep.subr.mxu0 0.0
    %1931 = vmatpush1.msra.mxu0 0.0
    %1932 = vmatprep.subr.mxu0 0.0
    %1933 = vmatpush1.msra.mxu0 0.0
    %1934 = vmatprep.subr.mxu0 0.0
    %1935 = vmatpush1.msra.mxu0 0.0
    %1936 = vmatprep.subr.mxu0 0.0
    %1937 = vmatpush1.msra.mxu0 0.0
    %1938 = vmatprep.subr.mxu0 0.0
    %1939 = vmatpush1.msra.mxu0 0.0
    %1940 = vmatprep.subr.mxu0 0.0
    %1941 = vmatpush1.msra.mxu0 0.0
    %1942 = vmatprep.subr.mxu0 0.0
    %1943 = vmatpush1.msra.mxu0 0.0
    %1944 = vmatprep.subr.mxu0 0.0
    %1945 = vmatpush1.msra.mxu0 0.0
    %1946 = vmatprep.subr.mxu0 0.0
    %1947 = vmatpush1.msra.mxu0 0.0
    %1948 = vmatprep.subr.mxu0 0.0
    %1949 = vmatpush1.msra.mxu0 0.0
    %1950 = vmatprep.subr.mxu0 0.0
    %1951 = vmatpush1.msra.mxu0 0.0
    %1952 = vmatprep.subr.mxu0 0.0
    %1953 = vmatpush1.msra.mxu0 0.0
    %1954 = vmatprep.subr.mxu0 0.0
    %1955 = vmatpush1.msra.mxu0 0.0
    %1956 = vmatprep.subr.mxu0 0.0
    %1957 = vmatpush1.msra.mxu0 0.0
    %1958 = vmatprep.subr.mxu0 0.0
    %1959 = vmatpush1.msra.mxu0 0.0
    %1960 = vmatprep.subr.mxu0 0.0
    %1961 = vmatpush1.msra.mxu0 0.0
    %1962 = vmatprep.subr.mxu0 0.0
    %1963 = vmatpush1.msra.mxu0 0.0
    %1964 = vmatprep.subr.mxu0 0.0
    %1965 = vmatpush1.msra.mxu0 0.0
    %1966 = vmatprep.subr.mxu0 0.0
    %1967 = vmatpush1.msra.mxu0 0.0
    %1968 = vmatprep.subr.mxu0 0.0
    %1969 = vmatpush1.msra.mxu0 0.0
    %1970 = vmatprep.subr.mxu0 0.0
    %1971 = vmatpush1.msra.mxu0 0.0
    %1972 = vmatprep.subr.mxu0 0.0
    %1973 = vmatpush1.msra.mxu0 0.0
    %1974 = vmatprep.subr.mxu0 0.0
    %1975 = vmatpush1.msra.mxu0 0.0
    %1976 = vmatprep.mubr.f32.mxu0 0.0
    %1977 = vmatmul.mubr.f32.gmra.mrb[0].mxu0 %v1910
    %v1978 = vpop.f32.mrb[0].mxu0
    %v1979 = vadd.f32 %v362, %v1978
    %v1980 = vpop.f32.mrb[0].mxu0
    %1981 = vdwg.mxu0
    %v1982 = vxor.u32 %v1979, 2147483648
    %v1983 = vmul.f32 %v1982, 1.442695
    %v1984 = vpow.pop %v1983
    %v1985 = vadd.f32 %v1984, 1.0
    %v1986 = vrcp.pop %v1985
    %v1987 = vmul.f32 1.0, %v1986
    %v1988 = vtanh.pop %v1979
    %v1989 = vmul.f32 %v1987, %v1795
    %1991 = vrot.lane.b32.xlu0 %v1988, 64
    %v1992 = vpop.permute.xlu0 %1991
    %v1994 = vmul.f32 %v1987, %v1992
    %1996 = vrot.lane.b32.xlu0 %v1994, 32
    %v1997 = vpop.permute.xlu0 %1996
    %v1999 = vadd.f32 %v1989, %v1997
    %v2000 = vtanh.pop %v1999
    %2002 = vrot.lane.b32.xlu0 %v2000, 64
    %v2003 = vpop.permute.xlu0 %2002
    %v2005 = vmul.f32 %v1987, %v2003
    %2006 = vst.msk [vmem:[%s7] sm:$0xff] %vm364, %v1902
    %2008 = vrot.lane.b32.xlu0 %v1893, 96
    %v2009 = vpop.permute.xlu0 %2008
    %2011 = vst.msk [vmem:[#allocation13] sm:$0xff] %vm364, %v2009
    %2013 = vrot.lane.b32.xlu0 %v2005, 32
    %v2014 = vpop.permute.xlu0 %2013
    %s2016 = scalar_lea.vmem %s7, 8
    %2017 = vst.msk [vmem:[%s2016] sm:$0xff] %vm364, %v2014
    %2019 = vrot.lane.b32.xlu0 %v1999, 96
    %v2020 = vpop.permute.xlu0 %2019
    %s2022 = scalar_lea.vmem [#allocation13], 8
    %2023 = vst.msk [vmem:[%s2022] sm:$0xff] %vm364, %v2020
    // Predicated region
    $region42: #{rnn_sentiment_forward.1} parent=1 // pred_check
      _
    $region43: #{rnn_sentiment_forward.1} parent=1 // pred_check_branch
      %2025 = sbr.rel (0) target = $region45
    $region44: #{rnn_sentiment_forward.1} parent=1 // pred_region
      _
    $region45: #{rnn_sentiment_forward.1} parent=1 // pred_fallthru
      _
    // Predicated region
    $region46: #{rnn_sentiment_forward.1} parent=1 // pred_check
      _
    $region47: #{rnn_sentiment_forward.1} parent=1 // pred_check_branch
      %2027 = sbr.rel (0) target = $region49
    $region48: #{rnn_sentiment_forward.1} parent=1 // pred_region
      %s2029 = ssub.s32 256, 256
      %2030 = vsyncadd [#allocation7], %s2029
      %s2031 = sshll.u32 [#allocation13], 4
      %s2032 = int_to_ptr.vmem [resolvable:$true] %s2031
      %2037 = dma.vmem_to_hbm [thread:$0]  %s2032, 256, %s8, [#allocation7], 128, 128, 8
    $region49: #{rnn_sentiment_forward.1} parent=1 // pred_fallthru
      _
    // Predicated region
    $region50: #{rnn_sentiment_forward.1} parent=1 // pred_check
      _
    $region51: #{rnn_sentiment_forward.1} parent=1 // pred_check_branch
      %2039 = sbr.rel (0) target = $region53
    $region52: #{rnn_sentiment_forward.1} parent=1 // pred_region
      _
    $region53: #{rnn_sentiment_forward.1} parent=1 // pred_fallthru
      _
    // Predicated region
    $region54: #{rnn_sentiment_forward.1} parent=1 // pred_check
      _
    $region55: #{rnn_sentiment_forward.1} parent=1 // pred_check_branch
      %2041 = sbr.rel (0) target = $region57
    $region56: #{rnn_sentiment_forward.1} parent=1 // pred_region
      %2042 = dma.done [#allocation7], 256
    $region57: #{rnn_sentiment_forward.1} parent=1 // pred_fallthru
      _
    %2043 = vsyncpa [#allocation6], 1
    %2044 = vsyncpa [#allocation9], 1
    %2045 = vsyncpa [#allocation12], 1
    %2046 = vsyncpa [#allocation7], 1

</llo_original>
